<compile_context>
chip_gen: v7x
topology: tpu7x:2x2x1
jax: 0.10.0
libtpu: 0.0.40
codegen_flags: <defaults>
</compile_context>

<pallas_src>
import functools

import jax
import jax.numpy as jnp
from jax.experimental import pallas as pl
from jax.experimental.pallas import tpu as pltpu

LANE = 128
ROW_TILE_TARGET = 2048     # target conv rows per grid step
FRE_D_TILE_MAX = 1024      # cap on the D-reduction tile of the FRE kernel


def _round_up(x, m):
    return ((x + m - 1) // m) * m


def _largest_divisor_leq(n, cap):
    cap = max(1, min(n, cap))
    for g in range(cap, 0, -1):
        if n % g == 0:
            return g
    return 1


# ----------------------------------------------------------------------------
# Kernel 1: fused conv(3x3, pad=1) + bias + ReLU + avg_pool2d(k).
#   - 9 shifted (rows, C_in) x (C_in, C_out) bf16 matmuls, f32 accumulation (in-kernel
#     im2col: taps are ref loads of the padded NHWC image, no HBM expansion).
#   - pooling: per pooled-row group, one constant (OW, k*W) 0/1 matrix (block-diagonal
#     form of a dense pooling matmul), scaled by 1/k^2.
# ----------------------------------------------------------------------------
def _conv_pool_kernel(x_ref, w_ref, b_ref, p_ref, o_ref, *,
                      grp, k, w_dim, ow, c_out, inv_kk):
    gk = grp * k                               # conv rows handled this step
    j = pl.program_id(1)
    row0 = pl.multiple_of(j * gk, gk)
    c_in = x_ref.shape[3]

    acc = jnp.zeros((gk * w_dim, c_out), jnp.float32)
    for t in range(9):
        dh, dw = divmod(t, 3)
        xs = x_ref[0, pl.ds(row0 + dh, gk), pl.ds(dw, w_dim), :]   # (gk, W, C_in) bf16
        xs = xs.reshape(gk * w_dim, c_in)
        acc = acc + jnp.dot(xs, w_ref[t], preferred_element_type=jnp.float32)
    acc = jnp.maximum(acc + b_ref[...], 0.0)                        # (gk*W, C_out) f32

    # avg-pool both spatial dims with one tiny constant matrix per row group
    acc3 = acc.reshape(grp, k * w_dim, c_out)                       # (G, k*W, C_out)
    pool_b = jnp.broadcast_to(p_ref[...], (grp, ow, k * w_dim))     # (G, OW, k*W)
    pooled = jax.lax.dot_general(
        pool_b, acc3,
        dimension_numbers=(((2,), (1,)), ((0,), (0,))),
        preferred_element_type=jnp.float32)                         # (G, OW, C_out)
    o_ref[...] = (pooled * inv_kk)[None].astype(o_ref.dtype)


def conv_relu_avgpool(xp, w_taps, bias, pool_mat, *,
                      grp, k, w_dim, ow, oh, c_out, n_chunks):
    B, Hp, Wp, C_in = xp.shape
    kern = functools.partial(_conv_pool_kernel, grp=grp, k=k, w_dim=w_dim, ow=ow,
                             c_out=c_out, inv_kk=1.0 / float(k * k))
    return pl.pallas_call(
        kern,
        out_shape=jax.ShapeDtypeStruct((B, oh, ow, c_out), jnp.float32),
        grid=(B, n_chunks),
        in_specs=[
            pl.BlockSpec((1, Hp, Wp, C_in), lambda b, j: (b, 0, 0, 0)),  # image, reused over j
            pl.BlockSpec((9, C_in, c_out), lambda b, j: (0, 0, 0)),      # per-tap weights
            pl.BlockSpec((1, c_out), lambda b, j: (0, 0)),               # bias
            pl.BlockSpec((ow, k * w_dim), lambda b, j: (0, 0)),          # pooling matrix
        ],
        out_specs=pl.BlockSpec((1, grp, ow, c_out), lambda b, j: (b, j, 0, 0)),
        compiler_params=pltpu.CompilerParams(
            dimension_semantics=("parallel", "arbitrary")),
    )(xp, w_taps, bias, pool_mat)


# ----------------------------------------------------------------------------
# Kernel 2: PCA FRE score  ||c - (c @ U) @ U^T||^2,  c = f - mean  (explicit residual,
# matching the torch reference).  Grid (batch "parallel", pass, D "arbitrary"):
#   pass 0: accumulate proj = c @ U over D tiles
#   pass 1: accumulate lane-wise partial sums of (c - proj @ U_blk^T)^2 over D tiles,
#           single cross-lane reduce + lane-dense store at the last step.
# ----------------------------------------------------------------------------
def _fre_kernel(f_ref, m_ref, u_ref, o_ref, proj, sacc):
    p = pl.program_id(1)
    j = pl.program_id(2)
    last_j = pl.num_programs(2) - 1

    centered = f_ref[...] - m_ref[...]                              # (tb, td) f32

    @pl.when((p == 0) & (j == 0))
    def _():
        proj[...] = jnp.zeros_like(proj)

    @pl.when(p == 0)
    def _():
        proj[...] += jnp.dot(centered, u_ref[...],
                             preferred_element_type=jnp.float32)    # (tb, Kp)

    @pl.when((p == 1) & (j == 0))
    def _():
        sacc[...] = jnp.zeros_like(sacc)

    @pl.when(p == 1)
    def _():
        recon = jax.lax.dot_general(
            proj[...], u_ref[...],
            dimension_numbers=(((1,), (1,)), ((), ())),
            preferred_element_type=jnp.float32)                     # (tb, td)
        resid = centered - recon
        r2 = resid * resid
        td = r2.shape[1]
        part = r2[:, 0:LANE]
        for i in range(1, td // LANE):                              # lane-wise partials (VPU)
            part = part + r2[:, i * LANE:(i + 1) * LANE]
        sacc[...] += part

    @pl.when((p == 1) & (j == last_j))
    def _():
        score = jnp.sum(sacc[...], axis=1, keepdims=True)           # one cross-lane reduce
        o_ref[...] = jnp.broadcast_to(score, o_ref.shape)           # lane-dense store


def fre_score(feats, mean_vec, u_mat):
    B, D = feats.shape
    K = u_mat.shape[1]

    tb = min(_round_up(B, 8), 128)
    B_pad = _round_up(B, tb)
    K_pad = _round_up(K, LANE)
    D_pad = _round_up(D, LANE)
    td = LANE
    for cand in range(min(D_pad, FRE_D_TILE_MAX), 0, -LANE):
        if D_pad % cand == 0:
            td = cand
            break
    nb, nd = B_pad // tb, D_pad // td

    feats_p = jnp.zeros((B_pad, D_pad), jnp.float32).at[:B, :D].set(feats.astype(jnp.float32))
    mean_p = jnp.zeros((1, D_pad), jnp.float32).at[0, :D].set(mean_vec.astype(jnp.float32))
    u_p = jnp.zeros((D_pad, K_pad), jnp.float32).at[:D, :K].set(u_mat.astype(jnp.float32))

    out = pl.pallas_call(
        _fre_kernel,
        out_shape=jax.ShapeDtypeStruct((B_pad, LANE), jnp.float32),
        grid=(nb, 2, nd),
        in_specs=[
            pl.BlockSpec((tb, td), lambda i, p, j: (i, j)),
            pl.BlockSpec((1, td), lambda i, p, j: (0, j)),
            pl.BlockSpec((td, K_pad), lambda i, p, j: (j, 0)),
        ],
        out_specs=pl.BlockSpec((tb, LANE), lambda i, p, j: (i, 0)),
        scratch_shapes=[
            pltpu.VMEM((tb, K_pad), jnp.float32),   # projection accumulator
            pltpu.VMEM((tb, LANE), jnp.float32),    # lane-wise ||resid||^2 accumulator
        ],
        compiler_params=pltpu.CompilerParams(
            dimension_semantics=("parallel", "arbitrary", "arbitrary")),
    )(feats_p, mean_p, u_p)
    return out[:B, 0]


# ----------------------------------------------------------------------------
# Glue: full DFM forward (score_type="fre")
# ----------------------------------------------------------------------------
def dfm_forward(batch, conv_w, conv_b, pca_mean, pca_u, pooling_kernel_size):
    """DFMModel.forward with score_type='fre'. batch: (B, C_in, H, W) NCHW f32."""
    B, C_in, H, W = batch.shape
    C_out = conv_w.shape[0]
    k = pooling_kernel_size
    assert H % k == 0 and W % k == 0
    OH, OW = H // k, W // k

    # padded NHWC image (bf16 MXU inputs), per-tap weights, bias
    xp = jnp.pad(batch, ((0, 0), (0, 0), (1, 1), (1, 1)))
    xp = xp.transpose(0, 2, 3, 1).astype(jnp.bfloat16)               # (B, H+2, W+2, C_in)
    w_taps = conv_w.transpose(2, 3, 1, 0).reshape(9, C_in, C_out).astype(jnp.bfloat16)
    b2d = conv_b.reshape(1, C_out).astype(jnp.float32)

    # pooled row-groups per grid step, targeting ~ROW_TILE_TARGET conv rows per step
    target_groups = max(1, ROW_TILE_TARGET // (k * W))
    G = _largest_divisor_leq(OH, target_groups)
    n_chunks = OH // G

    # constant per-group pooling matrix (OW, k*W): out col ow sums cols with col//k == ow
    m = jnp.arange(k * W)
    owner = (m % W) // k
    pool_mat = (owner[None, :] == jnp.arange(OW)[:, None]).astype(jnp.float32)

    pooled = conv_relu_avgpool(xp, w_taps, b2d, pool_mat, grp=G, k=k, w_dim=W, ow=OW,
                               oh=OH, c_out=C_out, n_chunks=n_chunks)  # (B, OH, OW, C_out)

    feats = pooled.reshape(B, OH * OW * C_out)   # free row-major flatten (no transpose)

    # one-time permutation of PCA constants from torch's (c, oh, ow) order into the
    # kernel's (oh, ow, c) order (scores are invariant under a common row permutation)
    p_idx = jnp.arange(OH * OW)
    c_idx = jnp.arange(C_out)
    perm = (c_idx[None, :] * (OH * OW) + p_idx[:, None]).reshape(-1)
    mean_perm = pca_mean[perm]
    u_perm = pca_u[perm, :]

    return fre_score(feats, mean_perm, u_perm)


def _reference_forward(batch, conv_w, conv_b, pca_mean, pca_u, k):
    """Pure-XLA f32 reference of the same forward (for a sanity check)."""
    B, C_in, H, W = batch.shape
    C_out = conv_w.shape[0]
    OH, OW = H // k, W // k
    feat = jax.lax.conv_general_dilated(
        batch, conv_w, window_strides=(1, 1), padding=((1, 1), (1, 1)),
        dimension_numbers=("NCHW", "OIHW", "NCHW"))
    feat = jnp.maximum(feat + conv_b.reshape(1, C_out, 1, 1), 0.0)
    pooled = feat.reshape(B, C_out, OH, k, OW, k).mean(axis=(3, 5))
    f = pooled.reshape(B, -1)
    c = f - pca_mean[None, :]
    proj = c @ pca_u
    recon = proj @ pca_u.T
    return jnp.sum(jnp.square(c - recon), axis=1)


if __name__ == "__main__":
    # Small, deterministic configuration consistent with DFMModel's forward.
    B, C_in, H, W = 2, 4, 16, 16
    C_out = 8
    POOL = 2
    OH, OW = H // POOL, W // POOL
    D = C_out * OH * OW                     # 512 flattened feature dim
    K = 16                                  # number of PCA components (synthetic)

    key = jax.random.PRNGKey(0)
    kx, kw, kb, km, ku = jax.random.split(key, 5)

    x = jax.random.normal(kx, (B, C_in, H, W), jnp.float32)
    conv_w = jax.random.normal(kw, (C_out, C_in, 3, 3), jnp.float32) * 0.1
    conv_b = jax.random.normal(kb, (C_out,), jnp.float32) * 0.01
    pca_mean = jax.random.normal(km, (D,), jnp.float32) * 0.1
    # Orthonormal PCA basis (as produced by a fitted PCA's singular vectors).
    pca_u, _ = jnp.linalg.qr(jax.random.normal(ku, (D, K), jnp.float32))
    pca_u = pca_u.astype(jnp.float32)

    scores = dfm_forward(x, conv_w, conv_b, pca_mean, pca_u, POOL)
    scores = jax.block_until_ready(scores)

    assert scores.shape == (B,) and scores.dtype == jnp.float32
    assert bool(jnp.all(jnp.isfinite(scores)))

    # Sanity check against the pure-XLA f32 reference (bf16 conv -> loose tolerance).
    ref = _reference_forward(x, conv_w, conv_b, pca_mean, pca_u, POOL)
    rel_err = float(jnp.max(jnp.abs(scores - ref) / (jnp.abs(ref) + 1e-6)))
    assert rel_err < 5e-2, f"mismatch vs reference: rel_err={rel_err}"

    print("KERNEL_OK")
</pallas_src>

<mosaic_0001>
module attributes {stable_mosaic.version = 11 : i64} {
  func.func @_conv_pool_kernel(%arg0: i32, %arg1: i32, %arg2: memref<1x18x18x4xbf16, #tpu.memory_space<vmem>>, %arg3: memref<9x4x8xbf16, #tpu.memory_space<vmem>>, %arg4: memref<1x8xf32, #tpu.memory_space<vmem>>, %arg5: memref<8x32xf32, #tpu.memory_space<vmem>>, %arg6: memref<1x8x8x8xf32, #tpu.memory_space<vmem>>) attributes {dimension_semantics = [#tpu.dimension_semantics<parallel>, #tpu.dimension_semantics<arbitrary>], iteration_bounds = array<i64: 2, 1>, scalar_prefetch = 0 : i64, scratch_operands = 0 : i64, tpu.core_type = #tpu.core_type<tc>, window_params = [{transform_indices = @transform_0, window_bounds = array<i64: 1, 18, 18, 4>}, {pipeline_mode = #tpu.pipeline_mode<synchronous>, transform_indices = @transform_1, window_bounds = array<i64: 9, 4, 8>}, {pipeline_mode = #tpu.pipeline_mode<synchronous>, transform_indices = @transform_2, window_bounds = array<i64: 1, 8>}, {pipeline_mode = #tpu.pipeline_mode<synchronous>, transform_indices = @transform_3, window_bounds = array<i64: 8, 32>}, {transform_indices = @transform_4, window_bounds = array<i64: 1, 8, 8, 8>}]} {
    %c16_i32 = arith.constant 16 : i32
    %0 = arith.muli %arg1, %c16_i32 : i32
    %1 = tpu.assume_multiple %0, 16 : i32
    %cst = arith.constant 0.000000e+00 : f32
    %2 = vector.broadcast %cst : f32 to vector<256x8xf32>
    %c0_i32 = arith.constant 0 : i32
    %3 = arith.addi %1, %c0_i32 : i32
    %c0 = arith.constant 0 : index
    %4 = arith.index_cast %3 : i32 to index
    %c0_0 = arith.constant 0 : index
    %c0_1 = arith.constant 0 : index
    %5 = vector.load %arg2[%c0, %4, %c0_0, %c0_1] : memref<1x18x18x4xbf16, #tpu.memory_space<vmem>>, vector<1x16x16x4xbf16>
    %6 = vector.shape_cast %5 : vector<1x16x16x4xbf16> to vector<16x16x4xbf16>
    %7 = vector.shape_cast %6 : vector<16x16x4xbf16> to vector<256x4xbf16>
    %c0_2 = arith.constant 0 : index
    %c0_3 = arith.constant 0 : index
    %c0_4 = arith.constant 0 : index
    %8 = vector.load %arg3[%c0_2, %c0_3, %c0_4] : memref<9x4x8xbf16, #tpu.memory_space<vmem>>, vector<1x4x8xbf16>
    %9 = vector.shape_cast %8 : vector<1x4x8xbf16> to vector<4x8xbf16>
    %cst_5 = arith.constant dense<0.000000e+00> : vector<256x8xf32>
    %10 = tpu.matmul %7, %9, %cst_5 {dimension_numbers = #tpu.dot_dimension_numbers<[1], [0], [0], [1], [0, 0, 1, 1], [], []>} : vector<256x4xbf16>, vector<4x8xbf16>, vector<256x8xf32> -> vector<256x8xf32>
    %11 = arith.addf %2, %10 : vector<256x8xf32>
    %c0_i32_6 = arith.constant 0 : i32
    %12 = arith.addi %1, %c0_i32_6 : i32
    %c0_7 = arith.constant 0 : index
    %13 = arith.index_cast %12 : i32 to index
    %c1 = arith.constant 1 : index
    %c0_8 = arith.constant 0 : index
    %14 = vector.load %arg2[%c0_7, %13, %c1, %c0_8] : memref<1x18x18x4xbf16, #tpu.memory_space<vmem>>, vector<1x16x16x4xbf16>
    %15 = vector.shape_cast %14 : vector<1x16x16x4xbf16> to vector<16x16x4xbf16>
    %16 = vector.shape_cast %15 : vector<16x16x4xbf16> to vector<256x4xbf16>
    %c1_9 = arith.constant 1 : index
    %c0_10 = arith.constant 0 : index
    %c0_11 = arith.constant 0 : index
    %17 = vector.load %arg3[%c1_9, %c0_10, %c0_11] : memref<9x4x8xbf16, #tpu.memory_space<vmem>>, vector<1x4x8xbf16>
    %18 = vector.shape_cast %17 : vector<1x4x8xbf16> to vector<4x8xbf16>
    %cst_12 = arith.constant dense<0.000000e+00> : vector<256x8xf32>
    %19 = tpu.matmul %16, %18, %cst_12 {dimension_numbers = #tpu.dot_dimension_numbers<[1], [0], [0], [1], [0, 0, 1, 1], [], []>} : vector<256x4xbf16>, vector<4x8xbf16>, vector<256x8xf32> -> vector<256x8xf32>
    %20 = arith.addf %11, %19 : vector<256x8xf32>
    %c0_i32_13 = arith.constant 0 : i32
    %21 = arith.addi %1, %c0_i32_13 : i32
    %c0_14 = arith.constant 0 : index
    %22 = arith.index_cast %21 : i32 to index
    %c2 = arith.constant 2 : index
    %c0_15 = arith.constant 0 : index
    %23 = vector.load %arg2[%c0_14, %22, %c2, %c0_15] : memref<1x18x18x4xbf16, #tpu.memory_space<vmem>>, vector<1x16x16x4xbf16>
    %24 = vector.shape_cast %23 : vector<1x16x16x4xbf16> to vector<16x16x4xbf16>
    %25 = vector.shape_cast %24 : vector<16x16x4xbf16> to vector<256x4xbf16>
    %c2_16 = arith.constant 2 : index
    %c0_17 = arith.constant 0 : index
    %c0_18 = arith.constant 0 : index
    %26 = vector.load %arg3[%c2_16, %c0_17, %c0_18] : memref<9x4x8xbf16, #tpu.memory_space<vmem>>, vector<1x4x8xbf16>
    %27 = vector.shape_cast %26 : vector<1x4x8xbf16> to vector<4x8xbf16>
    %cst_19 = arith.constant dense<0.000000e+00> : vector<256x8xf32>
    %28 = tpu.matmul %25, %27, %cst_19 {dimension_numbers = #tpu.dot_dimension_numbers<[1], [0], [0], [1], [0, 0, 1, 1], [], []>} : vector<256x4xbf16>, vector<4x8xbf16>, vector<256x8xf32> -> vector<256x8xf32>
    %29 = arith.addf %20, %28 : vector<256x8xf32>
    %c1_i32 = arith.constant 1 : i32
    %30 = arith.addi %1, %c1_i32 : i32
    %c0_20 = arith.constant 0 : index
    %31 = arith.index_cast %30 : i32 to index
    %c0_21 = arith.constant 0 : index
    %c0_22 = arith.constant 0 : index
    %32 = vector.load %arg2[%c0_20, %31, %c0_21, %c0_22] : memref<1x18x18x4xbf16, #tpu.memory_space<vmem>>, vector<1x16x16x4xbf16>
    %33 = vector.shape_cast %32 : vector<1x16x16x4xbf16> to vector<16x16x4xbf16>
    %34 = vector.shape_cast %33 : vector<16x16x4xbf16> to vector<256x4xbf16>
    %c3 = arith.constant 3 : index
    %c0_23 = arith.constant 0 : index
    %c0_24 = arith.constant 0 : index
    %35 = vector.load %arg3[%c3, %c0_23, %c0_24] : memref<9x4x8xbf16, #tpu.memory_space<vmem>>, vector<1x4x8xbf16>
    %36 = vector.shape_cast %35 : vector<1x4x8xbf16> to vector<4x8xbf16>
    %cst_25 = arith.constant dense<0.000000e+00> : vector<256x8xf32>
    %37 = tpu.matmul %34, %36, %cst_25 {dimension_numbers = #tpu.dot_dimension_numbers<[1], [0], [0], [1], [0, 0, 1, 1], [], []>} : vector<256x4xbf16>, vector<4x8xbf16>, vector<256x8xf32> -> vector<256x8xf32>
    %38 = arith.addf %29, %37 : vector<256x8xf32>
    %c1_i32_26 = arith.constant 1 : i32
    %39 = arith.addi %1, %c1_i32_26 : i32
    %c0_27 = arith.constant 0 : index
    %40 = arith.index_cast %39 : i32 to index
    %c1_28 = arith.constant 1 : index
    %c0_29 = arith.constant 0 : index
    %41 = vector.load %arg2[%c0_27, %40, %c1_28, %c0_29] : memref<1x18x18x4xbf16, #tpu.memory_space<vmem>>, vector<1x16x16x4xbf16>
    %42 = vector.shape_cast %41 : vector<1x16x16x4xbf16> to vector<16x16x4xbf16>
    %43 = vector.shape_cast %42 : vector<16x16x4xbf16> to vector<256x4xbf16>
    %c4 = arith.constant 4 : index
    %c0_30 = arith.constant 0 : index
    %c0_31 = arith.constant 0 : index
    %44 = vector.load %arg3[%c4, %c0_30, %c0_31] : memref<9x4x8xbf16, #tpu.memory_space<vmem>>, vector<1x4x8xbf16>
    %45 = vector.shape_cast %44 : vector<1x4x8xbf16> to vector<4x8xbf16>
    %cst_32 = arith.constant dense<0.000000e+00> : vector<256x8xf32>
    %46 = tpu.matmul %43, %45, %cst_32 {dimension_numbers = #tpu.dot_dimension_numbers<[1], [0], [0], [1], [0, 0, 1, 1], [], []>} : vector<256x4xbf16>, vector<4x8xbf16>, vector<256x8xf32> -> vector<256x8xf32>
    %47 = arith.addf %38, %46 : vector<256x8xf32>
    %c1_i32_33 = arith.constant 1 : i32
    %48 = arith.addi %1, %c1_i32_33 : i32
    %c0_34 = arith.constant 0 : index
    %49 = arith.index_cast %48 : i32 to index
    %c2_35 = arith.constant 2 : index
    %c0_36 = arith.constant 0 : index
    %50 = vector.load %arg2[%c0_34, %49, %c2_35, %c0_36] : memref<1x18x18x4xbf16, #tpu.memory_space<vmem>>, vector<1x16x16x4xbf16>
    %51 = vector.shape_cast %50 : vector<1x16x16x4xbf16> to vector<16x16x4xbf16>
    %52 = vector.shape_cast %51 : vector<16x16x4xbf16> to vector<256x4xbf16>
    %c5 = arith.constant 5 : index
    %c0_37 = arith.constant 0 : index
    %c0_38 = arith.constant 0 : index
    %53 = vector.load %arg3[%c5, %c0_37, %c0_38] : memref<9x4x8xbf16, #tpu.memory_space<vmem>>, vector<1x4x8xbf16>
    %54 = vector.shape_cast %53 : vector<1x4x8xbf16> to vector<4x8xbf16>
    %cst_39 = arith.constant dense<0.000000e+00> : vector<256x8xf32>
    %55 = tpu.matmul %52, %54, %cst_39 {dimension_numbers = #tpu.dot_dimension_numbers<[1], [0], [0], [1], [0, 0, 1, 1], [], []>} : vector<256x4xbf16>, vector<4x8xbf16>, vector<256x8xf32> -> vector<256x8xf32>
    %56 = arith.addf %47, %55 : vector<256x8xf32>
    %c2_i32 = arith.constant 2 : i32
    %57 = arith.addi %1, %c2_i32 : i32
    %c0_40 = arith.constant 0 : index
    %58 = arith.index_cast %57 : i32 to index
    %c0_41 = arith.constant 0 : index
    %c0_42 = arith.constant 0 : index
    %59 = vector.load %arg2[%c0_40, %58, %c0_41, %c0_42] : memref<1x18x18x4xbf16, #tpu.memory_space<vmem>>, vector<1x16x16x4xbf16>
    %60 = vector.shape_cast %59 : vector<1x16x16x4xbf16> to vector<16x16x4xbf16>
    %61 = vector.shape_cast %60 : vector<16x16x4xbf16> to vector<256x4xbf16>
    %c6 = arith.constant 6 : index
    %c0_43 = arith.constant 0 : index
    %c0_44 = arith.constant 0 : index
    %62 = vector.load %arg3[%c6, %c0_43, %c0_44] : memref<9x4x8xbf16, #tpu.memory_space<vmem>>, vector<1x4x8xbf16>
    %63 = vector.shape_cast %62 : vector<1x4x8xbf16> to vector<4x8xbf16>
    %cst_45 = arith.constant dense<0.000000e+00> : vector<256x8xf32>
    %64 = tpu.matmul %61, %63, %cst_45 {dimension_numbers = #tpu.dot_dimension_numbers<[1], [0], [0], [1], [0, 0, 1, 1], [], []>} : vector<256x4xbf16>, vector<4x8xbf16>, vector<256x8xf32> -> vector<256x8xf32>
    %65 = arith.addf %56, %64 : vector<256x8xf32>
    %c2_i32_46 = arith.constant 2 : i32
    %66 = arith.addi %1, %c2_i32_46 : i32
    %c0_47 = arith.constant 0 : index
    %67 = arith.index_cast %66 : i32 to index
    %c1_48 = arith.constant 1 : index
    %c0_49 = arith.constant 0 : index
    %68 = vector.load %arg2[%c0_47, %67, %c1_48, %c0_49] : memref<1x18x18x4xbf16, #tpu.memory_space<vmem>>, vector<1x16x16x4xbf16>
    %69 = vector.shape_cast %68 : vector<1x16x16x4xbf16> to vector<16x16x4xbf16>
    %70 = vector.shape_cast %69 : vector<16x16x4xbf16> to vector<256x4xbf16>
    %c7 = arith.constant 7 : index
    %c0_50 = arith.constant 0 : index
    %c0_51 = arith.constant 0 : index
    %71 = vector.load %arg3[%c7, %c0_50, %c0_51] : memref<9x4x8xbf16, #tpu.memory_space<vmem>>, vector<1x4x8xbf16>
    %72 = vector.shape_cast %71 : vector<1x4x8xbf16> to vector<4x8xbf16>
    %cst_52 = arith.constant dense<0.000000e+00> : vector<256x8xf32>
    %73 = tpu.matmul %70, %72, %cst_52 {dimension_numbers = #tpu.dot_dimension_numbers<[1], [0], [0], [1], [0, 0, 1, 1], [], []>} : vector<256x4xbf16>, vector<4x8xbf16>, vector<256x8xf32> -> vector<256x8xf32>
    %74 = arith.addf %65, %73 : vector<256x8xf32>
    %c2_i32_53 = arith.constant 2 : i32
    %75 = arith.addi %1, %c2_i32_53 : i32
    %c0_54 = arith.constant 0 : index
    %76 = arith.index_cast %75 : i32 to index
    %c2_55 = arith.constant 2 : index
    %c0_56 = arith.constant 0 : index
    %77 = vector.load %arg2[%c0_54, %76, %c2_55, %c0_56] : memref<1x18x18x4xbf16, #tpu.memory_space<vmem>>, vector<1x16x16x4xbf16>
    %78 = vector.shape_cast %77 : vector<1x16x16x4xbf16> to vector<16x16x4xbf16>
    %79 = vector.shape_cast %78 : vector<16x16x4xbf16> to vector<256x4xbf16>
    %c8 = arith.constant 8 : index
    %c0_57 = arith.constant 0 : index
    %c0_58 = arith.constant 0 : index
    %80 = vector.load %arg3[%c8, %c0_57, %c0_58] : memref<9x4x8xbf16, #tpu.memory_space<vmem>>, vector<1x4x8xbf16>
    %81 = vector.shape_cast %80 : vector<1x4x8xbf16> to vector<4x8xbf16>
    %cst_59 = arith.constant dense<0.000000e+00> : vector<256x8xf32>
    %82 = tpu.matmul %79, %81, %cst_59 {dimension_numbers = #tpu.dot_dimension_numbers<[1], [0], [0], [1], [0, 0, 1, 1], [], []>} : vector<256x4xbf16>, vector<4x8xbf16>, vector<256x8xf32> -> vector<256x8xf32>
    %83 = arith.addf %74, %82 : vector<256x8xf32>
    %c0_60 = arith.constant 0 : index
    %c0_61 = arith.constant 0 : index
    %84 = vector.load %arg4[%c0_60, %c0_61] : memref<1x8xf32, #tpu.memory_space<vmem>>, vector<1x8xf32>
    %85 = vector.broadcast %84 : vector<1x8xf32> to vector<256x8xf32>
    %86 = arith.addf %83, %85 : vector<256x8xf32>
    %cst_62 = arith.constant 0.000000e+00 : f32
    %87 = vector.broadcast %cst_62 : f32 to vector<256x8xf32>
    %88 = arith.maximumf %86, %87 : vector<256x8xf32>
    %89 = vector.shape_cast %88 : vector<256x8xf32> to vector<8x32x8xf32>
    %c0_63 = arith.constant 0 : index
    %c0_64 = arith.constant 0 : index
    %90 = vector.load %arg5[%c0_63, %c0_64] : memref<8x32xf32, #tpu.memory_space<vmem>>, vector<8x32xf32>
    %91 = vector.shape_cast %90 : vector<8x32xf32> to vector<1x8x32xf32>
    %92 = vector.broadcast %91 : vector<1x8x32xf32> to vector<8x8x32xf32>
    %cst_65 = arith.constant dense<0.000000e+00> : vector<8x8x8xf32>
    %93 = tpu.matmul %92, %89, %cst_65 {dimension_numbers = #tpu.dot_dimension_numbers<[2], [1], [1], [2], [0, 0, 0, 1, 1, 2], [0], [0]>} : vector<8x8x32xf32>, vector<8x32x8xf32>, vector<8x8x8xf32> -> vector<8x8x8xf32>
    %cst_66 = arith.constant 2.500000e-01 : f32
    %94 = vector.broadcast %cst_66 : f32 to vector<8x8x8xf32>
    %95 = arith.mulf %93, %94 : vector<8x8x8xf32>
    %96 = vector.shape_cast %95 : vector<8x8x8xf32> to vector<1x8x8x8xf32>
    %c0_67 = arith.constant 0 : index
    %c0_68 = arith.constant 0 : index
    %c0_69 = arith.constant 0 : index
    %c0_70 = arith.constant 0 : index
    %97 = vector.load %arg6[%c0_67, %c0_68, %c0_69, %c0_70] : memref<1x8x8x8xf32, #tpu.memory_space<vmem>>, vector<1x8x8x8xf32>
    tpu.vector_store %arg6[%c0_67, %c0_68, %c0_69, %c0_70], %96 {strides = array<i32>} : memref<1x8x8x8xf32, #tpu.memory_space<vmem>>, vector<1x8x8x8xf32>,
    return
  }
  func.func @transform_0(%arg0: i32, %arg1: i32) -> (i32, i32, i32, i32) {
    %c0_i32 = arith.constant 0 : i32
    %c0_i32_0 = arith.constant 0 : i32
    %c0_i32_1 = arith.constant 0 : i32
    %c0_i32_2 = arith.constant 0 : i32
    return %arg0, %c0_i32, %c0_i32_0, %c0_i32_1 : i32, i32, i32, i32
  }
  func.func @transform_1(%arg0: i32, %arg1: i32) -> (i32, i32, i32) {
    %c0_i32 = arith.constant 0 : i32
    %c0_i32_0 = arith.constant 0 : i32
    %c0_i32_1 = arith.constant 0 : i32
    %c0_i32_2 = arith.constant 0 : i32
    return %c0_i32, %c0_i32_0, %c0_i32_1 : i32, i32, i32
  }
  func.func @transform_2(%arg0: i32, %arg1: i32) -> (i32, i32) {
    %c0_i32 = arith.constant 0 : i32
    %c0_i32_0 = arith.constant 0 : i32
    %c0_i32_1 = arith.constant 0 : i32
    return %c0_i32, %c0_i32_0 : i32, i32
  }
  func.func @transform_3(%arg0: i32, %arg1: i32) -> (i32, i32) {
    %c0_i32 = arith.constant 0 : i32
    %c0_i32_0 = arith.constant 0 : i32
    %c0_i32_1 = arith.constant 0 : i32
    return %c0_i32, %c0_i32_0 : i32, i32
  }
  func.func @transform_4(%arg0: i32, %arg1: i32) -> (i32, i32, i32, i32) {
    %c0_i32 = arith.constant 0 : i32
    %c0_i32_0 = arith.constant 0 : i32
    %c0_i32_1 = arith.constant 0 : i32
    return %arg0, %arg1, %c0_i32, %c0_i32_0 : i32, i32, i32, i32
  }
}

</mosaic_0001>

<llo_original>
// kernel: tpu_custom_call.1
$region0: #{tpu_custom_call.1}
  #allocation0 [shape = 'u32[]', space=smem, size = 0x4, offset = 0x4, fixed_abs, tag = 'smem constant byte address 0x4 - core index']
  #allocation1 [shape = 'u32[144,128]{1,0:T(1,128)}', space=vmem, size = 0x12000, scoped, tag = 'internal scratch']
  %s0 = inlined_call_operand.vmem [shape: bf16[2,18,18,4], index: 0, kind: input, shape index: {}]
  %s1 = inlined_call_operand.vmem [shape: bf16[9,4,8], index: 1, kind: input, shape index: {}]
  %s2 = inlined_call_operand.vmem [shape: f32[1,8], index: 2, kind: input, shape index: {}]
  %s3 = inlined_call_operand.vmem [shape: f32[8,32], index: 3, kind: input, shape index: {}]
  %s4 = inlined_call_operand.hbm [shape: f32[2,8,8,8], index: 4, kind: output, shape index: {}]
  %s5 = sld [smem:[#allocation0]]
  $region49: #{tpu_custom_call.1} parent=0
    _
  %s7 = ssub.s32 1, %s5
  %s8 = scalar_select 0, %s7, %s5
  $region1: #{tpu_custom_call.1} parent=0
    #allocation2 [shape = 'u8[65536]{0}', space=vmem, size = 0x10000, scoped, tag = 'output window, operand 0']
    #allocation3 [shape = 's32[2]{0}', space=sflag, size = 0x8, scoped, tag = 'scoped memory for tpu_custom_call.1']
    %9 = vsyncpa [#allocation3], 0
    %s10 = scalar_lea.sflag [#allocation3], 1
    %11 = vsyncpa %s10, 0
    loop: start=0, step=1, limit=4
    $region2: #{tpu_custom_call.1} parent=1 // loop_pre_header
      _
    $region3: #{tpu_custom_call.1} parent=1 // loop_header
      %s13 = sphi 0, %s17
      %p14 = scmp.ge.s32.totalorder %s13, 4
      %s20 = sphi 0, %s32
      %s21 = sphi 0, %s28
      %s22 = sphi 0, %s20
      %s23 = sphi 0, %s21
      %s24 = sphi 0, %s22
      %s25 = sphi 0, %s23
      %s35 = sphi 0, %s37
      %s38 = sphi 0, %s35
      %s39 = sphi 0, %s38
      %s55 = sphi 0, %s39
      %s59 = sphi 0, %s59
      %s61 = sphi 0, %s59
      %s62 = sphi 0, %s61
      %s76 = sphi 0, %s62
      %s80 = sphi 0, %s80
      %s82 = sphi 0, %s80
      %s83 = sphi 0, %s82
      %s97 = sphi 0, %s83
      %s101 = sphi 0, %s101
      %s103 = sphi 0, %s101
      %s104 = sphi 0, %s103
      %s118 = sphi 0, %s104
      %s126 = sphi 0, %s128
      %s129 = sphi 0, %s126
      %s130 = sphi 0, %s129
      %s146 = sphi 0, %s130
    $region4: #{tpu_custom_call.1} parent=1 // loop_header_branch
      %16 = sbr.rel (%p14) target = $region8
    $region5: #{tpu_custom_call.1} parent=1 // loop_body
      %s18 = ssub.s32 %s13, 1
      %s19 = ssub.s32 %s13, 2
      %s26 = sadd.s32 1, %s21
      %p27 = scmp.ge.s32.totalorder %s26, 1
      %s28 = scalar_select %p27, 0, %s26
      %s29 = sadd.s32 1, %s20
      %s30 = scalar_select %p27, %s29, %s20
      %p31 = scmp.ge.s32.totalorder %s30, 2
      %s32 = scalar_select %p31, 0, %s30
      %s33 = ssub.s32 %s20, %s32
      %p34 = scmp.eq.s32.totalorder %s33, 0
      %s36 = sadd.s32 %s35, 1
      %s37 = scalar_select %p34, %s35, %s36
      %p40 = pneg %p34
      %p41 = scmp.eq.s32.totalorder %s13, 1
      %p42 = por %p40, %p41
      %p43 = scmp.ne.s32.totalorder %s35, %s38
      %p44 = scmp.eq.s32.totalorder %s13, 0
      %p45 = por %p43, %p44
      %p46 = scmp.ne.s32.totalorder %s35, %s38
      %p47 = scmp.eq.s32.totalorder %s18, 1
      %p48 = por %p46, %p47
      %p49 = scmp.ne.s32.totalorder %s38, %s39
      %p50 = scmp.eq.s32.totalorder %s18, 0
      %p51 = por %p49, %p50
      %p52 = scmp.ne.s32.totalorder %s38, %s39
      %p53 = scmp.eq.s32.totalorder %s19, 1
      %p54 = por %p52, %p53
      %p56 = scmp.ne.s32.totalorder %s39, %s55
      %p57 = scmp.eq.s32.totalorder %s19, 0
      %p58 = por %p56, %p57
      %s60 = sadd.s32 %s59, 1
      %p63 = scmp.eq.s32.totalorder %s13, 1
      %p64 = scmp.ne.s32.totalorder %s59, %s61
      %p65 = scmp.eq.s32.totalorder %s13, 0
      %p66 = por %p64, %p65
      %p67 = scmp.ne.s32.totalorder %s59, %s61
      %p68 = scmp.eq.s32.totalorder %s18, 1
      %p69 = por %p67, %p68
      %p70 = scmp.ne.s32.totalorder %s61, %s62
      %p71 = scmp.eq.s32.totalorder %s18, 0
      %p72 = por %p70, %p71
      %p73 = scmp.ne.s32.totalorder %s61, %s62
      %p74 = scmp.eq.s32.totalorder %s19, 1
      %p75 = por %p73, %p74
      %p77 = scmp.ne.s32.totalorder %s62, %s76
      %p78 = scmp.eq.s32.totalorder %s19, 0
      %p79 = por %p77, %p78
      %s81 = sadd.s32 %s80, 1
      %p84 = scmp.eq.s32.totalorder %s13, 1
      %p85 = scmp.ne.s32.totalorder %s80, %s82
      %p86 = scmp.eq.s32.totalorder %s13, 0
      %p87 = por %p85, %p86
      %p88 = scmp.ne.s32.totalorder %s80, %s82
      %p89 = scmp.eq.s32.totalorder %s18, 1
      %p90 = por %p88, %p89
      %p91 = scmp.ne.s32.totalorder %s82, %s83
      %p92 = scmp.eq.s32.totalorder %s18, 0
      %p93 = por %p91, %p92
      %p94 = scmp.ne.s32.totalorder %s82, %s83
      %p95 = scmp.eq.s32.totalorder %s19, 1
      %p96 = por %p94, %p95
      %p98 = scmp.ne.s32.totalorder %s83, %s97
      %p99 = scmp.eq.s32.totalorder %s19, 0
      %p100 = por %p98, %p99
      %s102 = sadd.s32 %s101, 1
      %p105 = scmp.eq.s32.totalorder %s13, 1
      %p106 = scmp.ne.s32.totalorder %s101, %s103
      %p107 = scmp.eq.s32.totalorder %s13, 0
      %p108 = por %p106, %p107
      %p109 = scmp.ne.s32.totalorder %s101, %s103
      %p110 = scmp.eq.s32.totalorder %s18, 1
      %p111 = por %p109, %p110
      %p112 = scmp.ne.s32.totalorder %s103, %s104
      %p113 = scmp.eq.s32.totalorder %s18, 0
      %p114 = por %p112, %p113
      %p115 = scmp.ne.s32.totalorder %s103, %s104
      %p116 = scmp.eq.s32.totalorder %s19, 1
      %p117 = por %p115, %p116
      %p119 = scmp.ne.s32.totalorder %s104, %s118
      %p120 = scmp.eq.s32.totalorder %s19, 0
      %p121 = por %p119, %p120
      %s122 = ssub.s32 %s20, %s32
      %s123 = ssub.s32 %s21, %s28
      %s124 = sor.u32 %s122, %s123
      %p125 = scmp.eq.s32.totalorder %s124, 0
      %s127 = sadd.s32 %s126, 1
      %s128 = scalar_select %p125, %s126, %s127
      %p131 = pneg %p125
      %p132 = scmp.eq.s32.totalorder %s13, 1
      %p133 = por %p131, %p132
      %p134 = scmp.ne.s32.totalorder %s126, %s129
      %p135 = scmp.eq.s32.totalorder %s13, 0
      %p136 = por %p134, %p135
      %p137 = scmp.ne.s32.totalorder %s126, %s129
      %p138 = scmp.eq.s32.totalorder %s18, 1
      %p139 = por %p137, %p138
      %p140 = scmp.ne.s32.totalorder %s129, %s130
      %p141 = scmp.eq.s32.totalorder %s18, 0
      %p142 = por %p140, %p141
      %p143 = scmp.ne.s32.totalorder %s129, %s130
      %p144 = scmp.eq.s32.totalorder %s19, 1
      %p145 = por %p143, %p144
      %p147 = scmp.ne.s32.totalorder %s130, %s146
      %p148 = scmp.eq.s32.totalorder %s19, 0
      %p149 = por %p147, %p148
      %p150 = scmp.le.s32.totalorder 1, %s13
      %p151 = scmp.lt.s32.totalorder %s13, 3
      %p152 = pnand %p150, %p151
      %p153 = pneg %p152
      // Predicated region
      $region9: #{tpu_custom_call.1} parent=5 // pred_check
        _
      $region10: #{tpu_custom_call.1} parent=5 // pred_check_branch
        %155 = sbr.rel (%p152) target = $region12
      $region11: #{tpu_custom_call.1} parent=5 // pred_region
        %s156 = ssub.s32 %s13, 1
        // Predicated region
        $region13: #{tpu_custom_call.1} parent=11 // pred_check
          %p157 = pneg %p72
        $region14: #{tpu_custom_call.1} parent=11 // pred_check_branch
          %159 = sbr.rel (%p157) target = $region16
        $region15: #{tpu_custom_call.1} parent=11 // pred_region
          _
        $region16: #{tpu_custom_call.1} parent=11 // pred_fallthru
          _
        // Predicated region
        $region17: #{tpu_custom_call.1} parent=11 // pred_check
          %p160 = pneg %p93
        $region18: #{tpu_custom_call.1} parent=11 // pred_check_branch
          %162 = sbr.rel (%p160) target = $region20
        $region19: #{tpu_custom_call.1} parent=11 // pred_region
          _
        $region20: #{tpu_custom_call.1} parent=11 // pred_fallthru
          _
        // Predicated region
        $region21: #{tpu_custom_call.1} parent=11 // pred_check
          %p163 = pneg %p114
        $region22: #{tpu_custom_call.1} parent=11 // pred_check_branch
          %165 = sbr.rel (%p163) target = $region24
        $region23: #{tpu_custom_call.1} parent=11 // pred_region
          _
        $region24: #{tpu_custom_call.1} parent=11 // pred_fallthru
          _
      $region12: #{tpu_custom_call.1} parent=5 // pred_fallthru
        _
      %p166 = scmp.lt.s32.totalorder %s13, 2
      // Predicated region
      $region25: #{tpu_custom_call.1} parent=5 // pred_check
        %p167 = pneg %p166
      $region26: #{tpu_custom_call.1} parent=5 // pred_check_branch
        %169 = sbr.rel (%p167) target = $region28
      $region27: #{tpu_custom_call.1} parent=5 // pred_region
        // Predicated region
        $region29: #{tpu_custom_call.1} parent=27 // pred_check
          %p170 = pneg %p45
        $region30: #{tpu_custom_call.1} parent=27 // pred_check_branch
          %172 = sbr.rel (%p170) target = $region32
        $region31: #{tpu_custom_call.1} parent=27 // pred_region
          %p173 = scmp.lt.s32.totalorder %s20, 1
          %s174 = scalar_select %p173, %s20, 1
          %s175 = smul.addr %s174, 54
          %s176 = smul.addr %s175, 4
          %s177 = scalar_lea.vmem %s0, %s176
        $region32: #{tpu_custom_call.1} parent=27 // pred_fallthru
          _
      $region28: #{tpu_custom_call.1} parent=5 // pred_fallthru
        _
      %p178 = scmp.le.s32.totalorder 1, %s13
      %p179 = scmp.lt.s32.totalorder %s13, 3
      %p180 = pnand %p178, %p179
      %p181 = pneg %p180
      // Predicated region
      $region33: #{tpu_custom_call.1} parent=5 // pred_check
        _
      $region34: #{tpu_custom_call.1} parent=5 // pred_check_branch
        %183 = sbr.rel (%p180) target = $region36
      $region35: #{tpu_custom_call.1} parent=5 // pred_region
        %s184 = ssub.s32 %s13, 1
        %p185 = scmp.lt.s32.totalorder %s22, 1
        %s186 = scalar_select %p185, %s22, 1
        %s187 = smul.addr %s186, 54
        %s188 = smul.addr %s187, 4
        %s189 = scalar_lea.vmem %s0, %s188
        %p190 = pneg %p51
        %p191 = pneg %p48
        %p192 = pneg %p72
        %p193 = pneg %p69
        %p194 = pneg %p93
        %p195 = pneg %p90
        %p196 = pneg %p114
        %p197 = pneg %p111
        %p198 = pneg %p142
        %p199 = pneg %p139
        %s200 = sand.u32 %s129, 1
        %s201 = scalar_lea.sflag [#allocation3], %s200
        %s202 = sand.u32 %s129, 1
        %s203 = smul.addr %s202, 64
        %s204 = scalar_lea.vmem [#allocation2], %s203
        %p205 = scmp.lt.s32.totalorder %s22, 1
        %s206 = scalar_select %p205, %s22, 1
        %s207 = smul.addr %s206, 54
        %s208 = smul.addr %s207, 4
        %s209 = scalar_lea.vmem %s0, %s208
        %s210 = smul.u32 8, %s23
        %s212 = smul.u32 %s23, 16
        %s213 = smul.u32 %s212, 3
        %s214 = smul.addr %s213, 4
        %s215 = scalar_lea.vmem %s209, %s214
        %v216 = vld [vmem:[%s215] sm:$0xf]
        %v217 = vld [vmem:[%s215 + $0x4] sm:$0xf]
        %v218 = vld [vmem:[%s215 + $0xc] sm:$0xf]
        %v219 = vld [vmem:[%s215 + $0x10] sm:$0xf]
        %v220 = vld [vmem:[%s215 + $0x18] sm:$0xf]
        %v221 = vld [vmem:[%s215 + $0x1c] sm:$0xf]
        %v222 = vld [vmem:[%s215 + $0x24] sm:$0xf]
        %v223 = vld [vmem:[%s215 + $0x28] sm:$0xf]
        %v224 = vld [vmem:[%s215 + $0x30] sm:$0xf]
        %v225 = vld [vmem:[%s215 + $0x34] sm:$0xf]
        %v226 = vld [vmem:[%s215 + $0x3c] sm:$0xf]
        %v227 = vld [vmem:[%s215 + $0x40] sm:$0xf]
        %v228 = vld [vmem:[%s215 + $0x48] sm:$0xf]
        %v229 = vld [vmem:[%s215 + $0x4c] sm:$0xf]
        %v230 = vld [vmem:[%s215 + $0x54] sm:$0xf]
        %v231 = vld [vmem:[%s215 + $0x58] sm:$0xf]
        %v232 = vld [vmem:[%s215 + $0x60] sm:$0xf]
        %v233 = vld [vmem:[%s215 + $0x64] sm:$0xf]
        %v234 = vld [vmem:[%s215 + $0x6c] sm:$0xf]
        %v235 = vld [vmem:[%s215 + $0x70] sm:$0xf]
        %v236 = vld [vmem:[%s215 + $0x78] sm:$0xf]
        %v237 = vld [vmem:[%s215 + $0x7c] sm:$0xf]
        %v238 = vld [vmem:[%s215 + $0x84] sm:$0xf]
        %v239 = vld [vmem:[%s215 + $0x88] sm:$0xf]
        %v240 = vld [vmem:[%s215 + $0x90] sm:$0xf]
        %v241 = vld [vmem:[%s215 + $0x94] sm:$0xf]
        %v242 = vld [vmem:[%s215 + $0x9c] sm:$0xf]
        %v243 = vld [vmem:[%s215 + $0xa0] sm:$0xf]
        %v244 = vld [vmem:[%s215 + $0xa8] sm:$0xf]
        %v245 = vld [vmem:[%s215 + $0xac] sm:$0xf]
        %v246 = vld [vmem:[%s215 + $0xb4] sm:$0xf]
        %v247 = vld [vmem:[%s215 + $0xb8] sm:$0xf]
        %v248 = vld [vmem:[%s1] sm:$0x3]
        %v249 = vld [vmem:[%s215 + $0x8] sm:$0x1]
        %v250 = vld [vmem:[%s215 + $0x14] sm:$0x1]
        %v251 = vld [vmem:[%s215 + $0x20] sm:$0x1]
        %v252 = vld [vmem:[%s215 + $0x2c] sm:$0x1]
        %v253 = vld [vmem:[%s215 + $0x38] sm:$0x1]
        %v254 = vld [vmem:[%s215 + $0x44] sm:$0x1]
        %v255 = vld [vmem:[%s215 + $0x50] sm:$0x1]
        %v256 = vld [vmem:[%s215 + $0x5c] sm:$0x1]
        %v257 = vld [vmem:[%s215 + $0x68] sm:$0x1]
        %v258 = vld [vmem:[%s215 + $0x74] sm:$0x1]
        %v259 = vld [vmem:[%s215 + $0x80] sm:$0x1]
        %v260 = vld [vmem:[%s215 + $0x8c] sm:$0x1]
        %v261 = vld [vmem:[%s215 + $0x98] sm:$0x1]
        %v262 = vld [vmem:[%s215 + $0xa4] sm:$0x1]
        %v263 = vld [vmem:[%s215 + $0xb0] sm:$0x1]
        %v264 = vld [vmem:[%s215 + $0xbc] sm:$0x1]
        %vm265 = vsmask.f32 3328
        %vm266 = vsmask.f32 7440
        %vm267 = vmor %vm265, %vm266
        %v269 = vshrl.u32 %v216, 16
        %v271 = vrot.slane %v269, 4
        %v272 = vshll.u32 %v216, 16
        %v274 = vrot.slane %v272, 5
        %v275 = vor.u32 %v271, %v274
        %v276 = vrot.slane %v275, 4
        %v278 = vshll.u32 %v217, 16
        %v280 = vrot.slane %v278, 5
        %v281 = vsel %vm267, %v276, %v280
        %v282 = vshrl.u32 %v217, 16
        %v284 = vrot.slane %v282, 4
        %v285 = vor.u32 %v284, %v280
        %v286 = vrot.slane %v285, 4
        %v288 = vshll.u32 %v249, 16
        %v290 = vrot.slane %v288, 5
        %v291 = vsel %vm267, %v286, %v290
        %v293 = vshrl.u32 %v218, 16
        %v295 = vrot.slane %v293, 4
        %v296 = vshll.u32 %v218, 16
        %v298 = vrot.slane %v296, 5
        %v299 = vor.u32 %v295, %v298
        %v300 = vrot.slane %v299, 4
        %v302 = vshll.u32 %v219, 16
        %v304 = vrot.slane %v302, 5
        %v305 = vsel %vm267, %v300, %v304
        %v306 = vshrl.u32 %v219, 16
        %v308 = vrot.slane %v306, 4
        %v309 = vor.u32 %v308, %v304
        %v310 = vrot.slane %v309, 4
        %v312 = vshll.u32 %v250, 16
        %v314 = vrot.slane %v312, 5
        %v315 = vsel %vm267, %v310, %v314
        %v317 = vshrl.u32 %v220, 16
        %v319 = vrot.slane %v317, 4
        %v320 = vshll.u32 %v220, 16
        %v322 = vrot.slane %v320, 5
        %v323 = vor.u32 %v319, %v322
        %v324 = vrot.slane %v323, 4
        %v326 = vshll.u32 %v221, 16
        %v328 = vrot.slane %v326, 5
        %v329 = vsel %vm267, %v324, %v328
        %v330 = vshrl.u32 %v221, 16
        %v332 = vrot.slane %v330, 4
        %v333 = vor.u32 %v332, %v328
        %v334 = vrot.slane %v333, 4
        %v336 = vshll.u32 %v251, 16
        %v338 = vrot.slane %v336, 5
        %v339 = vsel %vm267, %v334, %v338
        %v341 = vshrl.u32 %v222, 16
        %v343 = vrot.slane %v341, 4
        %v344 = vshll.u32 %v222, 16
        %v346 = vrot.slane %v344, 5
        %v347 = vor.u32 %v343, %v346
        %v348 = vrot.slane %v347, 4
        %v350 = vshll.u32 %v223, 16
        %v352 = vrot.slane %v350, 5
        %v353 = vsel %vm267, %v348, %v352
        %v354 = vshrl.u32 %v223, 16
        %v356 = vrot.slane %v354, 4
        %v357 = vor.u32 %v356, %v352
        %v358 = vrot.slane %v357, 4
        %v360 = vshll.u32 %v252, 16
        %v362 = vrot.slane %v360, 5
        %v363 = vsel %vm267, %v358, %v362
        %v365 = vshrl.u32 %v224, 16
        %v367 = vrot.slane %v365, 4
        %v368 = vshll.u32 %v224, 16
        %v370 = vrot.slane %v368, 5
        %v371 = vor.u32 %v367, %v370
        %v372 = vrot.slane %v371, 4
        %v374 = vshll.u32 %v225, 16
        %v376 = vrot.slane %v374, 5
        %v377 = vsel %vm267, %v372, %v376
        %v378 = vshrl.u32 %v225, 16
        %v380 = vrot.slane %v378, 4
        %v381 = vor.u32 %v380, %v376
        %v382 = vrot.slane %v381, 4
        %v384 = vshll.u32 %v253, 16
        %v386 = vrot.slane %v384, 5
        %v387 = vsel %vm267, %v382, %v386
        %v389 = vshrl.u32 %v226, 16
        %v391 = vrot.slane %v389, 4
        %v392 = vshll.u32 %v226, 16
        %v394 = vrot.slane %v392, 5
        %v395 = vor.u32 %v391, %v394
        %v396 = vrot.slane %v395, 4
        %v398 = vshll.u32 %v227, 16
        %v400 = vrot.slane %v398, 5
        %v401 = vsel %vm267, %v396, %v400
        %v402 = vshrl.u32 %v227, 16
        %v404 = vrot.slane %v402, 4
        %v405 = vor.u32 %v404, %v400
        %v406 = vrot.slane %v405, 4
        %v408 = vshll.u32 %v254, 16
        %v410 = vrot.slane %v408, 5
        %v411 = vsel %vm267, %v406, %v410
        %v413 = vshrl.u32 %v228, 16
        %v415 = vrot.slane %v413, 4
        %v416 = vshll.u32 %v228, 16
        %v418 = vrot.slane %v416, 5
        %v419 = vor.u32 %v415, %v418
        %v420 = vrot.slane %v419, 4
        %v422 = vshll.u32 %v229, 16
        %v424 = vrot.slane %v422, 5
        %v425 = vsel %vm267, %v420, %v424
        %v426 = vshrl.u32 %v229, 16
        %v428 = vrot.slane %v426, 4
        %v429 = vor.u32 %v428, %v424
        %v430 = vrot.slane %v429, 4
        %v432 = vshll.u32 %v255, 16
        %v434 = vrot.slane %v432, 5
        %v435 = vsel %vm267, %v430, %v434
        %v437 = vshrl.u32 %v230, 16
        %v439 = vrot.slane %v437, 4
        %v440 = vshll.u32 %v230, 16
        %v442 = vrot.slane %v440, 5
        %v443 = vor.u32 %v439, %v442
        %v444 = vrot.slane %v443, 4
        %v446 = vshll.u32 %v231, 16
        %v448 = vrot.slane %v446, 5
        %v449 = vsel %vm267, %v444, %v448
        %v450 = vshrl.u32 %v231, 16
        %v452 = vrot.slane %v450, 4
        %v453 = vor.u32 %v452, %v448
        %v454 = vrot.slane %v453, 4
        %v456 = vshll.u32 %v256, 16
        %v458 = vrot.slane %v456, 5
        %v459 = vsel %vm267, %v454, %v458
        %v461 = vshrl.u32 %v232, 16
        %v463 = vrot.slane %v461, 4
        %v464 = vshll.u32 %v232, 16
        %v466 = vrot.slane %v464, 5
        %v467 = vor.u32 %v463, %v466
        %v468 = vrot.slane %v467, 4
        %v470 = vshll.u32 %v233, 16
        %v472 = vrot.slane %v470, 5
        %v473 = vsel %vm267, %v468, %v472
        %v474 = vshrl.u32 %v233, 16
        %v476 = vrot.slane %v474, 4
        %v477 = vor.u32 %v476, %v472
        %v478 = vrot.slane %v477, 4
        %v480 = vshll.u32 %v257, 16
        %v482 = vrot.slane %v480, 5
        %v483 = vsel %vm267, %v478, %v482
        %v485 = vshrl.u32 %v234, 16
        %v487 = vrot.slane %v485, 4
        %v488 = vshll.u32 %v234, 16
        %v490 = vrot.slane %v488, 5
        %v491 = vor.u32 %v487, %v490
        %v492 = vrot.slane %v491, 4
        %v494 = vshll.u32 %v235, 16
        %v496 = vrot.slane %v494, 5
        %v497 = vsel %vm267, %v492, %v496
        %v498 = vshrl.u32 %v235, 16
        %v500 = vrot.slane %v498, 4
        %v501 = vor.u32 %v500, %v496
        %v502 = vrot.slane %v501, 4
        %v504 = vshll.u32 %v258, 16
        %v506 = vrot.slane %v504, 5
        %v507 = vsel %vm267, %v502, %v506
        %v509 = vshrl.u32 %v236, 16
        %v511 = vrot.slane %v509, 4
        %v512 = vshll.u32 %v236, 16
        %v514 = vrot.slane %v512, 5
        %v515 = vor.u32 %v511, %v514
        %v516 = vrot.slane %v515, 4
        %v518 = vshll.u32 %v237, 16
        %v520 = vrot.slane %v518, 5
        %v521 = vsel %vm267, %v516, %v520
        %v522 = vshrl.u32 %v237, 16
        %v524 = vrot.slane %v522, 4
        %v525 = vor.u32 %v524, %v520
        %v526 = vrot.slane %v525, 4
        %v528 = vshll.u32 %v259, 16
        %v530 = vrot.slane %v528, 5
        %v531 = vsel %vm267, %v526, %v530
        %v533 = vshrl.u32 %v238, 16
        %v535 = vrot.slane %v533, 4
        %v536 = vshll.u32 %v238, 16
        %v538 = vrot.slane %v536, 5
        %v539 = vor.u32 %v535, %v538
        %v540 = vrot.slane %v539, 4
        %v542 = vshll.u32 %v239, 16
        %v544 = vrot.slane %v542, 5
        %v545 = vsel %vm267, %v540, %v544
        %v546 = vshrl.u32 %v239, 16
        %v548 = vrot.slane %v546, 4
        %v549 = vor.u32 %v548, %v544
        %v550 = vrot.slane %v549, 4
        %v552 = vshll.u32 %v260, 16
        %v554 = vrot.slane %v552, 5
        %v555 = vsel %vm267, %v550, %v554
        %v557 = vshrl.u32 %v240, 16
        %v559 = vrot.slane %v557, 4
        %v560 = vshll.u32 %v240, 16
        %v562 = vrot.slane %v560, 5
        %v563 = vor.u32 %v559, %v562
        %v564 = vrot.slane %v563, 4
        %v566 = vshll.u32 %v241, 16
        %v568 = vrot.slane %v566, 5
        %v569 = vsel %vm267, %v564, %v568
        %v570 = vshrl.u32 %v241, 16
        %v572 = vrot.slane %v570, 4
        %v573 = vor.u32 %v572, %v568
        %v574 = vrot.slane %v573, 4
        %v576 = vshll.u32 %v261, 16
        %v578 = vrot.slane %v576, 5
        %v579 = vsel %vm267, %v574, %v578
        %v581 = vshrl.u32 %v242, 16
        %v583 = vrot.slane %v581, 4
        %v584 = vshll.u32 %v242, 16
        %v586 = vrot.slane %v584, 5
        %v587 = vor.u32 %v583, %v586
        %v588 = vrot.slane %v587, 4
        %v590 = vshll.u32 %v243, 16
        %v592 = vrot.slane %v590, 5
        %v593 = vsel %vm267, %v588, %v592
        %v594 = vshrl.u32 %v243, 16
        %v596 = vrot.slane %v594, 4
        %v597 = vor.u32 %v596, %v592
        %v598 = vrot.slane %v597, 4
        %v600 = vshll.u32 %v262, 16
        %v602 = vrot.slane %v600, 5
        %v603 = vsel %vm267, %v598, %v602
        %v605 = vshrl.u32 %v244, 16
        %v607 = vrot.slane %v605, 4
        %v608 = vshll.u32 %v244, 16
        %v610 = vrot.slane %v608, 5
        %v611 = vor.u32 %v607, %v610
        %v612 = vrot.slane %v611, 4
        %v614 = vshll.u32 %v245, 16
        %v616 = vrot.slane %v614, 5
        %v617 = vsel %vm267, %v612, %v616
        %v618 = vshrl.u32 %v245, 16
        %v620 = vrot.slane %v618, 4
        %v621 = vor.u32 %v620, %v616
        %v622 = vrot.slane %v621, 4
        %v624 = vshll.u32 %v263, 16
        %v626 = vrot.slane %v624, 5
        %v627 = vsel %vm267, %v622, %v626
        %v629 = vshrl.u32 %v246, 16
        %v631 = vrot.slane %v629, 4
        %v632 = vshll.u32 %v246, 16
        %v634 = vrot.slane %v632, 5
        %v635 = vor.u32 %v631, %v634
        %v636 = vrot.slane %v635, 4
        %v638 = vshll.u32 %v247, 16
        %v640 = vrot.slane %v638, 5
        %v641 = vsel %vm267, %v636, %v640
        %v642 = vshrl.u32 %v247, 16
        %v644 = vrot.slane %v642, 4
        %v645 = vor.u32 %v644, %v640
        %v646 = vrot.slane %v645, 4
        %v648 = vshll.u32 %v264, 16
        %v650 = vrot.slane %v648, 5
        %v651 = vsel %vm267, %v646, %v650
        %s652 = scalar_lea.vmem %s1, 2
        %v653 = vld [vmem:[%s652] sm:$0x3]
        %v654 = vunpack.c.l.b16 %v281
        %v655 = vunpack.c.l.b16 %v291
        %v656 = vunpack.c.l.b16 %v305
        %v657 = vunpack.c.l.b16 %v315
        %v658 = vunpack.c.l.b16 %v329
        %v659 = vunpack.c.l.b16 %v339
        %v660 = vunpack.c.l.b16 %v353
        %v661 = vunpack.c.l.b16 %v363
        %v662 = vunpack.c.l.b16 %v377
        %v663 = vunpack.c.l.b16 %v387
        %v664 = vunpack.c.l.b16 %v401
        %v665 = vunpack.c.l.b16 %v411
        %v666 = vunpack.c.l.b16 %v425
        %v667 = vunpack.c.l.b16 %v435
        %v668 = vunpack.c.l.b16 %v449
        %v669 = vunpack.c.l.b16 %v459
        %v670 = vunpack.c.l.b16 %v473
        %v671 = vunpack.c.l.b16 %v483
        %v672 = vunpack.c.l.b16 %v497
        %v673 = vunpack.c.l.b16 %v507
        %v674 = vunpack.c.l.b16 %v521
        %v675 = vunpack.c.l.b16 %v531
        %v676 = vunpack.c.l.b16 %v545
        %v677 = vunpack.c.l.b16 %v555
        %v678 = vunpack.c.l.b16 %v569
        %v679 = vunpack.c.l.b16 %v579
        %v680 = vunpack.c.l.b16 %v593
        %v681 = vunpack.c.l.b16 %v603
        %v682 = vunpack.c.l.b16 %v617
        %v683 = vunpack.c.l.b16 %v627
        %v684 = vunpack.c.l.b16 %v641
        %v685 = vunpack.c.l.b16 %v651
        %v686 = vpack.c.b16 %v655, %v654
        %v687 = vpack.c.b16 %v657, %v656
        %v688 = vpack.c.b16 %v659, %v658
        %v689 = vpack.c.b16 %v661, %v660
        %v690 = vpack.c.b16 %v663, %v662
        %v691 = vpack.c.b16 %v665, %v664
        %v692 = vpack.c.b16 %v667, %v666
        %v693 = vpack.c.b16 %v669, %v668
        %v694 = vpack.c.b16 %v671, %v670
        %v695 = vpack.c.b16 %v673, %v672
        %v696 = vpack.c.b16 %v675, %v674
        %v697 = vpack.c.b16 %v677, %v676
        %v698 = vpack.c.b16 %v679, %v678
        %v699 = vpack.c.b16 %v681, %v680
        %v700 = vpack.c.b16 %v683, %v682
        %v701 = vpack.c.b16 %v685, %v684
        %vm702 = vcmask 31744
        %v704 = vsel %vm702, %v686, 0
        %v707 = vsel %vm702, %v687, 0
        %v710 = vsel %vm702, %v688, 0
        %v713 = vsel %vm702, %v689, 0
        %v716 = vsel %vm702, %v690, 0
        %v719 = vsel %vm702, %v691, 0
        %v722 = vsel %vm702, %v692, 0
        %v725 = vsel %vm702, %v693, 0
        %v728 = vsel %vm702, %v694, 0
        %v731 = vsel %vm702, %v695, 0
        %v734 = vsel %vm702, %v696, 0
        %v737 = vsel %vm702, %v697, 0
        %v740 = vsel %vm702, %v698, 0
        %v743 = vsel %vm702, %v699, 0
        %v746 = vsel %vm702, %v700, 0
        %v749 = vsel %vm702, %v701, 0
        %vm751 = vcmask 1041408
        %v753 = vsel %vm751, %v653, 0
        %755 = vmatprep.subr.bf16.mxu0 0
        %756 = vmatpush1.bf16.msra.mxu0 %v753
        %757 = vmatprep.subr.bf16.mxu0 0
        %758 = vmatpush1.bf16.msra.mxu0 0
        %759 = vmatprep.subr.bf16.mxu0 0
        %760 = vmatpush1.bf16.msra.mxu0 0
        %761 = vmatprep.subr.bf16.mxu0 0
        %762 = vmatpush1.bf16.msra.mxu0 0
        %763 = vmatprep.subr.bf16.mxu0 0
        %764 = vmatpush1.bf16.msra.mxu0 0
        %765 = vmatprep.subr.bf16.mxu0 0
        %766 = vmatpush1.bf16.msra.mxu0 0
        %767 = vmatprep.subr.bf16.mxu0 0
        %768 = vmatpush1.bf16.msra.mxu0 0
        %769 = vmatprep.subr.bf16.mxu0 0
        %770 = vmatpush1.bf16.msra.mxu0 0
        %771 = vmatprep.subr.bf16.mxu0 0
        %772 = vmatpush1.bf16.msra.mxu0 0
        %773 = vmatprep.subr.bf16.mxu0 0
        %774 = vmatpush1.bf16.msra.mxu0 0
        %775 = vmatprep.subr.bf16.mxu0 0
        %776 = vmatpush1.bf16.msra.mxu0 0
        %777 = vmatprep.subr.bf16.mxu0 0
        %778 = vmatpush1.bf16.msra.mxu0 0
        %779 = vmatprep.subr.bf16.mxu0 0
        %780 = vmatpush1.bf16.msra.mxu0 0
        %781 = vmatprep.subr.bf16.mxu0 0
        %782 = vmatpush1.bf16.msra.mxu0 0
        %783 = vmatprep.subr.bf16.mxu0 0
        %784 = vmatpush1.bf16.msra.mxu0 0
        %785 = vmatprep.subr.bf16.mxu0 0
        %786 = vmatpush1.bf16.msra.mxu0 0
        %787 = vmatprep.mubr.bf16.mxu0 0
        %788 = vmatmul.mubr.bf16.gmra.mrb[0].mxu0 %v704
        %v789 = vpop.f32.mrb[0].mxu0
        %v790 = vadd.f32 0.0, %v789
        %v791 = vpop.f32.mrb[0].mxu0
        %v792 = vpop.f32.mrb[0].mxu0
        %v793 = vadd.f32 0.0, %v792
        %v794 = vpop.f32.mrb[0].mxu0
        %795 = vmatprep.mubr.bf16.mxu0 0
        %796 = vmatmul.mubr.bf16.gmra.mrb[0].mxu0 %v707
        %v797 = vpop.f32.mrb[0].mxu0
        %v798 = vadd.f32 0.0, %v797
        %v799 = vpop.f32.mrb[0].mxu0
        %v800 = vpop.f32.mrb[0].mxu0
        %v801 = vadd.f32 0.0, %v800
        %v802 = vpop.f32.mrb[0].mxu0
        %803 = vmatprep.mubr.bf16.mxu0 0
        %804 = vmatmul.mubr.bf16.gmra.mrb[0].mxu0 %v710
        %v805 = vpop.f32.mrb[0].mxu0
        %v806 = vadd.f32 0.0, %v805
        %v807 = vpop.f32.mrb[0].mxu0
        %v808 = vpop.f32.mrb[0].mxu0
        %v809 = vadd.f32 0.0, %v808
        %v810 = vpop.f32.mrb[0].mxu0
        %811 = vmatprep.mubr.bf16.mxu0 0
        %812 = vmatmul.mubr.bf16.gmra.mrb[0].mxu0 %v713
        %v813 = vpop.f32.mrb[0].mxu0
        %v814 = vadd.f32 0.0, %v813
        %v815 = vpop.f32.mrb[0].mxu0
        %v816 = vpop.f32.mrb[0].mxu0
        %v817 = vadd.f32 0.0, %v816
        %v818 = vpop.f32.mrb[0].mxu0
        %819 = vmatprep.mubr.bf16.mxu0 0
        %820 = vmatmul.mubr.bf16.gmra.mrb[0].mxu0 %v716
        %v821 = vpop.f32.mrb[0].mxu0
        %v822 = vadd.f32 0.0, %v821
        %v823 = vpop.f32.mrb[0].mxu0
        %v824 = vpop.f32.mrb[0].mxu0
        %v825 = vadd.f32 0.0, %v824
        %v826 = vpop.f32.mrb[0].mxu0
        %827 = vmatprep.mubr.bf16.mxu0 0
        %828 = vmatmul.mubr.bf16.gmra.mrb[0].mxu0 %v719
        %v829 = vpop.f32.mrb[0].mxu0
        %v830 = vadd.f32 0.0, %v829
        %v831 = vpop.f32.mrb[0].mxu0
        %v832 = vpop.f32.mrb[0].mxu0
        %v833 = vadd.f32 0.0, %v832
        %v834 = vpop.f32.mrb[0].mxu0
        %835 = vmatprep.mubr.bf16.mxu0 0
        %836 = vmatmul.mubr.bf16.gmra.mrb[0].mxu0 %v722
        %v837 = vpop.f32.mrb[0].mxu0
        %v838 = vadd.f32 0.0, %v837
        %v839 = vpop.f32.mrb[0].mxu0
        %v840 = vpop.f32.mrb[0].mxu0
        %v841 = vadd.f32 0.0, %v840
        %v842 = vpop.f32.mrb[0].mxu0
        %843 = vmatprep.mubr.bf16.mxu0 0
        %844 = vmatmul.mubr.bf16.gmra.mrb[0].mxu0 %v725
        %v845 = vpop.f32.mrb[0].mxu0
        %v846 = vadd.f32 0.0, %v845
        %v847 = vpop.f32.mrb[0].mxu0
        %v848 = vpop.f32.mrb[0].mxu0
        %v849 = vadd.f32 0.0, %v848
        %v850 = vpop.f32.mrb[0].mxu0
        %851 = vmatprep.mubr.bf16.mxu0 0
        %852 = vmatmul.mubr.bf16.gmra.mrb[0].mxu0 %v728
        %v853 = vpop.f32.mrb[0].mxu0
        %v854 = vadd.f32 0.0, %v853
        %v855 = vpop.f32.mrb[0].mxu0
        %v856 = vpop.f32.mrb[0].mxu0
        %v857 = vadd.f32 0.0, %v856
        %v858 = vpop.f32.mrb[0].mxu0
        %859 = vmatprep.mubr.bf16.mxu0 0
        %860 = vmatmul.mubr.bf16.gmra.mrb[0].mxu0 %v731
        %v861 = vpop.f32.mrb[0].mxu0
        %v862 = vadd.f32 0.0, %v861
        %v863 = vpop.f32.mrb[0].mxu0
        %v864 = vpop.f32.mrb[0].mxu0
        %v865 = vadd.f32 0.0, %v864
        %v866 = vpop.f32.mrb[0].mxu0
        %867 = vmatprep.mubr.bf16.mxu0 0
        %868 = vmatmul.mubr.bf16.gmra.mrb[0].mxu0 %v734
        %v869 = vpop.f32.mrb[0].mxu0
        %v870 = vadd.f32 0.0, %v869
        %v871 = vpop.f32.mrb[0].mxu0
        %v872 = vpop.f32.mrb[0].mxu0
        %v873 = vadd.f32 0.0, %v872
        %v874 = vpop.f32.mrb[0].mxu0
        %875 = vmatprep.mubr.bf16.mxu0 0
        %876 = vmatmul.mubr.bf16.gmra.mrb[0].mxu0 %v737
        %v877 = vpop.f32.mrb[0].mxu0
        %v878 = vadd.f32 0.0, %v877
        %v879 = vpop.f32.mrb[0].mxu0
        %v880 = vpop.f32.mrb[0].mxu0
        %v881 = vadd.f32 0.0, %v880
        %v882 = vpop.f32.mrb[0].mxu0
        %883 = vmatprep.mubr.bf16.mxu0 0
        %884 = vmatmul.mubr.bf16.gmra.mrb[0].mxu0 %v740
        %v885 = vpop.f32.mrb[0].mxu0
        %v886 = vadd.f32 0.0, %v885
        %v887 = vpop.f32.mrb[0].mxu0
        %v888 = vpop.f32.mrb[0].mxu0
        %v889 = vadd.f32 0.0, %v888
        %v890 = vpop.f32.mrb[0].mxu0
        %891 = vmatprep.mubr.bf16.mxu0 0
        %892 = vmatmul.mubr.bf16.gmra.mrb[0].mxu0 %v743
        %v893 = vpop.f32.mrb[0].mxu0
        %v894 = vadd.f32 0.0, %v893
        %v895 = vpop.f32.mrb[0].mxu0
        %v896 = vpop.f32.mrb[0].mxu0
        %v897 = vadd.f32 0.0, %v896
        %v898 = vpop.f32.mrb[0].mxu0
        %899 = vmatprep.mubr.bf16.mxu0 0
        %900 = vmatmul.mubr.bf16.gmra.mrb[0].mxu0 %v746
        %v901 = vpop.f32.mrb[0].mxu0
        %v902 = vadd.f32 0.0, %v901
        %v903 = vpop.f32.mrb[0].mxu0
        %v904 = vpop.f32.mrb[0].mxu0
        %v905 = vadd.f32 0.0, %v904
        %v906 = vpop.f32.mrb[0].mxu0
        %907 = vmatprep.mubr.bf16.mxu0 0
        %908 = vmatmul.mubr.bf16.gmra.mrb[0].mxu0 %v749
        %v909 = vpop.f32.mrb[0].mxu0
        %v910 = vadd.f32 0.0, %v909
        %v911 = vpop.f32.mrb[0].mxu0
        %v912 = vpop.f32.mrb[0].mxu0
        %v913 = vadd.f32 0.0, %v912
        %v914 = vpop.f32.mrb[0].mxu0
        %915 = vdwg.mxu0
        %v948 = vunpack.c.l.b16 %v216
        %v949 = vunpack.c.l.b16 %v217
        %v950 = vunpack.c.l.b16 %v218
        %v951 = vunpack.c.l.b16 %v219
        %v952 = vunpack.c.l.b16 %v220
        %v953 = vunpack.c.l.b16 %v221
        %v954 = vunpack.c.l.b16 %v222
        %v955 = vunpack.c.l.b16 %v223
        %v956 = vunpack.c.l.b16 %v224
        %v957 = vunpack.c.l.b16 %v225
        %v958 = vunpack.c.l.b16 %v226
        %v959 = vunpack.c.l.b16 %v227
        %v960 = vunpack.c.l.b16 %v228
        %v961 = vunpack.c.l.b16 %v229
        %v962 = vunpack.c.l.b16 %v230
        %v963 = vunpack.c.l.b16 %v231
        %v964 = vunpack.c.l.b16 %v232
        %v965 = vunpack.c.l.b16 %v233
        %v966 = vunpack.c.l.b16 %v234
        %v967 = vunpack.c.l.b16 %v235
        %v968 = vunpack.c.l.b16 %v236
        %v969 = vunpack.c.l.b16 %v237
        %v970 = vunpack.c.l.b16 %v238
        %v971 = vunpack.c.l.b16 %v239
        %v972 = vunpack.c.l.b16 %v240
        %v973 = vunpack.c.l.b16 %v241
        %v974 = vunpack.c.l.b16 %v242
        %v975 = vunpack.c.l.b16 %v243
        %v976 = vunpack.c.l.b16 %v244
        %v977 = vunpack.c.l.b16 %v245
        %v978 = vunpack.c.l.b16 %v246
        %v979 = vunpack.c.l.b16 %v247
        %v980 = vpack.c.b16 %v949, %v948
        %v981 = vpack.c.b16 %v951, %v950
        %v982 = vpack.c.b16 %v953, %v952
        %v983 = vpack.c.b16 %v955, %v954
        %v984 = vpack.c.b16 %v957, %v956
        %v985 = vpack.c.b16 %v959, %v958
        %v986 = vpack.c.b16 %v961, %v960
        %v987 = vpack.c.b16 %v963, %v962
        %v988 = vpack.c.b16 %v965, %v964
        %v989 = vpack.c.b16 %v967, %v966
        %v990 = vpack.c.b16 %v969, %v968
        %v991 = vpack.c.b16 %v971, %v970
        %v992 = vpack.c.b16 %v973, %v972
        %v993 = vpack.c.b16 %v975, %v974
        %v994 = vpack.c.b16 %v977, %v976
        %v995 = vpack.c.b16 %v979, %v978
        %v997 = vsel %vm702, %v980, 0
        %v1000 = vsel %vm702, %v981, 0
        %v1003 = vsel %vm702, %v982, 0
        %v1006 = vsel %vm702, %v983, 0
        %v1009 = vsel %vm702, %v984, 0
        %v1012 = vsel %vm702, %v985, 0
        %v1015 = vsel %vm702, %v986, 0
        %v1018 = vsel %vm702, %v987, 0
        %v1021 = vsel %vm702, %v988, 0
        %v1024 = vsel %vm702, %v989, 0
        %v1027 = vsel %vm702, %v990, 0
        %v1030 = vsel %vm702, %v991, 0
        %v1033 = vsel %vm702, %v992, 0
        %v1036 = vsel %vm702, %v993, 0
        %v1039 = vsel %vm702, %v994, 0
        %v1042 = vsel %vm702, %v995, 0
        %v1045 = vsel %vm751, %v248, 0
        %1047 = vmatprep.subr.bf16.mxu0 0
        %1048 = vmatpush1.bf16.msra.mxu0 %v1045
        %1049 = vmatprep.subr.bf16.mxu0 0
        %1050 = vmatpush1.bf16.msra.mxu0 0
        %1051 = vmatprep.subr.bf16.mxu0 0
        %1052 = vmatpush1.bf16.msra.mxu0 0
        %1053 = vmatprep.subr.bf16.mxu0 0
        %1054 = vmatpush1.bf16.msra.mxu0 0
        %1055 = vmatprep.subr.bf16.mxu0 0
        %1056 = vmatpush1.bf16.msra.mxu0 0
        %1057 = vmatprep.subr.bf16.mxu0 0
        %1058 = vmatpush1.bf16.msra.mxu0 0
        %1059 = vmatprep.subr.bf16.mxu0 0
        %1060 = vmatpush1.bf16.msra.mxu0 0
        %1061 = vmatprep.subr.bf16.mxu0 0
        %1062 = vmatpush1.bf16.msra.mxu0 0
        %1063 = vmatprep.subr.bf16.mxu0 0
        %1064 = vmatpush1.bf16.msra.mxu0 0
        %1065 = vmatprep.subr.bf16.mxu0 0
        %1066 = vmatpush1.bf16.msra.mxu0 0
        %1067 = vmatprep.subr.bf16.mxu0 0
        %1068 = vmatpush1.bf16.msra.mxu0 0
        %1069 = vmatprep.subr.bf16.mxu0 0
        %1070 = vmatpush1.bf16.msra.mxu0 0
        %1071 = vmatprep.subr.bf16.mxu0 0
        %1072 = vmatpush1.bf16.msra.mxu0 0
        %1073 = vmatprep.subr.bf16.mxu0 0
        %1074 = vmatpush1.bf16.msra.mxu0 0
        %1075 = vmatprep.subr.bf16.mxu0 0
        %1076 = vmatpush1.bf16.msra.mxu0 0
        %1077 = vmatprep.subr.bf16.mxu0 0
        %1078 = vmatpush1.bf16.msra.mxu0 0
        %1079 = vmatprep.mubr.bf16.mxu0 0
        %1080 = vmatmul.mubr.bf16.gmra.mrb[0].mxu0 %v997
        %v1081 = vpop.f32.mrb[0].mxu0
        %v1082 = vadd.f32 %v790, %v1081
        %v1083 = vpop.f32.mrb[0].mxu0
        %v1084 = vpop.f32.mrb[0].mxu0
        %v1085 = vadd.f32 %v793, %v1084
        %v1086 = vpop.f32.mrb[0].mxu0
        %1087 = vmatprep.mubr.bf16.mxu0 0
        %1088 = vmatmul.mubr.bf16.gmra.mrb[0].mxu0 %v1000
        %v1089 = vpop.f32.mrb[0].mxu0
        %v1090 = vadd.f32 %v798, %v1089
        %v1091 = vpop.f32.mrb[0].mxu0
        %v1092 = vpop.f32.mrb[0].mxu0
        %v1093 = vadd.f32 %v801, %v1092
        %v1094 = vpop.f32.mrb[0].mxu0
        %1095 = vmatprep.mubr.bf16.mxu0 0
        %1096 = vmatmul.mubr.bf16.gmra.mrb[0].mxu0 %v1003
        %v1097 = vpop.f32.mrb[0].mxu0
        %v1098 = vadd.f32 %v806, %v1097
        %v1099 = vpop.f32.mrb[0].mxu0
        %v1100 = vpop.f32.mrb[0].mxu0
        %v1101 = vadd.f32 %v809, %v1100
        %v1102 = vpop.f32.mrb[0].mxu0
        %1103 = vmatprep.mubr.bf16.mxu0 0
        %1104 = vmatmul.mubr.bf16.gmra.mrb[0].mxu0 %v1006
        %v1105 = vpop.f32.mrb[0].mxu0
        %v1106 = vadd.f32 %v814, %v1105
        %v1107 = vpop.f32.mrb[0].mxu0
        %v1108 = vpop.f32.mrb[0].mxu0
        %v1109 = vadd.f32 %v817, %v1108
        %v1110 = vpop.f32.mrb[0].mxu0
        %1111 = vmatprep.mubr.bf16.mxu0 0
        %1112 = vmatmul.mubr.bf16.gmra.mrb[0].mxu0 %v1009
        %v1113 = vpop.f32.mrb[0].mxu0
        %v1114 = vadd.f32 %v822, %v1113
        %v1115 = vpop.f32.mrb[0].mxu0
        %v1116 = vpop.f32.mrb[0].mxu0
        %v1117 = vadd.f32 %v825, %v1116
        %v1118 = vpop.f32.mrb[0].mxu0
        %1119 = vmatprep.mubr.bf16.mxu0 0
        %1120 = vmatmul.mubr.bf16.gmra.mrb[0].mxu0 %v1012
        %v1121 = vpop.f32.mrb[0].mxu0
        %v1122 = vadd.f32 %v830, %v1121
        %v1123 = vpop.f32.mrb[0].mxu0
        %v1124 = vpop.f32.mrb[0].mxu0
        %v1125 = vadd.f32 %v833, %v1124
        %v1126 = vpop.f32.mrb[0].mxu0
        %1127 = vmatprep.mubr.bf16.mxu0 0
        %1128 = vmatmul.mubr.bf16.gmra.mrb[0].mxu0 %v1015
        %v1129 = vpop.f32.mrb[0].mxu0
        %v1130 = vadd.f32 %v838, %v1129
        %v1131 = vpop.f32.mrb[0].mxu0
        %v1132 = vpop.f32.mrb[0].mxu0
        %v1133 = vadd.f32 %v841, %v1132
        %v1134 = vpop.f32.mrb[0].mxu0
        %1135 = vmatprep.mubr.bf16.mxu0 0
        %1136 = vmatmul.mubr.bf16.gmra.mrb[0].mxu0 %v1018
        %v1137 = vpop.f32.mrb[0].mxu0
        %v1138 = vadd.f32 %v846, %v1137
        %v1139 = vpop.f32.mrb[0].mxu0
        %v1140 = vpop.f32.mrb[0].mxu0
        %v1141 = vadd.f32 %v849, %v1140
        %v1142 = vpop.f32.mrb[0].mxu0
        %1143 = vmatprep.mubr.bf16.mxu0 0
        %1144 = vmatmul.mubr.bf16.gmra.mrb[0].mxu0 %v1021
        %v1145 = vpop.f32.mrb[0].mxu0
        %v1146 = vadd.f32 %v854, %v1145
        %v1147 = vpop.f32.mrb[0].mxu0
        %v1148 = vpop.f32.mrb[0].mxu0
        %v1149 = vadd.f32 %v857, %v1148
        %v1150 = vpop.f32.mrb[0].mxu0
        %1151 = vmatprep.mubr.bf16.mxu0 0
        %1152 = vmatmul.mubr.bf16.gmra.mrb[0].mxu0 %v1024
        %v1153 = vpop.f32.mrb[0].mxu0
        %v1154 = vadd.f32 %v862, %v1153
        %v1155 = vpop.f32.mrb[0].mxu0
        %v1156 = vpop.f32.mrb[0].mxu0
        %v1157 = vadd.f32 %v865, %v1156
        %v1158 = vpop.f32.mrb[0].mxu0
        %1159 = vmatprep.mubr.bf16.mxu0 0
        %1160 = vmatmul.mubr.bf16.gmra.mrb[0].mxu0 %v1027
        %v1161 = vpop.f32.mrb[0].mxu0
        %v1162 = vadd.f32 %v870, %v1161
        %v1163 = vpop.f32.mrb[0].mxu0
        %v1164 = vpop.f32.mrb[0].mxu0
        %v1165 = vadd.f32 %v873, %v1164
        %v1166 = vpop.f32.mrb[0].mxu0
        %1167 = vmatprep.mubr.bf16.mxu0 0
        %1168 = vmatmul.mubr.bf16.gmra.mrb[0].mxu0 %v1030
        %v1169 = vpop.f32.mrb[0].mxu0
        %v1170 = vadd.f32 %v878, %v1169
        %v1171 = vpop.f32.mrb[0].mxu0
        %v1172 = vpop.f32.mrb[0].mxu0
        %v1173 = vadd.f32 %v881, %v1172
        %v1174 = vpop.f32.mrb[0].mxu0
        %1175 = vmatprep.mubr.bf16.mxu0 0
        %1176 = vmatmul.mubr.bf16.gmra.mrb[0].mxu0 %v1033
        %v1177 = vpop.f32.mrb[0].mxu0
        %v1178 = vadd.f32 %v886, %v1177
        %v1179 = vpop.f32.mrb[0].mxu0
        %v1180 = vpop.f32.mrb[0].mxu0
        %v1181 = vadd.f32 %v889, %v1180
        %v1182 = vpop.f32.mrb[0].mxu0
        %1183 = vmatprep.mubr.bf16.mxu0 0
        %1184 = vmatmul.mubr.bf16.gmra.mrb[0].mxu0 %v1036
        %v1185 = vpop.f32.mrb[0].mxu0
        %v1186 = vadd.f32 %v894, %v1185
        %v1187 = vpop.f32.mrb[0].mxu0
        %v1188 = vpop.f32.mrb[0].mxu0
        %v1189 = vadd.f32 %v897, %v1188
        %v1190 = vpop.f32.mrb[0].mxu0
        %1191 = vmatprep.mubr.bf16.mxu0 0
        %1192 = vmatmul.mubr.bf16.gmra.mrb[0].mxu0 %v1039
        %v1193 = vpop.f32.mrb[0].mxu0
        %v1194 = vadd.f32 %v902, %v1193
        %v1195 = vpop.f32.mrb[0].mxu0
        %v1196 = vpop.f32.mrb[0].mxu0
        %v1197 = vadd.f32 %v905, %v1196
        %v1198 = vpop.f32.mrb[0].mxu0
        %1199 = vmatprep.mubr.bf16.mxu0 0
        %1200 = vmatmul.mubr.bf16.gmra.mrb[0].mxu0 %v1042
        %v1201 = vpop.f32.mrb[0].mxu0
        %v1202 = vadd.f32 %v910, %v1201
        %v1203 = vpop.f32.mrb[0].mxu0
        %v1204 = vpop.f32.mrb[0].mxu0
        %v1205 = vadd.f32 %v913, %v1204
        %v1206 = vpop.f32.mrb[0].mxu0
        %1207 = vdwg.mxu0
        %v1208 = vld [vmem:[%s215] sm:$0xe]
        %v1209 = vld [vmem:[%s215 + $0xc] sm:$0xe]
        %v1210 = vld [vmem:[%s215 + $0x18] sm:$0xe]
        %v1211 = vld [vmem:[%s215 + $0x24] sm:$0xe]
        %v1212 = vld [vmem:[%s215 + $0x30] sm:$0xe]
        %v1213 = vld [vmem:[%s215 + $0x3c] sm:$0xe]
        %v1214 = vld [vmem:[%s215 + $0x48] sm:$0xe]
        %v1215 = vld [vmem:[%s215 + $0x54] sm:$0xe]
        %v1216 = vld [vmem:[%s215 + $0x60] sm:$0xe]
        %v1217 = vld [vmem:[%s215 + $0x6c] sm:$0xe]
        %v1218 = vld [vmem:[%s215 + $0x78] sm:$0xe]
        %v1219 = vld [vmem:[%s215 + $0x84] sm:$0xe]
        %v1220 = vld [vmem:[%s215 + $0x90] sm:$0xe]
        %v1221 = vld [vmem:[%s215 + $0x9c] sm:$0xe]
        %v1222 = vld [vmem:[%s215 + $0xa8] sm:$0xe]
        %v1223 = vld [vmem:[%s215 + $0xb4] sm:$0xe]
        %vm1256 = vcmask 1042432
        %vm1257 = vcmask 1046532
        %vm1258 = vmor %vm1256, %vm1257
        %v1259 = vrot.slane %v1208, 5
        %v1260 = vrot.slane %v1259, 4
        %v1261 = vrot.slane %v217, 5
        %v1262 = vsel %vm1258, %v1260, %v1261
        %v1263 = vrot.slane %v1261, 4
        %v1264 = vrot.slane %v249, 5
        %v1265 = vsel %vm1258, %v1263, %v1264
        %v1266 = vrot.slane %v1209, 5
        %v1267 = vrot.slane %v1266, 4
        %v1268 = vrot.slane %v219, 5
        %v1269 = vsel %vm1258, %v1267, %v1268
        %v1270 = vrot.slane %v1268, 4
        %v1271 = vrot.slane %v250, 5
        %v1272 = vsel %vm1258, %v1270, %v1271
        %v1273 = vrot.slane %v1210, 5
        %v1274 = vrot.slane %v1273, 4
        %v1275 = vrot.slane %v221, 5
        %v1276 = vsel %vm1258, %v1274, %v1275
        %v1277 = vrot.slane %v1275, 4
        %v1278 = vrot.slane %v251, 5
        %v1279 = vsel %vm1258, %v1277, %v1278
        %v1280 = vrot.slane %v1211, 5
        %v1281 = vrot.slane %v1280, 4
        %v1282 = vrot.slane %v223, 5
        %v1283 = vsel %vm1258, %v1281, %v1282
        %v1284 = vrot.slane %v1282, 4
        %v1285 = vrot.slane %v252, 5
        %v1286 = vsel %vm1258, %v1284, %v1285
        %v1287 = vrot.slane %v1212, 5
        %v1288 = vrot.slane %v1287, 4
        %v1289 = vrot.slane %v225, 5
        %v1290 = vsel %vm1258, %v1288, %v1289
        %v1291 = vrot.slane %v1289, 4
        %v1292 = vrot.slane %v253, 5
        %v1293 = vsel %vm1258, %v1291, %v1292
        %v1294 = vrot.slane %v1213, 5
        %v1295 = vrot.slane %v1294, 4
        %v1296 = vrot.slane %v227, 5
        %v1297 = vsel %vm1258, %v1295, %v1296
        %v1298 = vrot.slane %v1296, 4
        %v1299 = vrot.slane %v254, 5
        %v1300 = vsel %vm1258, %v1298, %v1299
        %v1301 = vrot.slane %v1214, 5
        %v1302 = vrot.slane %v1301, 4
        %v1303 = vrot.slane %v229, 5
        %v1304 = vsel %vm1258, %v1302, %v1303
        %v1305 = vrot.slane %v1303, 4
        %v1306 = vrot.slane %v255, 5
        %v1307 = vsel %vm1258, %v1305, %v1306
        %v1308 = vrot.slane %v1215, 5
        %v1309 = vrot.slane %v1308, 4
        %v1310 = vrot.slane %v231, 5
        %v1311 = vsel %vm1258, %v1309, %v1310
        %v1312 = vrot.slane %v1310, 4
        %v1313 = vrot.slane %v256, 5
        %v1314 = vsel %vm1258, %v1312, %v1313
        %v1315 = vrot.slane %v1216, 5
        %v1316 = vrot.slane %v1315, 4
        %v1317 = vrot.slane %v233, 5
        %v1318 = vsel %vm1258, %v1316, %v1317
        %v1319 = vrot.slane %v1317, 4
        %v1320 = vrot.slane %v257, 5
        %v1321 = vsel %vm1258, %v1319, %v1320
        %v1322 = vrot.slane %v1217, 5
        %v1323 = vrot.slane %v1322, 4
        %v1324 = vrot.slane %v235, 5
        %v1325 = vsel %vm1258, %v1323, %v1324
        %v1326 = vrot.slane %v1324, 4
        %v1327 = vrot.slane %v258, 5
        %v1328 = vsel %vm1258, %v1326, %v1327
        %v1329 = vrot.slane %v1218, 5
        %v1330 = vrot.slane %v1329, 4
        %v1331 = vrot.slane %v237, 5
        %v1332 = vsel %vm1258, %v1330, %v1331
        %v1333 = vrot.slane %v1331, 4
        %v1334 = vrot.slane %v259, 5
        %v1335 = vsel %vm1258, %v1333, %v1334
        %v1336 = vrot.slane %v1219, 5
        %v1337 = vrot.slane %v1336, 4
        %v1338 = vrot.slane %v239, 5
        %v1339 = vsel %vm1258, %v1337, %v1338
        %v1340 = vrot.slane %v1338, 4
        %v1341 = vrot.slane %v260, 5
        %v1342 = vsel %vm1258, %v1340, %v1341
        %v1343 = vrot.slane %v1220, 5
        %v1344 = vrot.slane %v1343, 4
        %v1345 = vrot.slane %v241, 5
        %v1346 = vsel %vm1258, %v1344, %v1345
        %v1347 = vrot.slane %v1345, 4
        %v1348 = vrot.slane %v261, 5
        %v1349 = vsel %vm1258, %v1347, %v1348
        %v1350 = vrot.slane %v1221, 5
        %v1351 = vrot.slane %v1350, 4
        %v1352 = vrot.slane %v243, 5
        %v1353 = vsel %vm1258, %v1351, %v1352
        %v1354 = vrot.slane %v1352, 4
        %v1355 = vrot.slane %v262, 5
        %v1356 = vsel %vm1258, %v1354, %v1355
        %v1357 = vrot.slane %v1222, 5
        %v1358 = vrot.slane %v1357, 4
        %v1359 = vrot.slane %v245, 5
        %v1360 = vsel %vm1258, %v1358, %v1359
        %v1361 = vrot.slane %v1359, 4
        %v1362 = vrot.slane %v263, 5
        %v1363 = vsel %vm1258, %v1361, %v1362
        %v1364 = vrot.slane %v1223, 5
        %v1365 = vrot.slane %v1364, 4
        %v1366 = vrot.slane %v247, 5
        %v1367 = vsel %vm1258, %v1365, %v1366
        %v1368 = vrot.slane %v1366, 4
        %v1369 = vrot.slane %v264, 5
        %v1370 = vsel %vm1258, %v1368, %v1369
        %s1371 = scalar_lea.vmem %s1, 4
        %v1372 = vld [vmem:[%s1371] sm:$0x3]
        %v1373 = vunpack.c.l.b16 %v1262
        %v1374 = vunpack.c.l.b16 %v1265
        %v1375 = vunpack.c.l.b16 %v1269
        %v1376 = vunpack.c.l.b16 %v1272
        %v1377 = vunpack.c.l.b16 %v1276
        %v1378 = vunpack.c.l.b16 %v1279
        %v1379 = vunpack.c.l.b16 %v1283
        %v1380 = vunpack.c.l.b16 %v1286
        %v1381 = vunpack.c.l.b16 %v1290
        %v1382 = vunpack.c.l.b16 %v1293
        %v1383 = vunpack.c.l.b16 %v1297
        %v1384 = vunpack.c.l.b16 %v1300
        %v1385 = vunpack.c.l.b16 %v1304
        %v1386 = vunpack.c.l.b16 %v1307
        %v1387 = vunpack.c.l.b16 %v1311
        %v1388 = vunpack.c.l.b16 %v1314
        %v1389 = vunpack.c.l.b16 %v1318
        %v1390 = vunpack.c.l.b16 %v1321
        %v1391 = vunpack.c.l.b16 %v1325
        %v1392 = vunpack.c.l.b16 %v1328
        %v1393 = vunpack.c.l.b16 %v1332
        %v1394 = vunpack.c.l.b16 %v1335
        %v1395 = vunpack.c.l.b16 %v1339
        %v1396 = vunpack.c.l.b16 %v1342
        %v1397 = vunpack.c.l.b16 %v1346
        %v1398 = vunpack.c.l.b16 %v1349
        %v1399 = vunpack.c.l.b16 %v1353
        %v1400 = vunpack.c.l.b16 %v1356
        %v1401 = vunpack.c.l.b16 %v1360
        %v1402 = vunpack.c.l.b16 %v1363
        %v1403 = vunpack.c.l.b16 %v1367
        %v1404 = vunpack.c.l.b16 %v1370
        %v1405 = vpack.c.b16 %v1374, %v1373
        %v1406 = vpack.c.b16 %v1376, %v1375
        %v1407 = vpack.c.b16 %v1378, %v1377
        %v1408 = vpack.c.b16 %v1380, %v1379
        %v1409 = vpack.c.b16 %v1382, %v1381
        %v1410 = vpack.c.b16 %v1384, %v1383
        %v1411 = vpack.c.b16 %v1386, %v1385
        %v1412 = vpack.c.b16 %v1388, %v1387
        %v1413 = vpack.c.b16 %v1390, %v1389
        %v1414 = vpack.c.b16 %v1392, %v1391
        %v1415 = vpack.c.b16 %v1394, %v1393
        %v1416 = vpack.c.b16 %v1396, %v1395
        %v1417 = vpack.c.b16 %v1398, %v1397
        %v1418 = vpack.c.b16 %v1400, %v1399
        %v1419 = vpack.c.b16 %v1402, %v1401
        %v1420 = vpack.c.b16 %v1404, %v1403
        %v1422 = vsel %vm702, %v1405, 0
        %v1425 = vsel %vm702, %v1406, 0
        %v1428 = vsel %vm702, %v1407, 0
        %v1431 = vsel %vm702, %v1408, 0
        %v1434 = vsel %vm702, %v1409, 0
        %v1437 = vsel %vm702, %v1410, 0
        %v1440 = vsel %vm702, %v1411, 0
        %v1443 = vsel %vm702, %v1412, 0
        %v1446 = vsel %vm702, %v1413, 0
        %v1449 = vsel %vm702, %v1414, 0
        %v1452 = vsel %vm702, %v1415, 0
        %v1455 = vsel %vm702, %v1416, 0
        %v1458 = vsel %vm702, %v1417, 0
        %v1461 = vsel %vm702, %v1418, 0
        %v1464 = vsel %vm702, %v1419, 0
        %v1467 = vsel %vm702, %v1420, 0
        %v1470 = vsel %vm751, %v1372, 0
        %1472 = vmatprep.subr.bf16.mxu0 0
        %1473 = vmatpush1.bf16.msra.mxu0 %v1470
        %1474 = vmatprep.subr.bf16.mxu0 0
        %1475 = vmatpush1.bf16.msra.mxu0 0
        %1476 = vmatprep.subr.bf16.mxu0 0
        %1477 = vmatpush1.bf16.msra.mxu0 0
        %1478 = vmatprep.subr.bf16.mxu0 0
        %1479 = vmatpush1.bf16.msra.mxu0 0
        %1480 = vmatprep.subr.bf16.mxu0 0
        %1481 = vmatpush1.bf16.msra.mxu0 0
        %1482 = vmatprep.subr.bf16.mxu0 0
        %1483 = vmatpush1.bf16.msra.mxu0 0
        %1484 = vmatprep.subr.bf16.mxu0 0
        %1485 = vmatpush1.bf16.msra.mxu0 0
        %1486 = vmatprep.subr.bf16.mxu0 0
        %1487 = vmatpush1.bf16.msra.mxu0 0
        %1488 = vmatprep.subr.bf16.mxu0 0
        %1489 = vmatpush1.bf16.msra.mxu0 0
        %1490 = vmatprep.subr.bf16.mxu0 0
        %1491 = vmatpush1.bf16.msra.mxu0 0
        %1492 = vmatprep.subr.bf16.mxu0 0
        %1493 = vmatpush1.bf16.msra.mxu0 0
        %1494 = vmatprep.subr.bf16.mxu0 0
        %1495 = vmatpush1.bf16.msra.mxu0 0
        %1496 = vmatprep.subr.bf16.mxu0 0
        %1497 = vmatpush1.bf16.msra.mxu0 0
        %1498 = vmatprep.subr.bf16.mxu0 0
        %1499 = vmatpush1.bf16.msra.mxu0 0
        %1500 = vmatprep.subr.bf16.mxu0 0
        %1501 = vmatpush1.bf16.msra.mxu0 0
        %1502 = vmatprep.subr.bf16.mxu0 0
        %1503 = vmatpush1.bf16.msra.mxu0 0
        %1504 = vmatprep.mubr.bf16.mxu0 0
        %1505 = vmatmul.mubr.bf16.gmra.mrb[0].mxu0 %v1422
        %v1506 = vpop.f32.mrb[0].mxu0
        %v1507 = vadd.f32 0.0, %v1506
        %v1508 = vpop.f32.mrb[0].mxu0
        %v1509 = vpop.f32.mrb[0].mxu0
        %v1510 = vadd.f32 0.0, %v1509
        %v1511 = vpop.f32.mrb[0].mxu0
        %1512 = vmatprep.mubr.bf16.mxu0 0
        %1513 = vmatmul.mubr.bf16.gmra.mrb[0].mxu0 %v1425
        %v1514 = vpop.f32.mrb[0].mxu0
        %v1515 = vadd.f32 0.0, %v1514
        %v1516 = vpop.f32.mrb[0].mxu0
        %v1517 = vpop.f32.mrb[0].mxu0
        %v1518 = vadd.f32 0.0, %v1517
        %v1519 = vpop.f32.mrb[0].mxu0
        %1520 = vmatprep.mubr.bf16.mxu0 0
        %1521 = vmatmul.mubr.bf16.gmra.mrb[0].mxu0 %v1428
        %v1522 = vpop.f32.mrb[0].mxu0
        %v1523 = vadd.f32 0.0, %v1522
        %v1524 = vpop.f32.mrb[0].mxu0
        %v1525 = vpop.f32.mrb[0].mxu0
        %v1526 = vadd.f32 0.0, %v1525
        %v1527 = vpop.f32.mrb[0].mxu0
        %1528 = vmatprep.mubr.bf16.mxu0 0
        %1529 = vmatmul.mubr.bf16.gmra.mrb[0].mxu0 %v1431
        %v1530 = vpop.f32.mrb[0].mxu0
        %v1531 = vadd.f32 0.0, %v1530
        %v1532 = vpop.f32.mrb[0].mxu0
        %v1533 = vpop.f32.mrb[0].mxu0
        %v1534 = vadd.f32 0.0, %v1533
        %v1535 = vpop.f32.mrb[0].mxu0
        %1536 = vmatprep.mubr.bf16.mxu0 0
        %1537 = vmatmul.mubr.bf16.gmra.mrb[0].mxu0 %v1434
        %v1538 = vpop.f32.mrb[0].mxu0
        %v1539 = vadd.f32 0.0, %v1538
        %v1540 = vpop.f32.mrb[0].mxu0
        %v1541 = vpop.f32.mrb[0].mxu0
        %v1542 = vadd.f32 0.0, %v1541
        %v1543 = vpop.f32.mrb[0].mxu0
        %1544 = vmatprep.mubr.bf16.mxu0 0
        %1545 = vmatmul.mubr.bf16.gmra.mrb[0].mxu0 %v1437
        %v1546 = vpop.f32.mrb[0].mxu0
        %v1547 = vadd.f32 0.0, %v1546
        %v1548 = vpop.f32.mrb[0].mxu0
        %v1549 = vpop.f32.mrb[0].mxu0
        %v1550 = vadd.f32 0.0, %v1549
        %v1551 = vpop.f32.mrb[0].mxu0
        %1552 = vmatprep.mubr.bf16.mxu0 0
        %1553 = vmatmul.mubr.bf16.gmra.mrb[0].mxu0 %v1440
        %v1554 = vpop.f32.mrb[0].mxu0
        %v1555 = vadd.f32 0.0, %v1554
        %v1556 = vpop.f32.mrb[0].mxu0
        %v1557 = vpop.f32.mrb[0].mxu0
        %v1558 = vadd.f32 0.0, %v1557
        %v1559 = vpop.f32.mrb[0].mxu0
        %1560 = vmatprep.mubr.bf16.mxu0 0
        %1561 = vmatmul.mubr.bf16.gmra.mrb[0].mxu0 %v1443
        %v1562 = vpop.f32.mrb[0].mxu0
        %v1563 = vadd.f32 0.0, %v1562
        %v1564 = vpop.f32.mrb[0].mxu0
        %v1565 = vpop.f32.mrb[0].mxu0
        %v1566 = vadd.f32 0.0, %v1565
        %v1567 = vpop.f32.mrb[0].mxu0
        %1568 = vmatprep.mubr.bf16.mxu0 0
        %1569 = vmatmul.mubr.bf16.gmra.mrb[0].mxu0 %v1446
        %v1570 = vpop.f32.mrb[0].mxu0
        %v1571 = vadd.f32 0.0, %v1570
        %v1572 = vpop.f32.mrb[0].mxu0
        %v1573 = vpop.f32.mrb[0].mxu0
        %v1574 = vadd.f32 0.0, %v1573
        %v1575 = vpop.f32.mrb[0].mxu0
        %1576 = vmatprep.mubr.bf16.mxu0 0
        %1577 = vmatmul.mubr.bf16.gmra.mrb[0].mxu0 %v1449
        %v1578 = vpop.f32.mrb[0].mxu0
        %v1579 = vadd.f32 0.0, %v1578
        %v1580 = vpop.f32.mrb[0].mxu0
        %v1581 = vpop.f32.mrb[0].mxu0
        %v1582 = vadd.f32 0.0, %v1581
        %v1583 = vpop.f32.mrb[0].mxu0
        %1584 = vmatprep.mubr.bf16.mxu0 0
        %1585 = vmatmul.mubr.bf16.gmra.mrb[0].mxu0 %v1452
        %v1586 = vpop.f32.mrb[0].mxu0
        %v1587 = vadd.f32 0.0, %v1586
        %v1588 = vpop.f32.mrb[0].mxu0
        %v1589 = vpop.f32.mrb[0].mxu0
        %v1590 = vadd.f32 0.0, %v1589
        %v1591 = vpop.f32.mrb[0].mxu0
        %1592 = vmatprep.mubr.bf16.mxu0 0
        %1593 = vmatmul.mubr.bf16.gmra.mrb[0].mxu0 %v1455
        %v1594 = vpop.f32.mrb[0].mxu0
        %v1595 = vadd.f32 0.0, %v1594
        %v1596 = vpop.f32.mrb[0].mxu0
        %v1597 = vpop.f32.mrb[0].mxu0
        %v1598 = vadd.f32 0.0, %v1597
        %v1599 = vpop.f32.mrb[0].mxu0
        %1600 = vmatprep.mubr.bf16.mxu0 0
        %1601 = vmatmul.mubr.bf16.gmra.mrb[0].mxu0 %v1458
        %v1602 = vpop.f32.mrb[0].mxu0
        %v1603 = vadd.f32 0.0, %v1602
        %v1604 = vpop.f32.mrb[0].mxu0
        %v1605 = vpop.f32.mrb[0].mxu0
        %v1606 = vadd.f32 0.0, %v1605
        %v1607 = vpop.f32.mrb[0].mxu0
        %1608 = vmatprep.mubr.bf16.mxu0 0
        %1609 = vmatmul.mubr.bf16.gmra.mrb[0].mxu0 %v1461
        %v1610 = vpop.f32.mrb[0].mxu0
        %v1611 = vadd.f32 0.0, %v1610
        %v1612 = vpop.f32.mrb[0].mxu0
        %v1613 = vpop.f32.mrb[0].mxu0
        %v1614 = vadd.f32 0.0, %v1613
        %v1615 = vpop.f32.mrb[0].mxu0
        %1616 = vmatprep.mubr.bf16.mxu0 0
        %1617 = vmatmul.mubr.bf16.gmra.mrb[0].mxu0 %v1464
        %v1618 = vpop.f32.mrb[0].mxu0
        %v1619 = vadd.f32 0.0, %v1618
        %v1620 = vpop.f32.mrb[0].mxu0
        %v1621 = vpop.f32.mrb[0].mxu0
        %v1622 = vadd.f32 0.0, %v1621
        %v1623 = vpop.f32.mrb[0].mxu0
        %1624 = vmatprep.mubr.bf16.mxu0 0
        %1625 = vmatmul.mubr.bf16.gmra.mrb[0].mxu0 %v1467
        %v1626 = vpop.f32.mrb[0].mxu0
        %v1627 = vadd.f32 0.0, %v1626
        %v1628 = vpop.f32.mrb[0].mxu0
        %v1629 = vpop.f32.mrb[0].mxu0
        %v1630 = vadd.f32 0.0, %v1629
        %v1631 = vpop.f32.mrb[0].mxu0
        %1632 = vdwg.mxu0
        %v1633 = vadd.f32 %v1082, %v1507
        %v1634 = vadd.f32 %v1085, %v1510
        %v1635 = vadd.f32 %v1090, %v1515
        %v1636 = vadd.f32 %v1093, %v1518
        %v1637 = vadd.f32 %v1098, %v1523
        %v1638 = vadd.f32 %v1101, %v1526
        %v1639 = vadd.f32 %v1106, %v1531
        %v1640 = vadd.f32 %v1109, %v1534
        %v1641 = vadd.f32 %v1114, %v1539
        %v1642 = vadd.f32 %v1117, %v1542
        %v1643 = vadd.f32 %v1122, %v1547
        %v1644 = vadd.f32 %v1125, %v1550
        %v1645 = vadd.f32 %v1130, %v1555
        %v1646 = vadd.f32 %v1133, %v1558
        %v1647 = vadd.f32 %v1138, %v1563
        %v1648 = vadd.f32 %v1141, %v1566
        %v1649 = vadd.f32 %v1146, %v1571
        %v1650 = vadd.f32 %v1149, %v1574
        %v1651 = vadd.f32 %v1154, %v1579
        %v1652 = vadd.f32 %v1157, %v1582
        %v1653 = vadd.f32 %v1162, %v1587
        %v1654 = vadd.f32 %v1165, %v1590
        %v1655 = vadd.f32 %v1170, %v1595
        %v1656 = vadd.f32 %v1173, %v1598
        %v1657 = vadd.f32 %v1178, %v1603
        %v1658 = vadd.f32 %v1181, %v1606
        %v1659 = vadd.f32 %v1186, %v1611
        %v1660 = vadd.f32 %v1189, %v1614
        %v1661 = vadd.f32 %v1194, %v1619
        %v1662 = vadd.f32 %v1197, %v1622
        %v1663 = vadd.f32 %v1202, %v1627
        %v1664 = vadd.f32 %v1205, %v1630
        %s1665 = sadd.s32 %s212, 1
        %s1666 = smul.u32 %s1665, 3
        %s1667 = smul.addr %s1666, 4
        %s1668 = scalar_lea.vmem %s209, %s1667
        %v1669 = vld [vmem:[%s1668] sm:$0xf]
        %v1670 = vld [vmem:[%s1668 + $0x4] sm:$0xf]
        %v1671 = vld [vmem:[%s1668 + $0xc] sm:$0xf]
        %v1672 = vld [vmem:[%s1668 + $0x10] sm:$0xf]
        %v1673 = vld [vmem:[%s1668 + $0x18] sm:$0xf]
        %v1674 = vld [vmem:[%s1668 + $0x1c] sm:$0xf]
        %v1675 = vld [vmem:[%s1668 + $0x24] sm:$0xf]
        %v1676 = vld [vmem:[%s1668 + $0x28] sm:$0xf]
        %v1677 = vld [vmem:[%s1668 + $0x30] sm:$0xf]
        %v1678 = vld [vmem:[%s1668 + $0x34] sm:$0xf]
        %v1679 = vld [vmem:[%s1668 + $0x3c] sm:$0xf]
        %v1680 = vld [vmem:[%s1668 + $0x40] sm:$0xf]
        %v1681 = vld [vmem:[%s1668 + $0x48] sm:$0xf]
        %v1682 = vld [vmem:[%s1668 + $0x4c] sm:$0xf]
        %v1683 = vld [vmem:[%s1668 + $0x54] sm:$0xf]
        %v1684 = vld [vmem:[%s1668 + $0x58] sm:$0xf]
        %v1685 = vld [vmem:[%s1668 + $0x60] sm:$0xf]
        %v1686 = vld [vmem:[%s1668 + $0x64] sm:$0xf]
        %v1687 = vld [vmem:[%s1668 + $0x6c] sm:$0xf]
        %v1688 = vld [vmem:[%s1668 + $0x70] sm:$0xf]
        %v1689 = vld [vmem:[%s1668 + $0x78] sm:$0xf]
        %v1690 = vld [vmem:[%s1668 + $0x7c] sm:$0xf]
        %v1691 = vld [vmem:[%s1668 + $0x84] sm:$0xf]
        %v1692 = vld [vmem:[%s1668 + $0x88] sm:$0xf]
        %v1693 = vld [vmem:[%s1668 + $0x90] sm:$0xf]
        %v1694 = vld [vmem:[%s1668 + $0x94] sm:$0xf]
        %v1695 = vld [vmem:[%s1668 + $0x9c] sm:$0xf]
        %v1696 = vld [vmem:[%s1668 + $0xa0] sm:$0xf]
        %v1697 = vld [vmem:[%s1668 + $0xa8] sm:$0xf]
        %v1698 = vld [vmem:[%s1668 + $0xac] sm:$0xf]
        %v1699 = vld [vmem:[%s1668 + $0xb4] sm:$0xf]
        %v1700 = vld [vmem:[%s1668 + $0xb8] sm:$0xf]
        %s1701 = scalar_lea.vmem %s1, 6
        %v1702 = vld [vmem:[%s1701] sm:$0x3]
        %v1735 = vunpack.c.l.b16 %v1669
        %v1736 = vunpack.c.l.b16 %v1670
        %v1737 = vunpack.c.l.b16 %v1671
        %v1738 = vunpack.c.l.b16 %v1672
        %v1739 = vunpack.c.l.b16 %v1673
        %v1740 = vunpack.c.l.b16 %v1674
        %v1741 = vunpack.c.l.b16 %v1675
        %v1742 = vunpack.c.l.b16 %v1676
        %v1743 = vunpack.c.l.b16 %v1677
        %v1744 = vunpack.c.l.b16 %v1678
        %v1745 = vunpack.c.l.b16 %v1679
        %v1746 = vunpack.c.l.b16 %v1680
        %v1747 = vunpack.c.l.b16 %v1681
        %v1748 = vunpack.c.l.b16 %v1682
        %v1749 = vunpack.c.l.b16 %v1683
        %v1750 = vunpack.c.l.b16 %v1684
        %v1751 = vunpack.c.l.b16 %v1685
        %v1752 = vunpack.c.l.b16 %v1686
        %v1753 = vunpack.c.l.b16 %v1687
        %v1754 = vunpack.c.l.b16 %v1688
        %v1755 = vunpack.c.l.b16 %v1689
        %v1756 = vunpack.c.l.b16 %v1690
        %v1757 = vunpack.c.l.b16 %v1691
        %v1758 = vunpack.c.l.b16 %v1692
        %v1759 = vunpack.c.l.b16 %v1693
        %v1760 = vunpack.c.l.b16 %v1694
        %v1761 = vunpack.c.l.b16 %v1695
        %v1762 = vunpack.c.l.b16 %v1696
        %v1763 = vunpack.c.l.b16 %v1697
        %v1764 = vunpack.c.l.b16 %v1698
        %v1765 = vunpack.c.l.b16 %v1699
        %v1766 = vunpack.c.l.b16 %v1700
        %v1767 = vpack.c.b16 %v1736, %v1735
        %v1768 = vpack.c.b16 %v1738, %v1737
        %v1769 = vpack.c.b16 %v1740, %v1739
        %v1770 = vpack.c.b16 %v1742, %v1741
        %v1771 = vpack.c.b16 %v1744, %v1743
        %v1772 = vpack.c.b16 %v1746, %v1745
        %v1773 = vpack.c.b16 %v1748, %v1747
        %v1774 = vpack.c.b16 %v1750, %v1749
        %v1775 = vpack.c.b16 %v1752, %v1751
        %v1776 = vpack.c.b16 %v1754, %v1753
        %v1777 = vpack.c.b16 %v1756, %v1755
        %v1778 = vpack.c.b16 %v1758, %v1757
        %v1779 = vpack.c.b16 %v1760, %v1759
        %v1780 = vpack.c.b16 %v1762, %v1761
        %v1781 = vpack.c.b16 %v1764, %v1763
        %v1782 = vpack.c.b16 %v1766, %v1765
        %v1784 = vsel %vm702, %v1767, 0
        %v1787 = vsel %vm702, %v1768, 0
        %v1790 = vsel %vm702, %v1769, 0
        %v1793 = vsel %vm702, %v1770, 0
        %v1796 = vsel %vm702, %v1771, 0
        %v1799 = vsel %vm702, %v1772, 0
        %v1802 = vsel %vm702, %v1773, 0
        %v1805 = vsel %vm702, %v1774, 0
        %v1808 = vsel %vm702, %v1775, 0
        %v1811 = vsel %vm702, %v1776, 0
        %v1814 = vsel %vm702, %v1777, 0
        %v1817 = vsel %vm702, %v1778, 0
        %v1820 = vsel %vm702, %v1779, 0
        %v1823 = vsel %vm702, %v1780, 0
        %v1826 = vsel %vm702, %v1781, 0
        %v1829 = vsel %vm702, %v1782, 0
        %v1832 = vsel %vm751, %v1702, 0
        %1834 = vmatprep.subr.bf16.mxu0 0
        %1835 = vmatpush1.bf16.msra.mxu0 %v1832
        %1836 = vmatprep.subr.bf16.mxu0 0
        %1837 = vmatpush1.bf16.msra.mxu0 0
        %1838 = vmatprep.subr.bf16.mxu0 0
        %1839 = vmatpush1.bf16.msra.mxu0 0
        %1840 = vmatprep.subr.bf16.mxu0 0
        %1841 = vmatpush1.bf16.msra.mxu0 0
        %1842 = vmatprep.subr.bf16.mxu0 0
        %1843 = vmatpush1.bf16.msra.mxu0 0
        %1844 = vmatprep.subr.bf16.mxu0 0
        %1845 = vmatpush1.bf16.msra.mxu0 0
        %1846 = vmatprep.subr.bf16.mxu0 0
        %1847 = vmatpush1.bf16.msra.mxu0 0
        %1848 = vmatprep.subr.bf16.mxu0 0
        %1849 = vmatpush1.bf16.msra.mxu0 0
        %1850 = vmatprep.subr.bf16.mxu0 0
        %1851 = vmatpush1.bf16.msra.mxu0 0
        %1852 = vmatprep.subr.bf16.mxu0 0
        %1853 = vmatpush1.bf16.msra.mxu0 0
        %1854 = vmatprep.subr.bf16.mxu0 0
        %1855 = vmatpush1.bf16.msra.mxu0 0
        %1856 = vmatprep.subr.bf16.mxu0 0
        %1857 = vmatpush1.bf16.msra.mxu0 0
        %1858 = vmatprep.subr.bf16.mxu0 0
        %1859 = vmatpush1.bf16.msra.mxu0 0
        %1860 = vmatprep.subr.bf16.mxu0 0
        %1861 = vmatpush1.bf16.msra.mxu0 0
        %1862 = vmatprep.subr.bf16.mxu0 0
        %1863 = vmatpush1.bf16.msra.mxu0 0
        %1864 = vmatprep.subr.bf16.mxu0 0
        %1865 = vmatpush1.bf16.msra.mxu0 0
        %1866 = vmatprep.mubr.bf16.mxu0 0
        %1867 = vmatmul.mubr.bf16.gmra.mrb[0].mxu0 %v1784
        %v1868 = vpop.f32.mrb[0].mxu0
        %v1869 = vadd.f32 0.0, %v1868
        %v1870 = vpop.f32.mrb[0].mxu0
        %v1871 = vpop.f32.mrb[0].mxu0
        %v1872 = vadd.f32 0.0, %v1871
        %v1873 = vpop.f32.mrb[0].mxu0
        %1874 = vmatprep.mubr.bf16.mxu0 0
        %1875 = vmatmul.mubr.bf16.gmra.mrb[0].mxu0 %v1787
        %v1876 = vpop.f32.mrb[0].mxu0
        %v1877 = vadd.f32 0.0, %v1876
        %v1878 = vpop.f32.mrb[0].mxu0
        %v1879 = vpop.f32.mrb[0].mxu0
        %v1880 = vadd.f32 0.0, %v1879
        %v1881 = vpop.f32.mrb[0].mxu0
        %1882 = vmatprep.mubr.bf16.mxu0 0
        %1883 = vmatmul.mubr.bf16.gmra.mrb[0].mxu0 %v1790
        %v1884 = vpop.f32.mrb[0].mxu0
        %v1885 = vadd.f32 0.0, %v1884
        %v1886 = vpop.f32.mrb[0].mxu0
        %v1887 = vpop.f32.mrb[0].mxu0
        %v1888 = vadd.f32 0.0, %v1887
        %v1889 = vpop.f32.mrb[0].mxu0
        %1890 = vmatprep.mubr.bf16.mxu0 0
        %1891 = vmatmul.mubr.bf16.gmra.mrb[0].mxu0 %v1793
        %v1892 = vpop.f32.mrb[0].mxu0
        %v1893 = vadd.f32 0.0, %v1892
        %v1894 = vpop.f32.mrb[0].mxu0
        %v1895 = vpop.f32.mrb[0].mxu0
        %v1896 = vadd.f32 0.0, %v1895
        %v1897 = vpop.f32.mrb[0].mxu0
        %1898 = vmatprep.mubr.bf16.mxu0 0
        %1899 = vmatmul.mubr.bf16.gmra.mrb[0].mxu0 %v1796
        %v1900 = vpop.f32.mrb[0].mxu0
        %v1901 = vadd.f32 0.0, %v1900
        %v1902 = vpop.f32.mrb[0].mxu0
        %v1903 = vpop.f32.mrb[0].mxu0
        %v1904 = vadd.f32 0.0, %v1903
        %v1905 = vpop.f32.mrb[0].mxu0
        %1906 = vmatprep.mubr.bf16.mxu0 0
        %1907 = vmatmul.mubr.bf16.gmra.mrb[0].mxu0 %v1799
        %v1908 = vpop.f32.mrb[0].mxu0
        %v1909 = vadd.f32 0.0, %v1908
        %v1910 = vpop.f32.mrb[0].mxu0
        %v1911 = vpop.f32.mrb[0].mxu0
        %v1912 = vadd.f32 0.0, %v1911
        %v1913 = vpop.f32.mrb[0].mxu0
        %1914 = vmatprep.mubr.bf16.mxu0 0
        %1915 = vmatmul.mubr.bf16.gmra.mrb[0].mxu0 %v1802
        %v1916 = vpop.f32.mrb[0].mxu0
        %v1917 = vadd.f32 0.0, %v1916
        %v1918 = vpop.f32.mrb[0].mxu0
        %v1919 = vpop.f32.mrb[0].mxu0
        %v1920 = vadd.f32 0.0, %v1919
        %v1921 = vpop.f32.mrb[0].mxu0
        %1922 = vmatprep.mubr.bf16.mxu0 0
        %1923 = vmatmul.mubr.bf16.gmra.mrb[0].mxu0 %v1805
        %v1924 = vpop.f32.mrb[0].mxu0
        %v1925 = vadd.f32 0.0, %v1924
        %v1926 = vpop.f32.mrb[0].mxu0
        %v1927 = vpop.f32.mrb[0].mxu0
        %v1928 = vadd.f32 0.0, %v1927
        %v1929 = vpop.f32.mrb[0].mxu0
        %1930 = vmatprep.mubr.bf16.mxu0 0
        %1931 = vmatmul.mubr.bf16.gmra.mrb[0].mxu0 %v1808
        %v1932 = vpop.f32.mrb[0].mxu0
        %v1933 = vadd.f32 0.0, %v1932
        %v1934 = vpop.f32.mrb[0].mxu0
        %v1935 = vpop.f32.mrb[0].mxu0
        %v1936 = vadd.f32 0.0, %v1935
        %v1937 = vpop.f32.mrb[0].mxu0
        %1938 = vmatprep.mubr.bf16.mxu0 0
        %1939 = vmatmul.mubr.bf16.gmra.mrb[0].mxu0 %v1811
        %v1940 = vpop.f32.mrb[0].mxu0
        %v1941 = vadd.f32 0.0, %v1940
        %v1942 = vpop.f32.mrb[0].mxu0
        %v1943 = vpop.f32.mrb[0].mxu0
        %v1944 = vadd.f32 0.0, %v1943
        %v1945 = vpop.f32.mrb[0].mxu0
        %1946 = vmatprep.mubr.bf16.mxu0 0
        %1947 = vmatmul.mubr.bf16.gmra.mrb[0].mxu0 %v1814
        %v1948 = vpop.f32.mrb[0].mxu0
        %v1949 = vadd.f32 0.0, %v1948
        %v1950 = vpop.f32.mrb[0].mxu0
        %v1951 = vpop.f32.mrb[0].mxu0
        %v1952 = vadd.f32 0.0, %v1951
        %v1953 = vpop.f32.mrb[0].mxu0
        %1954 = vmatprep.mubr.bf16.mxu0 0
        %1955 = vmatmul.mubr.bf16.gmra.mrb[0].mxu0 %v1817
        %v1956 = vpop.f32.mrb[0].mxu0
        %v1957 = vadd.f32 0.0, %v1956
        %v1958 = vpop.f32.mrb[0].mxu0
        %v1959 = vpop.f32.mrb[0].mxu0
        %v1960 = vadd.f32 0.0, %v1959
        %v1961 = vpop.f32.mrb[0].mxu0
        %1962 = vmatprep.mubr.bf16.mxu0 0
        %1963 = vmatmul.mubr.bf16.gmra.mrb[0].mxu0 %v1820
        %v1964 = vpop.f32.mrb[0].mxu0
        %v1965 = vadd.f32 0.0, %v1964
        %v1966 = vpop.f32.mrb[0].mxu0
        %v1967 = vpop.f32.mrb[0].mxu0
        %v1968 = vadd.f32 0.0, %v1967
        %v1969 = vpop.f32.mrb[0].mxu0
        %1970 = vmatprep.mubr.bf16.mxu0 0
        %1971 = vmatmul.mubr.bf16.gmra.mrb[0].mxu0 %v1823
        %v1972 = vpop.f32.mrb[0].mxu0
        %v1973 = vadd.f32 0.0, %v1972
        %v1974 = vpop.f32.mrb[0].mxu0
        %v1975 = vpop.f32.mrb[0].mxu0
        %v1976 = vadd.f32 0.0, %v1975
        %v1977 = vpop.f32.mrb[0].mxu0
        %1978 = vmatprep.mubr.bf16.mxu0 0
        %1979 = vmatmul.mubr.bf16.gmra.mrb[0].mxu0 %v1826
        %v1980 = vpop.f32.mrb[0].mxu0
        %v1981 = vadd.f32 0.0, %v1980
        %v1982 = vpop.f32.mrb[0].mxu0
        %v1983 = vpop.f32.mrb[0].mxu0
        %v1984 = vadd.f32 0.0, %v1983
        %v1985 = vpop.f32.mrb[0].mxu0
        %1986 = vmatprep.mubr.bf16.mxu0 0
        %1987 = vmatmul.mubr.bf16.gmra.mrb[0].mxu0 %v1829
        %v1988 = vpop.f32.mrb[0].mxu0
        %v1989 = vadd.f32 0.0, %v1988
        %v1990 = vpop.f32.mrb[0].mxu0
        %v1991 = vpop.f32.mrb[0].mxu0
        %v1992 = vadd.f32 0.0, %v1991
        %v1993 = vpop.f32.mrb[0].mxu0
        %1994 = vdwg.mxu0
        %v1995 = vadd.f32 %v1633, %v1869
        %v1996 = vadd.f32 %v1634, %v1872
        %v1997 = vadd.f32 %v1635, %v1877
        %v1998 = vadd.f32 %v1636, %v1880
        %v1999 = vadd.f32 %v1637, %v1885
        %v2000 = vadd.f32 %v1638, %v1888
        %v2001 = vadd.f32 %v1639, %v1893
        %v2002 = vadd.f32 %v1640, %v1896
        %v2003 = vadd.f32 %v1641, %v1901
        %v2004 = vadd.f32 %v1642, %v1904
        %v2005 = vadd.f32 %v1643, %v1909
        %v2006 = vadd.f32 %v1644, %v1912
        %v2007 = vadd.f32 %v1645, %v1917
        %v2008 = vadd.f32 %v1646, %v1920
        %v2009 = vadd.f32 %v1647, %v1925
        %v2010 = vadd.f32 %v1648, %v1928
        %v2011 = vadd.f32 %v1649, %v1933
        %v2012 = vadd.f32 %v1650, %v1936
        %v2013 = vadd.f32 %v1651, %v1941
        %v2014 = vadd.f32 %v1652, %v1944
        %v2015 = vadd.f32 %v1653, %v1949
        %v2016 = vadd.f32 %v1654, %v1952
        %v2017 = vadd.f32 %v1655, %v1957
        %v2018 = vadd.f32 %v1656, %v1960
        %v2019 = vadd.f32 %v1657, %v1965
        %v2020 = vadd.f32 %v1658, %v1968
        %v2021 = vadd.f32 %v1659, %v1973
        %v2022 = vadd.f32 %v1660, %v1976
        %v2023 = vadd.f32 %v1661, %v1981
        %v2024 = vadd.f32 %v1662, %v1984
        %v2025 = vadd.f32 %v1663, %v1989
        %v2026 = vadd.f32 %v1664, %v1992
        %v2027 = vld [vmem:[%s1668] sm:$0xf]
        %v2028 = vld [vmem:[%s1668 + $0x4] sm:$0xf]
        %v2029 = vld [vmem:[%s1668 + $0x8] sm:$0x1]
        %v2030 = vld [vmem:[%s1668 + $0xc] sm:$0xf]
        %v2031 = vld [vmem:[%s1668 + $0x10] sm:$0xf]
        %v2032 = vld [vmem:[%s1668 + $0x14] sm:$0x1]
        %v2033 = vld [vmem:[%s1668 + $0x18] sm:$0xf]
        %v2034 = vld [vmem:[%s1668 + $0x1c] sm:$0xf]
        %v2035 = vld [vmem:[%s1668 + $0x20] sm:$0x1]
        %v2036 = vld [vmem:[%s1668 + $0x24] sm:$0xf]
        %v2037 = vld [vmem:[%s1668 + $0x28] sm:$0xf]
        %v2038 = vld [vmem:[%s1668 + $0x2c] sm:$0x1]
        %v2039 = vld [vmem:[%s1668 + $0x30] sm:$0xf]
        %v2040 = vld [vmem:[%s1668 + $0x34] sm:$0xf]
        %v2041 = vld [vmem:[%s1668 + $0x38] sm:$0x1]
        %v2042 = vld [vmem:[%s1668 + $0x3c] sm:$0xf]
        %v2043 = vld [vmem:[%s1668 + $0x40] sm:$0xf]
        %v2044 = vld [vmem:[%s1668 + $0x44] sm:$0x1]
        %v2045 = vld [vmem:[%s1668 + $0x48] sm:$0xf]
        %v2046 = vld [vmem:[%s1668 + $0x4c] sm:$0xf]
        %v2047 = vld [vmem:[%s1668 + $0x50] sm:$0x1]
        %v2048 = vld [vmem:[%s1668 + $0x54] sm:$0xf]
        %v2049 = vld [vmem:[%s1668 + $0x58] sm:$0xf]
        %v2050 = vld [vmem:[%s1668 + $0x5c] sm:$0x1]
        %v2051 = vld [vmem:[%s1668 + $0x60] sm:$0xf]
        %v2052 = vld [vmem:[%s1668 + $0x64] sm:$0xf]
        %v2053 = vld [vmem:[%s1668 + $0x68] sm:$0x1]
        %v2054 = vld [vmem:[%s1668 + $0x6c] sm:$0xf]
        %v2055 = vld [vmem:[%s1668 + $0x70] sm:$0xf]
        %v2056 = vld [vmem:[%s1668 + $0x74] sm:$0x1]
        %v2057 = vld [vmem:[%s1668 + $0x78] sm:$0xf]
        %v2058 = vld [vmem:[%s1668 + $0x7c] sm:$0xf]
        %v2059 = vld [vmem:[%s1668 + $0x80] sm:$0x1]
        %v2060 = vld [vmem:[%s1668 + $0x84] sm:$0xf]
        %v2061 = vld [vmem:[%s1668 + $0x88] sm:$0xf]
        %v2062 = vld [vmem:[%s1668 + $0x8c] sm:$0x1]
        %v2063 = vld [vmem:[%s1668 + $0x90] sm:$0xf]
        %v2064 = vld [vmem:[%s1668 + $0x94] sm:$0xf]
        %v2065 = vld [vmem:[%s1668 + $0x98] sm:$0x1]
        %v2066 = vld [vmem:[%s1668 + $0x9c] sm:$0xf]
        %v2067 = vld [vmem:[%s1668 + $0xa0] sm:$0xf]
        %v2068 = vld [vmem:[%s1668 + $0xa4] sm:$0x1]
        %v2069 = vld [vmem:[%s1668 + $0xa8] sm:$0xf]
        %v2070 = vld [vmem:[%s1668 + $0xac] sm:$0xf]
        %v2071 = vld [vmem:[%s1668 + $0xb0] sm:$0x1]
        %v2072 = vld [vmem:[%s1668 + $0xb4] sm:$0xf]
        %v2073 = vld [vmem:[%s1668 + $0xb8] sm:$0xf]
        %v2074 = vld [vmem:[%s1668 + $0xbc] sm:$0x1]
        %v2076 = vshrl.u32 %v2027, 16
        %v2078 = vrot.slane %v2076, 4
        %v2079 = vshll.u32 %v2027, 16
        %v2081 = vrot.slane %v2079, 5
        %v2082 = vor.u32 %v2078, %v2081
        %v2083 = vrot.slane %v2082, 4
        %v2085 = vshll.u32 %v2028, 16
        %v2087 = vrot.slane %v2085, 5
        %v2088 = vsel %vm267, %v2083, %v2087
        %v2089 = vshrl.u32 %v2028, 16
        %v2091 = vrot.slane %v2089, 4
        %v2092 = vor.u32 %v2091, %v2087
        %v2093 = vrot.slane %v2092, 4
        %v2095 = vshll.u32 %v2029, 16
        %v2097 = vrot.slane %v2095, 5
        %v2098 = vsel %vm267, %v2093, %v2097
        %v2100 = vshrl.u32 %v2030, 16
        %v2102 = vrot.slane %v2100, 4
        %v2103 = vshll.u32 %v2030, 16
        %v2105 = vrot.slane %v2103, 5
        %v2106 = vor.u32 %v2102, %v2105
        %v2107 = vrot.slane %v2106, 4
        %v2109 = vshll.u32 %v2031, 16
        %v2111 = vrot.slane %v2109, 5
        %v2112 = vsel %vm267, %v2107, %v2111
        %v2113 = vshrl.u32 %v2031, 16
        %v2115 = vrot.slane %v2113, 4
        %v2116 = vor.u32 %v2115, %v2111
        %v2117 = vrot.slane %v2116, 4
        %v2119 = vshll.u32 %v2032, 16
        %v2121 = vrot.slane %v2119, 5
        %v2122 = vsel %vm267, %v2117, %v2121
        %v2124 = vshrl.u32 %v2033, 16
        %v2126 = vrot.slane %v2124, 4
        %v2127 = vshll.u32 %v2033, 16
        %v2129 = vrot.slane %v2127, 5
        %v2130 = vor.u32 %v2126, %v2129
        %v2131 = vrot.slane %v2130, 4
        %v2133 = vshll.u32 %v2034, 16
        %v2135 = vrot.slane %v2133, 5
        %v2136 = vsel %vm267, %v2131, %v2135
        %v2137 = vshrl.u32 %v2034, 16
        %v2139 = vrot.slane %v2137, 4
        %v2140 = vor.u32 %v2139, %v2135
        %v2141 = vrot.slane %v2140, 4
        %v2143 = vshll.u32 %v2035, 16
        %v2145 = vrot.slane %v2143, 5
        %v2146 = vsel %vm267, %v2141, %v2145
        %v2148 = vshrl.u32 %v2036, 16
        %v2150 = vrot.slane %v2148, 4
        %v2151 = vshll.u32 %v2036, 16
        %v2153 = vrot.slane %v2151, 5
        %v2154 = vor.u32 %v2150, %v2153
        %v2155 = vrot.slane %v2154, 4
        %v2157 = vshll.u32 %v2037, 16
        %v2159 = vrot.slane %v2157, 5
        %v2160 = vsel %vm267, %v2155, %v2159
        %v2161 = vshrl.u32 %v2037, 16
        %v2163 = vrot.slane %v2161, 4
        %v2164 = vor.u32 %v2163, %v2159
        %v2165 = vrot.slane %v2164, 4
        %v2167 = vshll.u32 %v2038, 16
        %v2169 = vrot.slane %v2167, 5
        %v2170 = vsel %vm267, %v2165, %v2169
        %v2172 = vshrl.u32 %v2039, 16
        %v2174 = vrot.slane %v2172, 4
        %v2175 = vshll.u32 %v2039, 16
        %v2177 = vrot.slane %v2175, 5
        %v2178 = vor.u32 %v2174, %v2177
        %v2179 = vrot.slane %v2178, 4
        %v2181 = vshll.u32 %v2040, 16
        %v2183 = vrot.slane %v2181, 5
        %v2184 = vsel %vm267, %v2179, %v2183
        %v2185 = vshrl.u32 %v2040, 16
        %v2187 = vrot.slane %v2185, 4
        %v2188 = vor.u32 %v2187, %v2183
        %v2189 = vrot.slane %v2188, 4
        %v2191 = vshll.u32 %v2041, 16
        %v2193 = vrot.slane %v2191, 5
        %v2194 = vsel %vm267, %v2189, %v2193
        %v2196 = vshrl.u32 %v2042, 16
        %v2198 = vrot.slane %v2196, 4
        %v2199 = vshll.u32 %v2042, 16
        %v2201 = vrot.slane %v2199, 5
        %v2202 = vor.u32 %v2198, %v2201
        %v2203 = vrot.slane %v2202, 4
        %v2205 = vshll.u32 %v2043, 16
        %v2207 = vrot.slane %v2205, 5
        %v2208 = vsel %vm267, %v2203, %v2207
        %v2209 = vshrl.u32 %v2043, 16
        %v2211 = vrot.slane %v2209, 4
        %v2212 = vor.u32 %v2211, %v2207
        %v2213 = vrot.slane %v2212, 4
        %v2215 = vshll.u32 %v2044, 16
        %v2217 = vrot.slane %v2215, 5
        %v2218 = vsel %vm267, %v2213, %v2217
        %v2220 = vshrl.u32 %v2045, 16
        %v2222 = vrot.slane %v2220, 4
        %v2223 = vshll.u32 %v2045, 16
        %v2225 = vrot.slane %v2223, 5
        %v2226 = vor.u32 %v2222, %v2225
        %v2227 = vrot.slane %v2226, 4
        %v2229 = vshll.u32 %v2046, 16
        %v2231 = vrot.slane %v2229, 5
        %v2232 = vsel %vm267, %v2227, %v2231
        %v2233 = vshrl.u32 %v2046, 16
        %v2235 = vrot.slane %v2233, 4
        %v2236 = vor.u32 %v2235, %v2231
        %v2237 = vrot.slane %v2236, 4
        %v2239 = vshll.u32 %v2047, 16
        %v2241 = vrot.slane %v2239, 5
        %v2242 = vsel %vm267, %v2237, %v2241
        %v2244 = vshrl.u32 %v2048, 16
        %v2246 = vrot.slane %v2244, 4
        %v2247 = vshll.u32 %v2048, 16
        %v2249 = vrot.slane %v2247, 5
        %v2250 = vor.u32 %v2246, %v2249
        %v2251 = vrot.slane %v2250, 4
        %v2253 = vshll.u32 %v2049, 16
        %v2255 = vrot.slane %v2253, 5
        %v2256 = vsel %vm267, %v2251, %v2255
        %v2257 = vshrl.u32 %v2049, 16
        %v2259 = vrot.slane %v2257, 4
        %v2260 = vor.u32 %v2259, %v2255
        %v2261 = vrot.slane %v2260, 4
        %v2263 = vshll.u32 %v2050, 16
        %v2265 = vrot.slane %v2263, 5
        %v2266 = vsel %vm267, %v2261, %v2265
        %v2268 = vshrl.u32 %v2051, 16
        %v2270 = vrot.slane %v2268, 4
        %v2271 = vshll.u32 %v2051, 16
        %v2273 = vrot.slane %v2271, 5
        %v2274 = vor.u32 %v2270, %v2273
        %v2275 = vrot.slane %v2274, 4
        %v2277 = vshll.u32 %v2052, 16
        %v2279 = vrot.slane %v2277, 5
        %v2280 = vsel %vm267, %v2275, %v2279
        %v2281 = vshrl.u32 %v2052, 16
        %v2283 = vrot.slane %v2281, 4
        %v2284 = vor.u32 %v2283, %v2279
        %v2285 = vrot.slane %v2284, 4
        %v2287 = vshll.u32 %v2053, 16
        %v2289 = vrot.slane %v2287, 5
        %v2290 = vsel %vm267, %v2285, %v2289
        %v2292 = vshrl.u32 %v2054, 16
        %v2294 = vrot.slane %v2292, 4
        %v2295 = vshll.u32 %v2054, 16
        %v2297 = vrot.slane %v2295, 5
        %v2298 = vor.u32 %v2294, %v2297
        %v2299 = vrot.slane %v2298, 4
        %v2301 = vshll.u32 %v2055, 16
        %v2303 = vrot.slane %v2301, 5
        %v2304 = vsel %vm267, %v2299, %v2303
        %v2305 = vshrl.u32 %v2055, 16
        %v2307 = vrot.slane %v2305, 4
        %v2308 = vor.u32 %v2307, %v2303
        %v2309 = vrot.slane %v2308, 4
        %v2311 = vshll.u32 %v2056, 16
        %v2313 = vrot.slane %v2311, 5
        %v2314 = vsel %vm267, %v2309, %v2313
        %v2316 = vshrl.u32 %v2057, 16
        %v2318 = vrot.slane %v2316, 4
        %v2319 = vshll.u32 %v2057, 16
        %v2321 = vrot.slane %v2319, 5
        %v2322 = vor.u32 %v2318, %v2321
        %v2323 = vrot.slane %v2322, 4
        %v2325 = vshll.u32 %v2058, 16
        %v2327 = vrot.slane %v2325, 5
        %v2328 = vsel %vm267, %v2323, %v2327
        %v2329 = vshrl.u32 %v2058, 16
        %v2331 = vrot.slane %v2329, 4
        %v2332 = vor.u32 %v2331, %v2327
        %v2333 = vrot.slane %v2332, 4
        %v2335 = vshll.u32 %v2059, 16
        %v2337 = vrot.slane %v2335, 5
        %v2338 = vsel %vm267, %v2333, %v2337
        %v2340 = vshrl.u32 %v2060, 16
        %v2342 = vrot.slane %v2340, 4
        %v2343 = vshll.u32 %v2060, 16
        %v2345 = vrot.slane %v2343, 5
        %v2346 = vor.u32 %v2342, %v2345
        %v2347 = vrot.slane %v2346, 4
        %v2349 = vshll.u32 %v2061, 16
        %v2351 = vrot.slane %v2349, 5
        %v2352 = vsel %vm267, %v2347, %v2351
        %v2353 = vshrl.u32 %v2061, 16
        %v2355 = vrot.slane %v2353, 4
        %v2356 = vor.u32 %v2355, %v2351
        %v2357 = vrot.slane %v2356, 4
        %v2359 = vshll.u32 %v2062, 16
        %v2361 = vrot.slane %v2359, 5
        %v2362 = vsel %vm267, %v2357, %v2361
        %v2364 = vshrl.u32 %v2063, 16
        %v2366 = vrot.slane %v2364, 4
        %v2367 = vshll.u32 %v2063, 16
        %v2369 = vrot.slane %v2367, 5
        %v2370 = vor.u32 %v2366, %v2369
        %v2371 = vrot.slane %v2370, 4
        %v2373 = vshll.u32 %v2064, 16
        %v2375 = vrot.slane %v2373, 5
        %v2376 = vsel %vm267, %v2371, %v2375
        %v2377 = vshrl.u32 %v2064, 16
        %v2379 = vrot.slane %v2377, 4
        %v2380 = vor.u32 %v2379, %v2375
        %v2381 = vrot.slane %v2380, 4
        %v2383 = vshll.u32 %v2065, 16
        %v2385 = vrot.slane %v2383, 5
        %v2386 = vsel %vm267, %v2381, %v2385
        %v2388 = vshrl.u32 %v2066, 16
        %v2390 = vrot.slane %v2388, 4
        %v2391 = vshll.u32 %v2066, 16
        %v2393 = vrot.slane %v2391, 5
        %v2394 = vor.u32 %v2390, %v2393
        %v2395 = vrot.slane %v2394, 4
        %v2397 = vshll.u32 %v2067, 16
        %v2399 = vrot.slane %v2397, 5
        %v2400 = vsel %vm267, %v2395, %v2399
        %v2401 = vshrl.u32 %v2067, 16
        %v2403 = vrot.slane %v2401, 4
        %v2404 = vor.u32 %v2403, %v2399
        %v2405 = vrot.slane %v2404, 4
        %v2407 = vshll.u32 %v2068, 16
        %v2409 = vrot.slane %v2407, 5
        %v2410 = vsel %vm267, %v2405, %v2409
        %v2412 = vshrl.u32 %v2069, 16
        %v2414 = vrot.slane %v2412, 4
        %v2415 = vshll.u32 %v2069, 16
        %v2417 = vrot.slane %v2415, 5
        %v2418 = vor.u32 %v2414, %v2417
        %v2419 = vrot.slane %v2418, 4
        %v2421 = vshll.u32 %v2070, 16
        %v2423 = vrot.slane %v2421, 5
        %v2424 = vsel %vm267, %v2419, %v2423
        %v2425 = vshrl.u32 %v2070, 16
        %v2427 = vrot.slane %v2425, 4
        %v2428 = vor.u32 %v2427, %v2423
        %v2429 = vrot.slane %v2428, 4
        %v2431 = vshll.u32 %v2071, 16
        %v2433 = vrot.slane %v2431, 5
        %v2434 = vsel %vm267, %v2429, %v2433
        %v2436 = vshrl.u32 %v2072, 16
        %v2438 = vrot.slane %v2436, 4
        %v2439 = vshll.u32 %v2072, 16
        %v2441 = vrot.slane %v2439, 5
        %v2442 = vor.u32 %v2438, %v2441
        %v2443 = vrot.slane %v2442, 4
        %v2445 = vshll.u32 %v2073, 16
        %v2447 = vrot.slane %v2445, 5
        %v2448 = vsel %vm267, %v2443, %v2447
        %v2449 = vshrl.u32 %v2073, 16
        %v2451 = vrot.slane %v2449, 4
        %v2452 = vor.u32 %v2451, %v2447
        %v2453 = vrot.slane %v2452, 4
        %v2455 = vshll.u32 %v2074, 16
        %v2457 = vrot.slane %v2455, 5
        %v2458 = vsel %vm267, %v2453, %v2457
        %s2459 = scalar_lea.vmem %s1, 8
        %v2460 = vld [vmem:[%s2459] sm:$0x3]
        %v2461 = vunpack.c.l.b16 %v2088
        %v2462 = vunpack.c.l.b16 %v2098
        %v2463 = vunpack.c.l.b16 %v2112
        %v2464 = vunpack.c.l.b16 %v2122
        %v2465 = vunpack.c.l.b16 %v2136
        %v2466 = vunpack.c.l.b16 %v2146
        %v2467 = vunpack.c.l.b16 %v2160
        %v2468 = vunpack.c.l.b16 %v2170
        %v2469 = vunpack.c.l.b16 %v2184
        %v2470 = vunpack.c.l.b16 %v2194
        %v2471 = vunpack.c.l.b16 %v2208
        %v2472 = vunpack.c.l.b16 %v2218
        %v2473 = vunpack.c.l.b16 %v2232
        %v2474 = vunpack.c.l.b16 %v2242
        %v2475 = vunpack.c.l.b16 %v2256
        %v2476 = vunpack.c.l.b16 %v2266
        %v2477 = vunpack.c.l.b16 %v2280
        %v2478 = vunpack.c.l.b16 %v2290
        %v2479 = vunpack.c.l.b16 %v2304
        %v2480 = vunpack.c.l.b16 %v2314
        %v2481 = vunpack.c.l.b16 %v2328
        %v2482 = vunpack.c.l.b16 %v2338
        %v2483 = vunpack.c.l.b16 %v2352
        %v2484 = vunpack.c.l.b16 %v2362
        %v2485 = vunpack.c.l.b16 %v2376
        %v2486 = vunpack.c.l.b16 %v2386
        %v2487 = vunpack.c.l.b16 %v2400
        %v2488 = vunpack.c.l.b16 %v2410
        %v2489 = vunpack.c.l.b16 %v2424
        %v2490 = vunpack.c.l.b16 %v2434
        %v2491 = vunpack.c.l.b16 %v2448
        %v2492 = vunpack.c.l.b16 %v2458
        %v2493 = vpack.c.b16 %v2462, %v2461
        %v2494 = vpack.c.b16 %v2464, %v2463
        %v2495 = vpack.c.b16 %v2466, %v2465
        %v2496 = vpack.c.b16 %v2468, %v2467
        %v2497 = vpack.c.b16 %v2470, %v2469
        %v2498 = vpack.c.b16 %v2472, %v2471
        %v2499 = vpack.c.b16 %v2474, %v2473
        %v2500 = vpack.c.b16 %v2476, %v2475
        %v2501 = vpack.c.b16 %v2478, %v2477
        %v2502 = vpack.c.b16 %v2480, %v2479
        %v2503 = vpack.c.b16 %v2482, %v2481
        %v2504 = vpack.c.b16 %v2484, %v2483
        %v2505 = vpack.c.b16 %v2486, %v2485
        %v2506 = vpack.c.b16 %v2488, %v2487
        %v2507 = vpack.c.b16 %v2490, %v2489
        %v2508 = vpack.c.b16 %v2492, %v2491
        %v2510 = vsel %vm702, %v2493, 0
        %v2513 = vsel %vm702, %v2494, 0
        %v2516 = vsel %vm702, %v2495, 0
        %v2519 = vsel %vm702, %v2496, 0
        %v2522 = vsel %vm702, %v2497, 0
        %v2525 = vsel %vm702, %v2498, 0
        %v2528 = vsel %vm702, %v2499, 0
        %v2531 = vsel %vm702, %v2500, 0
        %v2534 = vsel %vm702, %v2501, 0
        %v2537 = vsel %vm702, %v2502, 0
        %v2540 = vsel %vm702, %v2503, 0
        %v2543 = vsel %vm702, %v2504, 0
        %v2546 = vsel %vm702, %v2505, 0
        %v2549 = vsel %vm702, %v2506, 0
        %v2552 = vsel %vm702, %v2507, 0
        %v2555 = vsel %vm702, %v2508, 0
        %v2558 = vsel %vm751, %v2460, 0
        %2560 = vmatprep.subr.bf16.mxu0 0
        %2561 = vmatpush1.bf16.msra.mxu0 %v2558
        %2562 = vmatprep.subr.bf16.mxu0 0
        %2563 = vmatpush1.bf16.msra.mxu0 0
        %2564 = vmatprep.subr.bf16.mxu0 0
        %2565 = vmatpush1.bf16.msra.mxu0 0
        %2566 = vmatprep.subr.bf16.mxu0 0
        %2567 = vmatpush1.bf16.msra.mxu0 0
        %2568 = vmatprep.subr.bf16.mxu0 0
        %2569 = vmatpush1.bf16.msra.mxu0 0
        %2570 = vmatprep.subr.bf16.mxu0 0
        %2571 = vmatpush1.bf16.msra.mxu0 0
        %2572 = vmatprep.subr.bf16.mxu0 0
        %2573 = vmatpush1.bf16.msra.mxu0 0
        %2574 = vmatprep.subr.bf16.mxu0 0
        %2575 = vmatpush1.bf16.msra.mxu0 0
        %2576 = vmatprep.subr.bf16.mxu0 0
        %2577 = vmatpush1.bf16.msra.mxu0 0
        %2578 = vmatprep.subr.bf16.mxu0 0
        %2579 = vmatpush1.bf16.msra.mxu0 0
        %2580 = vmatprep.subr.bf16.mxu0 0
        %2581 = vmatpush1.bf16.msra.mxu0 0
        %2582 = vmatprep.subr.bf16.mxu0 0
        %2583 = vmatpush1.bf16.msra.mxu0 0
        %2584 = vmatprep.subr.bf16.mxu0 0
        %2585 = vmatpush1.bf16.msra.mxu0 0
        %2586 = vmatprep.subr.bf16.mxu0 0
        %2587 = vmatpush1.bf16.msra.mxu0 0
        %2588 = vmatprep.subr.bf16.mxu0 0
        %2589 = vmatpush1.bf16.msra.mxu0 0
        %2590 = vmatprep.subr.bf16.mxu0 0
        %2591 = vmatpush1.bf16.msra.mxu0 0
        %2592 = vmatprep.mubr.bf16.mxu0 0
        %2593 = vmatmul.mubr.bf16.gmra.mrb[0].mxu0 %v2510
        %v2594 = vpop.f32.mrb[0].mxu0
        %v2595 = vadd.f32 0.0, %v2594
        %v2596 = vpop.f32.mrb[0].mxu0
        %v2597 = vpop.f32.mrb[0].mxu0
        %v2598 = vadd.f32 0.0, %v2597
        %v2599 = vpop.f32.mrb[0].mxu0
        %2600 = vmatprep.mubr.bf16.mxu0 0
        %2601 = vmatmul.mubr.bf16.gmra.mrb[0].mxu0 %v2513
        %v2602 = vpop.f32.mrb[0].mxu0
        %v2603 = vadd.f32 0.0, %v2602
        %v2604 = vpop.f32.mrb[0].mxu0
        %v2605 = vpop.f32.mrb[0].mxu0
        %v2606 = vadd.f32 0.0, %v2605
        %v2607 = vpop.f32.mrb[0].mxu0
        %2608 = vmatprep.mubr.bf16.mxu0 0
        %2609 = vmatmul.mubr.bf16.gmra.mrb[0].mxu0 %v2516
        %v2610 = vpop.f32.mrb[0].mxu0
        %v2611 = vadd.f32 0.0, %v2610
        %v2612 = vpop.f32.mrb[0].mxu0
        %v2613 = vpop.f32.mrb[0].mxu0
        %v2614 = vadd.f32 0.0, %v2613
        %v2615 = vpop.f32.mrb[0].mxu0
        %2616 = vmatprep.mubr.bf16.mxu0 0
        %2617 = vmatmul.mubr.bf16.gmra.mrb[0].mxu0 %v2519
        %v2618 = vpop.f32.mrb[0].mxu0
        %v2619 = vadd.f32 0.0, %v2618
        %v2620 = vpop.f32.mrb[0].mxu0
        %v2621 = vpop.f32.mrb[0].mxu0
        %v2622 = vadd.f32 0.0, %v2621
        %v2623 = vpop.f32.mrb[0].mxu0
        %2624 = vmatprep.mubr.bf16.mxu0 0
        %2625 = vmatmul.mubr.bf16.gmra.mrb[0].mxu0 %v2522
        %v2626 = vpop.f32.mrb[0].mxu0
        %v2627 = vadd.f32 0.0, %v2626
        %v2628 = vpop.f32.mrb[0].mxu0
        %v2629 = vpop.f32.mrb[0].mxu0
        %v2630 = vadd.f32 0.0, %v2629
        %v2631 = vpop.f32.mrb[0].mxu0
        %2632 = vmatprep.mubr.bf16.mxu0 0
        %2633 = vmatmul.mubr.bf16.gmra.mrb[0].mxu0 %v2525
        %v2634 = vpop.f32.mrb[0].mxu0
        %v2635 = vadd.f32 0.0, %v2634
        %v2636 = vpop.f32.mrb[0].mxu0
        %v2637 = vpop.f32.mrb[0].mxu0
        %v2638 = vadd.f32 0.0, %v2637
        %v2639 = vpop.f32.mrb[0].mxu0
        %2640 = vmatprep.mubr.bf16.mxu0 0
        %2641 = vmatmul.mubr.bf16.gmra.mrb[0].mxu0 %v2528
        %v2642 = vpop.f32.mrb[0].mxu0
        %v2643 = vadd.f32 0.0, %v2642
        %v2644 = vpop.f32.mrb[0].mxu0
        %v2645 = vpop.f32.mrb[0].mxu0
        %v2646 = vadd.f32 0.0, %v2645
        %v2647 = vpop.f32.mrb[0].mxu0
        %2648 = vmatprep.mubr.bf16.mxu0 0
        %2649 = vmatmul.mubr.bf16.gmra.mrb[0].mxu0 %v2531
        %v2650 = vpop.f32.mrb[0].mxu0
        %v2651 = vadd.f32 0.0, %v2650
        %v2652 = vpop.f32.mrb[0].mxu0
        %v2653 = vpop.f32.mrb[0].mxu0
        %v2654 = vadd.f32 0.0, %v2653
        %v2655 = vpop.f32.mrb[0].mxu0
        %2656 = vmatprep.mubr.bf16.mxu0 0
        %2657 = vmatmul.mubr.bf16.gmra.mrb[0].mxu0 %v2534
        %v2658 = vpop.f32.mrb[0].mxu0
        %v2659 = vadd.f32 0.0, %v2658
        %v2660 = vpop.f32.mrb[0].mxu0
        %v2661 = vpop.f32.mrb[0].mxu0
        %v2662 = vadd.f32 0.0, %v2661
        %v2663 = vpop.f32.mrb[0].mxu0
        %2664 = vmatprep.mubr.bf16.mxu0 0
        %2665 = vmatmul.mubr.bf16.gmra.mrb[0].mxu0 %v2537
        %v2666 = vpop.f32.mrb[0].mxu0
        %v2667 = vadd.f32 0.0, %v2666
        %v2668 = vpop.f32.mrb[0].mxu0
        %v2669 = vpop.f32.mrb[0].mxu0
        %v2670 = vadd.f32 0.0, %v2669
        %v2671 = vpop.f32.mrb[0].mxu0
        %2672 = vmatprep.mubr.bf16.mxu0 0
        %2673 = vmatmul.mubr.bf16.gmra.mrb[0].mxu0 %v2540
        %v2674 = vpop.f32.mrb[0].mxu0
        %v2675 = vadd.f32 0.0, %v2674
        %v2676 = vpop.f32.mrb[0].mxu0
        %v2677 = vpop.f32.mrb[0].mxu0
        %v2678 = vadd.f32 0.0, %v2677
        %v2679 = vpop.f32.mrb[0].mxu0
        %2680 = vmatprep.mubr.bf16.mxu0 0
        %2681 = vmatmul.mubr.bf16.gmra.mrb[0].mxu0 %v2543
        %v2682 = vpop.f32.mrb[0].mxu0
        %v2683 = vadd.f32 0.0, %v2682
        %v2684 = vpop.f32.mrb[0].mxu0
        %v2685 = vpop.f32.mrb[0].mxu0
        %v2686 = vadd.f32 0.0, %v2685
        %v2687 = vpop.f32.mrb[0].mxu0
        %2688 = vmatprep.mubr.bf16.mxu0 0
        %2689 = vmatmul.mubr.bf16.gmra.mrb[0].mxu0 %v2546
        %v2690 = vpop.f32.mrb[0].mxu0
        %v2691 = vadd.f32 0.0, %v2690
        %v2692 = vpop.f32.mrb[0].mxu0
        %v2693 = vpop.f32.mrb[0].mxu0
        %v2694 = vadd.f32 0.0, %v2693
        %v2695 = vpop.f32.mrb[0].mxu0
        %2696 = vmatprep.mubr.bf16.mxu0 0
        %2697 = vmatmul.mubr.bf16.gmra.mrb[0].mxu0 %v2549
        %v2698 = vpop.f32.mrb[0].mxu0
        %v2699 = vadd.f32 0.0, %v2698
        %v2700 = vpop.f32.mrb[0].mxu0
        %v2701 = vpop.f32.mrb[0].mxu0
        %v2702 = vadd.f32 0.0, %v2701
        %v2703 = vpop.f32.mrb[0].mxu0
        %2704 = vmatprep.mubr.bf16.mxu0 0
        %2705 = vmatmul.mubr.bf16.gmra.mrb[0].mxu0 %v2552
        %v2706 = vpop.f32.mrb[0].mxu0
        %v2707 = vadd.f32 0.0, %v2706
        %v2708 = vpop.f32.mrb[0].mxu0
        %v2709 = vpop.f32.mrb[0].mxu0
        %v2710 = vadd.f32 0.0, %v2709
        %v2711 = vpop.f32.mrb[0].mxu0
        %2712 = vmatprep.mubr.bf16.mxu0 0
        %2713 = vmatmul.mubr.bf16.gmra.mrb[0].mxu0 %v2555
        %v2714 = vpop.f32.mrb[0].mxu0
        %v2715 = vadd.f32 0.0, %v2714
        %v2716 = vpop.f32.mrb[0].mxu0
        %v2717 = vpop.f32.mrb[0].mxu0
        %v2718 = vadd.f32 0.0, %v2717
        %v2719 = vpop.f32.mrb[0].mxu0
        %2720 = vdwg.mxu0
        %v2721 = vadd.f32 %v1995, %v2595
        %v2722 = vadd.f32 %v1996, %v2598
        %v2723 = vadd.f32 %v1997, %v2603
        %v2724 = vadd.f32 %v1998, %v2606
        %v2725 = vadd.f32 %v1999, %v2611
        %v2726 = vadd.f32 %v2000, %v2614
        %v2727 = vadd.f32 %v2001, %v2619
        %v2728 = vadd.f32 %v2002, %v2622
        %v2729 = vadd.f32 %v2003, %v2627
        %v2730 = vadd.f32 %v2004, %v2630
        %v2731 = vadd.f32 %v2005, %v2635
        %v2732 = vadd.f32 %v2006, %v2638
        %v2733 = vadd.f32 %v2007, %v2643
        %v2734 = vadd.f32 %v2008, %v2646
        %v2735 = vadd.f32 %v2009, %v2651
        %v2736 = vadd.f32 %v2010, %v2654
        %v2737 = vadd.f32 %v2011, %v2659
        %v2738 = vadd.f32 %v2012, %v2662
        %v2739 = vadd.f32 %v2013, %v2667
        %v2740 = vadd.f32 %v2014, %v2670
        %v2741 = vadd.f32 %v2015, %v2675
        %v2742 = vadd.f32 %v2016, %v2678
        %v2743 = vadd.f32 %v2017, %v2683
        %v2744 = vadd.f32 %v2018, %v2686
        %v2745 = vadd.f32 %v2019, %v2691
        %v2746 = vadd.f32 %v2020, %v2694
        %v2747 = vadd.f32 %v2021, %v2699
        %v2748 = vadd.f32 %v2022, %v2702
        %v2749 = vadd.f32 %v2023, %v2707
        %v2750 = vadd.f32 %v2024, %v2710
        %v2751 = vadd.f32 %v2025, %v2715
        %v2752 = vadd.f32 %v2026, %v2718
        %v2753 = vld [vmem:[%s1668] sm:$0xe]
        %v2754 = vld [vmem:[%s1668 + $0xc] sm:$0xe]
        %v2755 = vld [vmem:[%s1668 + $0x18] sm:$0xe]
        %v2756 = vld [vmem:[%s1668 + $0x24] sm:$0xe]
        %v2757 = vld [vmem:[%s1668 + $0x30] sm:$0xe]
        %v2758 = vld [vmem:[%s1668 + $0x3c] sm:$0xe]
        %v2759 = vld [vmem:[%s1668 + $0x48] sm:$0xe]
        %v2760 = vld [vmem:[%s1668 + $0x54] sm:$0xe]
        %v2761 = vld [vmem:[%s1668 + $0x60] sm:$0xe]
        %v2762 = vld [vmem:[%s1668 + $0x6c] sm:$0xe]
        %v2763 = vld [vmem:[%s1668 + $0x78] sm:$0xe]
        %v2764 = vld [vmem:[%s1668 + $0x84] sm:$0xe]
        %v2765 = vld [vmem:[%s1668 + $0x90] sm:$0xe]
        %v2766 = vld [vmem:[%s1668 + $0x9c] sm:$0xe]
        %v2767 = vld [vmem:[%s1668 + $0xa8] sm:$0xe]
        %v2768 = vld [vmem:[%s1668 + $0xb4] sm:$0xe]
        %v2817 = vrot.slane %v2753, 5
        %v2818 = vrot.slane %v2817, 4
        %v2819 = vrot.slane %v2028, 5
        %v2820 = vsel %vm1258, %v2818, %v2819
        %v2821 = vrot.slane %v2819, 4
        %v2822 = vrot.slane %v2029, 5
        %v2823 = vsel %vm1258, %v2821, %v2822
        %v2824 = vrot.slane %v2754, 5
        %v2825 = vrot.slane %v2824, 4
        %v2826 = vrot.slane %v2031, 5
        %v2827 = vsel %vm1258, %v2825, %v2826
        %v2828 = vrot.slane %v2826, 4
        %v2829 = vrot.slane %v2032, 5
        %v2830 = vsel %vm1258, %v2828, %v2829
        %v2831 = vrot.slane %v2755, 5
        %v2832 = vrot.slane %v2831, 4
        %v2833 = vrot.slane %v2034, 5
        %v2834 = vsel %vm1258, %v2832, %v2833
        %v2835 = vrot.slane %v2833, 4
        %v2836 = vrot.slane %v2035, 5
        %v2837 = vsel %vm1258, %v2835, %v2836
        %v2838 = vrot.slane %v2756, 5
        %v2839 = vrot.slane %v2838, 4
        %v2840 = vrot.slane %v2037, 5
        %v2841 = vsel %vm1258, %v2839, %v2840
        %v2842 = vrot.slane %v2840, 4
        %v2843 = vrot.slane %v2038, 5
        %v2844 = vsel %vm1258, %v2842, %v2843
        %v2845 = vrot.slane %v2757, 5
        %v2846 = vrot.slane %v2845, 4
        %v2847 = vrot.slane %v2040, 5
        %v2848 = vsel %vm1258, %v2846, %v2847
        %v2849 = vrot.slane %v2847, 4
        %v2850 = vrot.slane %v2041, 5
        %v2851 = vsel %vm1258, %v2849, %v2850
        %v2852 = vrot.slane %v2758, 5
        %v2853 = vrot.slane %v2852, 4
        %v2854 = vrot.slane %v2043, 5
        %v2855 = vsel %vm1258, %v2853, %v2854
        %v2856 = vrot.slane %v2854, 4
        %v2857 = vrot.slane %v2044, 5
        %v2858 = vsel %vm1258, %v2856, %v2857
        %v2859 = vrot.slane %v2759, 5
        %v2860 = vrot.slane %v2859, 4
        %v2861 = vrot.slane %v2046, 5
        %v2862 = vsel %vm1258, %v2860, %v2861
        %v2863 = vrot.slane %v2861, 4
        %v2864 = vrot.slane %v2047, 5
        %v2865 = vsel %vm1258, %v2863, %v2864
        %v2866 = vrot.slane %v2760, 5
        %v2867 = vrot.slane %v2866, 4
        %v2868 = vrot.slane %v2049, 5
        %v2869 = vsel %vm1258, %v2867, %v2868
        %v2870 = vrot.slane %v2868, 4
        %v2871 = vrot.slane %v2050, 5
        %v2872 = vsel %vm1258, %v2870, %v2871
        %v2873 = vrot.slane %v2761, 5
        %v2874 = vrot.slane %v2873, 4
        %v2875 = vrot.slane %v2052, 5
        %v2876 = vsel %vm1258, %v2874, %v2875
        %v2877 = vrot.slane %v2875, 4
        %v2878 = vrot.slane %v2053, 5
        %v2879 = vsel %vm1258, %v2877, %v2878
        %v2880 = vrot.slane %v2762, 5
        %v2881 = vrot.slane %v2880, 4
        %v2882 = vrot.slane %v2055, 5
        %v2883 = vsel %vm1258, %v2881, %v2882
        %v2884 = vrot.slane %v2882, 4
        %v2885 = vrot.slane %v2056, 5
        %v2886 = vsel %vm1258, %v2884, %v2885
        %v2887 = vrot.slane %v2763, 5
        %v2888 = vrot.slane %v2887, 4
        %v2889 = vrot.slane %v2058, 5
        %v2890 = vsel %vm1258, %v2888, %v2889
        %v2891 = vrot.slane %v2889, 4
        %v2892 = vrot.slane %v2059, 5
        %v2893 = vsel %vm1258, %v2891, %v2892
        %v2894 = vrot.slane %v2764, 5
        %v2895 = vrot.slane %v2894, 4
        %v2896 = vrot.slane %v2061, 5
        %v2897 = vsel %vm1258, %v2895, %v2896
        %v2898 = vrot.slane %v2896, 4
        %v2899 = vrot.slane %v2062, 5
        %v2900 = vsel %vm1258, %v2898, %v2899
        %v2901 = vrot.slane %v2765, 5
        %v2902 = vrot.slane %v2901, 4
        %v2903 = vrot.slane %v2064, 5
        %v2904 = vsel %vm1258, %v2902, %v2903
        %v2905 = vrot.slane %v2903, 4
        %v2906 = vrot.slane %v2065, 5
        %v2907 = vsel %vm1258, %v2905, %v2906
        %v2908 = vrot.slane %v2766, 5
        %v2909 = vrot.slane %v2908, 4
        %v2910 = vrot.slane %v2067, 5
        %v2911 = vsel %vm1258, %v2909, %v2910
        %v2912 = vrot.slane %v2910, 4
        %v2913 = vrot.slane %v2068, 5
        %v2914 = vsel %vm1258, %v2912, %v2913
        %v2915 = vrot.slane %v2767, 5
        %v2916 = vrot.slane %v2915, 4
        %v2917 = vrot.slane %v2070, 5
        %v2918 = vsel %vm1258, %v2916, %v2917
        %v2919 = vrot.slane %v2917, 4
        %v2920 = vrot.slane %v2071, 5
        %v2921 = vsel %vm1258, %v2919, %v2920
        %v2922 = vrot.slane %v2768, 5
        %v2923 = vrot.slane %v2922, 4
        %v2924 = vrot.slane %v2073, 5
        %v2925 = vsel %vm1258, %v2923, %v2924
        %v2926 = vrot.slane %v2924, 4
        %v2927 = vrot.slane %v2074, 5
        %v2928 = vsel %vm1258, %v2926, %v2927
        %s2929 = scalar_lea.vmem %s1, 10
        %v2930 = vld [vmem:[%s2929] sm:$0x3]
        %v2931 = vunpack.c.l.b16 %v2820
        %v2932 = vunpack.c.l.b16 %v2823
        %v2933 = vunpack.c.l.b16 %v2827
        %v2934 = vunpack.c.l.b16 %v2830
        %v2935 = vunpack.c.l.b16 %v2834
        %v2936 = vunpack.c.l.b16 %v2837
        %v2937 = vunpack.c.l.b16 %v2841
        %v2938 = vunpack.c.l.b16 %v2844
        %v2939 = vunpack.c.l.b16 %v2848
        %v2940 = vunpack.c.l.b16 %v2851
        %v2941 = vunpack.c.l.b16 %v2855
        %v2942 = vunpack.c.l.b16 %v2858
        %v2943 = vunpack.c.l.b16 %v2862
        %v2944 = vunpack.c.l.b16 %v2865
        %v2945 = vunpack.c.l.b16 %v2869
        %v2946 = vunpack.c.l.b16 %v2872
        %v2947 = vunpack.c.l.b16 %v2876
        %v2948 = vunpack.c.l.b16 %v2879
        %v2949 = vunpack.c.l.b16 %v2883
        %v2950 = vunpack.c.l.b16 %v2886
        %v2951 = vunpack.c.l.b16 %v2890
        %v2952 = vunpack.c.l.b16 %v2893
        %v2953 = vunpack.c.l.b16 %v2897
        %v2954 = vunpack.c.l.b16 %v2900
        %v2955 = vunpack.c.l.b16 %v2904
        %v2956 = vunpack.c.l.b16 %v2907
        %v2957 = vunpack.c.l.b16 %v2911
        %v2958 = vunpack.c.l.b16 %v2914
        %v2959 = vunpack.c.l.b16 %v2918
        %v2960 = vunpack.c.l.b16 %v2921
        %v2961 = vunpack.c.l.b16 %v2925
        %v2962 = vunpack.c.l.b16 %v2928
        %v2963 = vpack.c.b16 %v2932, %v2931
        %v2964 = vpack.c.b16 %v2934, %v2933
        %v2965 = vpack.c.b16 %v2936, %v2935
        %v2966 = vpack.c.b16 %v2938, %v2937
        %v2967 = vpack.c.b16 %v2940, %v2939
        %v2968 = vpack.c.b16 %v2942, %v2941
        %v2969 = vpack.c.b16 %v2944, %v2943
        %v2970 = vpack.c.b16 %v2946, %v2945
        %v2971 = vpack.c.b16 %v2948, %v2947
        %v2972 = vpack.c.b16 %v2950, %v2949
        %v2973 = vpack.c.b16 %v2952, %v2951
        %v2974 = vpack.c.b16 %v2954, %v2953
        %v2975 = vpack.c.b16 %v2956, %v2955
        %v2976 = vpack.c.b16 %v2958, %v2957
        %v2977 = vpack.c.b16 %v2960, %v2959
        %v2978 = vpack.c.b16 %v2962, %v2961
        %v2980 = vsel %vm702, %v2963, 0
        %v2983 = vsel %vm702, %v2964, 0
        %v2986 = vsel %vm702, %v2965, 0
        %v2989 = vsel %vm702, %v2966, 0
        %v2992 = vsel %vm702, %v2967, 0
        %v2995 = vsel %vm702, %v2968, 0
        %v2998 = vsel %vm702, %v2969, 0
        %v3001 = vsel %vm702, %v2970, 0
        %v3004 = vsel %vm702, %v2971, 0
        %v3007 = vsel %vm702, %v2972, 0
        %v3010 = vsel %vm702, %v2973, 0
        %v3013 = vsel %vm702, %v2974, 0
        %v3016 = vsel %vm702, %v2975, 0
        %v3019 = vsel %vm702, %v2976, 0
        %v3022 = vsel %vm702, %v2977, 0
        %v3025 = vsel %vm702, %v2978, 0
        %v3028 = vsel %vm751, %v2930, 0
        %3030 = vmatprep.subr.bf16.mxu0 0
        %3031 = vmatpush1.bf16.msra.mxu0 %v3028
        %3032 = vmatprep.subr.bf16.mxu0 0
        %3033 = vmatpush1.bf16.msra.mxu0 0
        %3034 = vmatprep.subr.bf16.mxu0 0
        %3035 = vmatpush1.bf16.msra.mxu0 0
        %3036 = vmatprep.subr.bf16.mxu0 0
        %3037 = vmatpush1.bf16.msra.mxu0 0
        %3038 = vmatprep.subr.bf16.mxu0 0
        %3039 = vmatpush1.bf16.msra.mxu0 0
        %3040 = vmatprep.subr.bf16.mxu0 0
        %3041 = vmatpush1.bf16.msra.mxu0 0
        %3042 = vmatprep.subr.bf16.mxu0 0
        %3043 = vmatpush1.bf16.msra.mxu0 0
        %3044 = vmatprep.subr.bf16.mxu0 0
        %3045 = vmatpush1.bf16.msra.mxu0 0
        %3046 = vmatprep.subr.bf16.mxu0 0
        %3047 = vmatpush1.bf16.msra.mxu0 0
        %3048 = vmatprep.subr.bf16.mxu0 0
        %3049 = vmatpush1.bf16.msra.mxu0 0
        %3050 = vmatprep.subr.bf16.mxu0 0
        %3051 = vmatpush1.bf16.msra.mxu0 0
        %3052 = vmatprep.subr.bf16.mxu0 0
        %3053 = vmatpush1.bf16.msra.mxu0 0
        %3054 = vmatprep.subr.bf16.mxu0 0
        %3055 = vmatpush1.bf16.msra.mxu0 0
        %3056 = vmatprep.subr.bf16.mxu0 0
        %3057 = vmatpush1.bf16.msra.mxu0 0
        %3058 = vmatprep.subr.bf16.mxu0 0
        %3059 = vmatpush1.bf16.msra.mxu0 0
        %3060 = vmatprep.subr.bf16.mxu0 0
        %3061 = vmatpush1.bf16.msra.mxu0 0
        %3062 = vmatprep.mubr.bf16.mxu0 0
        %3063 = vmatmul.mubr.bf16.gmra.mrb[0].mxu0 %v2980
        %v3064 = vpop.f32.mrb[0].mxu0
        %v3065 = vadd.f32 0.0, %v3064
        %v3066 = vpop.f32.mrb[0].mxu0
        %v3067 = vpop.f32.mrb[0].mxu0
        %v3068 = vadd.f32 0.0, %v3067
        %v3069 = vpop.f32.mrb[0].mxu0
        %3070 = vmatprep.mubr.bf16.mxu0 0
        %3071 = vmatmul.mubr.bf16.gmra.mrb[0].mxu0 %v2983
        %v3072 = vpop.f32.mrb[0].mxu0
        %v3073 = vadd.f32 0.0, %v3072
        %v3074 = vpop.f32.mrb[0].mxu0
        %v3075 = vpop.f32.mrb[0].mxu0
        %v3076 = vadd.f32 0.0, %v3075
        %v3077 = vpop.f32.mrb[0].mxu0
        %3078 = vmatprep.mubr.bf16.mxu0 0
        %3079 = vmatmul.mubr.bf16.gmra.mrb[0].mxu0 %v2986
        %v3080 = vpop.f32.mrb[0].mxu0
        %v3081 = vadd.f32 0.0, %v3080
        %v3082 = vpop.f32.mrb[0].mxu0
        %v3083 = vpop.f32.mrb[0].mxu0
        %v3084 = vadd.f32 0.0, %v3083
        %v3085 = vpop.f32.mrb[0].mxu0
        %3086 = vmatprep.mubr.bf16.mxu0 0
        %3087 = vmatmul.mubr.bf16.gmra.mrb[0].mxu0 %v2989
        %v3088 = vpop.f32.mrb[0].mxu0
        %v3089 = vadd.f32 0.0, %v3088
        %v3090 = vpop.f32.mrb[0].mxu0
        %v3091 = vpop.f32.mrb[0].mxu0
        %v3092 = vadd.f32 0.0, %v3091
        %v3093 = vpop.f32.mrb[0].mxu0
        %3094 = vmatprep.mubr.bf16.mxu0 0
        %3095 = vmatmul.mubr.bf16.gmra.mrb[0].mxu0 %v2992
        %v3096 = vpop.f32.mrb[0].mxu0
        %v3097 = vadd.f32 0.0, %v3096
        %v3098 = vpop.f32.mrb[0].mxu0
        %v3099 = vpop.f32.mrb[0].mxu0
        %v3100 = vadd.f32 0.0, %v3099
        %v3101 = vpop.f32.mrb[0].mxu0
        %3102 = vmatprep.mubr.bf16.mxu0 0
        %3103 = vmatmul.mubr.bf16.gmra.mrb[0].mxu0 %v2995
        %v3104 = vpop.f32.mrb[0].mxu0
        %v3105 = vadd.f32 0.0, %v3104
        %v3106 = vpop.f32.mrb[0].mxu0
        %v3107 = vpop.f32.mrb[0].mxu0
        %v3108 = vadd.f32 0.0, %v3107
        %v3109 = vpop.f32.mrb[0].mxu0
        %3110 = vmatprep.mubr.bf16.mxu0 0
        %3111 = vmatmul.mubr.bf16.gmra.mrb[0].mxu0 %v2998
        %v3112 = vpop.f32.mrb[0].mxu0
        %v3113 = vadd.f32 0.0, %v3112
        %v3114 = vpop.f32.mrb[0].mxu0
        %v3115 = vpop.f32.mrb[0].mxu0
        %v3116 = vadd.f32 0.0, %v3115
        %v3117 = vpop.f32.mrb[0].mxu0
        %3118 = vmatprep.mubr.bf16.mxu0 0
        %3119 = vmatmul.mubr.bf16.gmra.mrb[0].mxu0 %v3001
        %v3120 = vpop.f32.mrb[0].mxu0
        %v3121 = vadd.f32 0.0, %v3120
        %v3122 = vpop.f32.mrb[0].mxu0
        %v3123 = vpop.f32.mrb[0].mxu0
        %v3124 = vadd.f32 0.0, %v3123
        %v3125 = vpop.f32.mrb[0].mxu0
        %3126 = vmatprep.mubr.bf16.mxu0 0
        %3127 = vmatmul.mubr.bf16.gmra.mrb[0].mxu0 %v3004
        %v3128 = vpop.f32.mrb[0].mxu0
        %v3129 = vadd.f32 0.0, %v3128
        %v3130 = vpop.f32.mrb[0].mxu0
        %v3131 = vpop.f32.mrb[0].mxu0
        %v3132 = vadd.f32 0.0, %v3131
        %v3133 = vpop.f32.mrb[0].mxu0
        %3134 = vmatprep.mubr.bf16.mxu0 0
        %3135 = vmatmul.mubr.bf16.gmra.mrb[0].mxu0 %v3007
        %v3136 = vpop.f32.mrb[0].mxu0
        %v3137 = vadd.f32 0.0, %v3136
        %v3138 = vpop.f32.mrb[0].mxu0
        %v3139 = vpop.f32.mrb[0].mxu0
        %v3140 = vadd.f32 0.0, %v3139
        %v3141 = vpop.f32.mrb[0].mxu0
        %3142 = vmatprep.mubr.bf16.mxu0 0
        %3143 = vmatmul.mubr.bf16.gmra.mrb[0].mxu0 %v3010
        %v3144 = vpop.f32.mrb[0].mxu0
        %v3145 = vadd.f32 0.0, %v3144
        %v3146 = vpop.f32.mrb[0].mxu0
        %v3147 = vpop.f32.mrb[0].mxu0
        %v3148 = vadd.f32 0.0, %v3147
        %v3149 = vpop.f32.mrb[0].mxu0
        %3150 = vmatprep.mubr.bf16.mxu0 0
        %3151 = vmatmul.mubr.bf16.gmra.mrb[0].mxu0 %v3013
        %v3152 = vpop.f32.mrb[0].mxu0
        %v3153 = vadd.f32 0.0, %v3152
        %v3154 = vpop.f32.mrb[0].mxu0
        %v3155 = vpop.f32.mrb[0].mxu0
        %v3156 = vadd.f32 0.0, %v3155
        %v3157 = vpop.f32.mrb[0].mxu0
        %3158 = vmatprep.mubr.bf16.mxu0 0
        %3159 = vmatmul.mubr.bf16.gmra.mrb[0].mxu0 %v3016
        %v3160 = vpop.f32.mrb[0].mxu0
        %v3161 = vadd.f32 0.0, %v3160
        %v3162 = vpop.f32.mrb[0].mxu0
        %v3163 = vpop.f32.mrb[0].mxu0
        %v3164 = vadd.f32 0.0, %v3163
        %v3165 = vpop.f32.mrb[0].mxu0
        %3166 = vmatprep.mubr.bf16.mxu0 0
        %3167 = vmatmul.mubr.bf16.gmra.mrb[0].mxu0 %v3019
        %v3168 = vpop.f32.mrb[0].mxu0
        %v3169 = vadd.f32 0.0, %v3168
        %v3170 = vpop.f32.mrb[0].mxu0
        %v3171 = vpop.f32.mrb[0].mxu0
        %v3172 = vadd.f32 0.0, %v3171
        %v3173 = vpop.f32.mrb[0].mxu0
        %3174 = vmatprep.mubr.bf16.mxu0 0
        %3175 = vmatmul.mubr.bf16.gmra.mrb[0].mxu0 %v3022
        %v3176 = vpop.f32.mrb[0].mxu0
        %v3177 = vadd.f32 0.0, %v3176
        %v3178 = vpop.f32.mrb[0].mxu0
        %v3179 = vpop.f32.mrb[0].mxu0
        %v3180 = vadd.f32 0.0, %v3179
        %v3181 = vpop.f32.mrb[0].mxu0
        %3182 = vmatprep.mubr.bf16.mxu0 0
        %3183 = vmatmul.mubr.bf16.gmra.mrb[0].mxu0 %v3025
        %v3184 = vpop.f32.mrb[0].mxu0
        %v3185 = vadd.f32 0.0, %v3184
        %v3186 = vpop.f32.mrb[0].mxu0
        %v3187 = vpop.f32.mrb[0].mxu0
        %v3188 = vadd.f32 0.0, %v3187
        %v3189 = vpop.f32.mrb[0].mxu0
        %3190 = vdwg.mxu0
        %v3191 = vadd.f32 %v2721, %v3065
        %v3192 = vadd.f32 %v2722, %v3068
        %v3193 = vadd.f32 %v2723, %v3073
        %v3194 = vadd.f32 %v2724, %v3076
        %v3195 = vadd.f32 %v2725, %v3081
        %v3196 = vadd.f32 %v2726, %v3084
        %v3197 = vadd.f32 %v2727, %v3089
        %v3198 = vadd.f32 %v2728, %v3092
        %v3199 = vadd.f32 %v2729, %v3097
        %v3200 = vadd.f32 %v2730, %v3100
        %v3201 = vadd.f32 %v2731, %v3105
        %v3202 = vadd.f32 %v2732, %v3108
        %v3203 = vadd.f32 %v2733, %v3113
        %v3204 = vadd.f32 %v2734, %v3116
        %v3205 = vadd.f32 %v2735, %v3121
        %v3206 = vadd.f32 %v2736, %v3124
        %v3207 = vadd.f32 %v2737, %v3129
        %v3208 = vadd.f32 %v2738, %v3132
        %v3209 = vadd.f32 %v2739, %v3137
        %v3210 = vadd.f32 %v2740, %v3140
        %v3211 = vadd.f32 %v2741, %v3145
        %v3212 = vadd.f32 %v2742, %v3148
        %v3213 = vadd.f32 %v2743, %v3153
        %v3214 = vadd.f32 %v2744, %v3156
        %v3215 = vadd.f32 %v2745, %v3161
        %v3216 = vadd.f32 %v2746, %v3164
        %v3217 = vadd.f32 %v2747, %v3169
        %v3218 = vadd.f32 %v2748, %v3172
        %v3219 = vadd.f32 %v2749, %v3177
        %v3220 = vadd.f32 %v2750, %v3180
        %v3221 = vadd.f32 %v2751, %v3185
        %v3222 = vadd.f32 %v2752, %v3188
        %s3223 = sadd.s32 %s212, 2
        %s3224 = smul.u32 %s3223, 3
        %s3225 = smul.addr %s3224, 4
        %s3226 = scalar_lea.vmem %s209, %s3225
        %v3227 = vld [vmem:[%s3226] sm:$0xf]
        %v3228 = vld [vmem:[%s3226 + $0x4] sm:$0xf]
        %v3229 = vld [vmem:[%s3226 + $0xc] sm:$0xf]
        %v3230 = vld [vmem:[%s3226 + $0x10] sm:$0xf]
        %v3231 = vld [vmem:[%s3226 + $0x18] sm:$0xf]
        %v3232 = vld [vmem:[%s3226 + $0x1c] sm:$0xf]
        %v3233 = vld [vmem:[%s3226 + $0x24] sm:$0xf]
        %v3234 = vld [vmem:[%s3226 + $0x28] sm:$0xf]
        %v3235 = vld [vmem:[%s3226 + $0x30] sm:$0xf]
        %v3236 = vld [vmem:[%s3226 + $0x34] sm:$0xf]
        %v3237 = vld [vmem:[%s3226 + $0x3c] sm:$0xf]
        %v3238 = vld [vmem:[%s3226 + $0x40] sm:$0xf]
        %v3239 = vld [vmem:[%s3226 + $0x48] sm:$0xf]
        %v3240 = vld [vmem:[%s3226 + $0x4c] sm:$0xf]
        %v3241 = vld [vmem:[%s3226 + $0x54] sm:$0xf]
        %v3242 = vld [vmem:[%s3226 + $0x58] sm:$0xf]
        %v3243 = vld [vmem:[%s3226 + $0x60] sm:$0xf]
        %v3244 = vld [vmem:[%s3226 + $0x64] sm:$0xf]
        %v3245 = vld [vmem:[%s3226 + $0x6c] sm:$0xf]
        %v3246 = vld [vmem:[%s3226 + $0x70] sm:$0xf]
        %v3247 = vld [vmem:[%s3226 + $0x78] sm:$0xf]
        %v3248 = vld [vmem:[%s3226 + $0x7c] sm:$0xf]
        %v3249 = vld [vmem:[%s3226 + $0x84] sm:$0xf]
        %v3250 = vld [vmem:[%s3226 + $0x88] sm:$0xf]
        %v3251 = vld [vmem:[%s3226 + $0x90] sm:$0xf]
        %v3252 = vld [vmem:[%s3226 + $0x94] sm:$0xf]
        %v3253 = vld [vmem:[%s3226 + $0x9c] sm:$0xf]
        %v3254 = vld [vmem:[%s3226 + $0xa0] sm:$0xf]
        %v3255 = vld [vmem:[%s3226 + $0xa8] sm:$0xf]
        %v3256 = vld [vmem:[%s3226 + $0xac] sm:$0xf]
        %v3257 = vld [vmem:[%s3226 + $0xb4] sm:$0xf]
        %v3258 = vld [vmem:[%s3226 + $0xb8] sm:$0xf]
        %s3259 = scalar_lea.vmem %s1, 12
        %v3260 = vld [vmem:[%s3259] sm:$0x3]
        %v3293 = vunpack.c.l.b16 %v3227
        %v3294 = vunpack.c.l.b16 %v3228
        %v3295 = vunpack.c.l.b16 %v3229
        %v3296 = vunpack.c.l.b16 %v3230
        %v3297 = vunpack.c.l.b16 %v3231
        %v3298 = vunpack.c.l.b16 %v3232
        %v3299 = vunpack.c.l.b16 %v3233
        %v3300 = vunpack.c.l.b16 %v3234
        %v3301 = vunpack.c.l.b16 %v3235
        %v3302 = vunpack.c.l.b16 %v3236
        %v3303 = vunpack.c.l.b16 %v3237
        %v3304 = vunpack.c.l.b16 %v3238
        %v3305 = vunpack.c.l.b16 %v3239
        %v3306 = vunpack.c.l.b16 %v3240
        %v3307 = vunpack.c.l.b16 %v3241
        %v3308 = vunpack.c.l.b16 %v3242
        %v3309 = vunpack.c.l.b16 %v3243
        %v3310 = vunpack.c.l.b16 %v3244
        %v3311 = vunpack.c.l.b16 %v3245
        %v3312 = vunpack.c.l.b16 %v3246
        %v3313 = vunpack.c.l.b16 %v3247
        %v3314 = vunpack.c.l.b16 %v3248
        %v3315 = vunpack.c.l.b16 %v3249
        %v3316 = vunpack.c.l.b16 %v3250
        %v3317 = vunpack.c.l.b16 %v3251
        %v3318 = vunpack.c.l.b16 %v3252
        %v3319 = vunpack.c.l.b16 %v3253
        %v3320 = vunpack.c.l.b16 %v3254
        %v3321 = vunpack.c.l.b16 %v3255
        %v3322 = vunpack.c.l.b16 %v3256
        %v3323 = vunpack.c.l.b16 %v3257
        %v3324 = vunpack.c.l.b16 %v3258
        %v3325 = vpack.c.b16 %v3294, %v3293
        %v3326 = vpack.c.b16 %v3296, %v3295
        %v3327 = vpack.c.b16 %v3298, %v3297
        %v3328 = vpack.c.b16 %v3300, %v3299
        %v3329 = vpack.c.b16 %v3302, %v3301
        %v3330 = vpack.c.b16 %v3304, %v3303
        %v3331 = vpack.c.b16 %v3306, %v3305
        %v3332 = vpack.c.b16 %v3308, %v3307
        %v3333 = vpack.c.b16 %v3310, %v3309
        %v3334 = vpack.c.b16 %v3312, %v3311
        %v3335 = vpack.c.b16 %v3314, %v3313
        %v3336 = vpack.c.b16 %v3316, %v3315
        %v3337 = vpack.c.b16 %v3318, %v3317
        %v3338 = vpack.c.b16 %v3320, %v3319
        %v3339 = vpack.c.b16 %v3322, %v3321
        %v3340 = vpack.c.b16 %v3324, %v3323
        %v3342 = vsel %vm702, %v3325, 0
        %v3345 = vsel %vm702, %v3326, 0
        %v3348 = vsel %vm702, %v3327, 0
        %v3351 = vsel %vm702, %v3328, 0
        %v3354 = vsel %vm702, %v3329, 0
        %v3357 = vsel %vm702, %v3330, 0
        %v3360 = vsel %vm702, %v3331, 0
        %v3363 = vsel %vm702, %v3332, 0
        %v3366 = vsel %vm702, %v3333, 0
        %v3369 = vsel %vm702, %v3334, 0
        %v3372 = vsel %vm702, %v3335, 0
        %v3375 = vsel %vm702, %v3336, 0
        %v3378 = vsel %vm702, %v3337, 0
        %v3381 = vsel %vm702, %v3338, 0
        %v3384 = vsel %vm702, %v3339, 0
        %v3387 = vsel %vm702, %v3340, 0
        %v3390 = vsel %vm751, %v3260, 0
        %3392 = vmatprep.subr.bf16.mxu0 0
        %3393 = vmatpush1.bf16.msra.mxu0 %v3390
        %3394 = vmatprep.subr.bf16.mxu0 0
        %3395 = vmatpush1.bf16.msra.mxu0 0
        %3396 = vmatprep.subr.bf16.mxu0 0
        %3397 = vmatpush1.bf16.msra.mxu0 0
        %3398 = vmatprep.subr.bf16.mxu0 0
        %3399 = vmatpush1.bf16.msra.mxu0 0
        %3400 = vmatprep.subr.bf16.mxu0 0
        %3401 = vmatpush1.bf16.msra.mxu0 0
        %3402 = vmatprep.subr.bf16.mxu0 0
        %3403 = vmatpush1.bf16.msra.mxu0 0
        %3404 = vmatprep.subr.bf16.mxu0 0
        %3405 = vmatpush1.bf16.msra.mxu0 0
        %3406 = vmatprep.subr.bf16.mxu0 0
        %3407 = vmatpush1.bf16.msra.mxu0 0
        %3408 = vmatprep.subr.bf16.mxu0 0
        %3409 = vmatpush1.bf16.msra.mxu0 0
        %3410 = vmatprep.subr.bf16.mxu0 0
        %3411 = vmatpush1.bf16.msra.mxu0 0
        %3412 = vmatprep.subr.bf16.mxu0 0
        %3413 = vmatpush1.bf16.msra.mxu0 0
        %3414 = vmatprep.subr.bf16.mxu0 0
        %3415 = vmatpush1.bf16.msra.mxu0 0
        %3416 = vmatprep.subr.bf16.mxu0 0
        %3417 = vmatpush1.bf16.msra.mxu0 0
        %3418 = vmatprep.subr.bf16.mxu0 0
        %3419 = vmatpush1.bf16.msra.mxu0 0
        %3420 = vmatprep.subr.bf16.mxu0 0
        %3421 = vmatpush1.bf16.msra.mxu0 0
        %3422 = vmatprep.subr.bf16.mxu0 0
        %3423 = vmatpush1.bf16.msra.mxu0 0
        %3424 = vmatprep.mubr.bf16.mxu0 0
        %3425 = vmatmul.mubr.bf16.gmra.mrb[0].mxu0 %v3342
        %v3426 = vpop.f32.mrb[0].mxu0
        %v3427 = vadd.f32 0.0, %v3426
        %v3428 = vpop.f32.mrb[0].mxu0
        %v3429 = vpop.f32.mrb[0].mxu0
        %v3430 = vadd.f32 0.0, %v3429
        %v3431 = vpop.f32.mrb[0].mxu0
        %3432 = vmatprep.mubr.bf16.mxu0 0
        %3433 = vmatmul.mubr.bf16.gmra.mrb[0].mxu0 %v3345
        %v3434 = vpop.f32.mrb[0].mxu0
        %v3435 = vadd.f32 0.0, %v3434
        %v3436 = vpop.f32.mrb[0].mxu0
        %v3437 = vpop.f32.mrb[0].mxu0
        %v3438 = vadd.f32 0.0, %v3437
        %v3439 = vpop.f32.mrb[0].mxu0
        %3440 = vmatprep.mubr.bf16.mxu0 0
        %3441 = vmatmul.mubr.bf16.gmra.mrb[0].mxu0 %v3348
        %v3442 = vpop.f32.mrb[0].mxu0
        %v3443 = vadd.f32 0.0, %v3442
        %v3444 = vpop.f32.mrb[0].mxu0
        %v3445 = vpop.f32.mrb[0].mxu0
        %v3446 = vadd.f32 0.0, %v3445
        %v3447 = vpop.f32.mrb[0].mxu0
        %3448 = vmatprep.mubr.bf16.mxu0 0
        %3449 = vmatmul.mubr.bf16.gmra.mrb[0].mxu0 %v3351
        %v3450 = vpop.f32.mrb[0].mxu0
        %v3451 = vadd.f32 0.0, %v3450
        %v3452 = vpop.f32.mrb[0].mxu0
        %v3453 = vpop.f32.mrb[0].mxu0
        %v3454 = vadd.f32 0.0, %v3453
        %v3455 = vpop.f32.mrb[0].mxu0
        %3456 = vmatprep.mubr.bf16.mxu0 0
        %3457 = vmatmul.mubr.bf16.gmra.mrb[0].mxu0 %v3354
        %v3458 = vpop.f32.mrb[0].mxu0
        %v3459 = vadd.f32 0.0, %v3458
        %v3460 = vpop.f32.mrb[0].mxu0
        %v3461 = vpop.f32.mrb[0].mxu0
        %v3462 = vadd.f32 0.0, %v3461
        %v3463 = vpop.f32.mrb[0].mxu0
        %3464 = vmatprep.mubr.bf16.mxu0 0
        %3465 = vmatmul.mubr.bf16.gmra.mrb[0].mxu0 %v3357
        %v3466 = vpop.f32.mrb[0].mxu0
        %v3467 = vadd.f32 0.0, %v3466
        %v3468 = vpop.f32.mrb[0].mxu0
        %v3469 = vpop.f32.mrb[0].mxu0
        %v3470 = vadd.f32 0.0, %v3469
        %v3471 = vpop.f32.mrb[0].mxu0
        %3472 = vmatprep.mubr.bf16.mxu0 0
        %3473 = vmatmul.mubr.bf16.gmra.mrb[0].mxu0 %v3360
        %v3474 = vpop.f32.mrb[0].mxu0
        %v3475 = vadd.f32 0.0, %v3474
        %v3476 = vpop.f32.mrb[0].mxu0
        %v3477 = vpop.f32.mrb[0].mxu0
        %v3478 = vadd.f32 0.0, %v3477
        %v3479 = vpop.f32.mrb[0].mxu0
        %3480 = vmatprep.mubr.bf16.mxu0 0
        %3481 = vmatmul.mubr.bf16.gmra.mrb[0].mxu0 %v3363
        %v3482 = vpop.f32.mrb[0].mxu0
        %v3483 = vadd.f32 0.0, %v3482
        %v3484 = vpop.f32.mrb[0].mxu0
        %v3485 = vpop.f32.mrb[0].mxu0
        %v3486 = vadd.f32 0.0, %v3485
        %v3487 = vpop.f32.mrb[0].mxu0
        %3488 = vmatprep.mubr.bf16.mxu0 0
        %3489 = vmatmul.mubr.bf16.gmra.mrb[0].mxu0 %v3366
        %v3490 = vpop.f32.mrb[0].mxu0
        %v3491 = vadd.f32 0.0, %v3490
        %v3492 = vpop.f32.mrb[0].mxu0
        %v3493 = vpop.f32.mrb[0].mxu0
        %v3494 = vadd.f32 0.0, %v3493
        %v3495 = vpop.f32.mrb[0].mxu0
        %3496 = vmatprep.mubr.bf16.mxu0 0
        %3497 = vmatmul.mubr.bf16.gmra.mrb[0].mxu0 %v3369
        %v3498 = vpop.f32.mrb[0].mxu0
        %v3499 = vadd.f32 0.0, %v3498
        %v3500 = vpop.f32.mrb[0].mxu0
        %v3501 = vpop.f32.mrb[0].mxu0
        %v3502 = vadd.f32 0.0, %v3501
        %v3503 = vpop.f32.mrb[0].mxu0
        %3504 = vmatprep.mubr.bf16.mxu0 0
        %3505 = vmatmul.mubr.bf16.gmra.mrb[0].mxu0 %v3372
        %v3506 = vpop.f32.mrb[0].mxu0
        %v3507 = vadd.f32 0.0, %v3506
        %v3508 = vpop.f32.mrb[0].mxu0
        %v3509 = vpop.f32.mrb[0].mxu0
        %v3510 = vadd.f32 0.0, %v3509
        %v3511 = vpop.f32.mrb[0].mxu0
        %3512 = vmatprep.mubr.bf16.mxu0 0
        %3513 = vmatmul.mubr.bf16.gmra.mrb[0].mxu0 %v3375
        %v3514 = vpop.f32.mrb[0].mxu0
        %v3515 = vadd.f32 0.0, %v3514
        %v3516 = vpop.f32.mrb[0].mxu0
        %v3517 = vpop.f32.mrb[0].mxu0
        %v3518 = vadd.f32 0.0, %v3517
        %v3519 = vpop.f32.mrb[0].mxu0
        %3520 = vmatprep.mubr.bf16.mxu0 0
        %3521 = vmatmul.mubr.bf16.gmra.mrb[0].mxu0 %v3378
        %v3522 = vpop.f32.mrb[0].mxu0
        %v3523 = vadd.f32 0.0, %v3522
        %v3524 = vpop.f32.mrb[0].mxu0
        %v3525 = vpop.f32.mrb[0].mxu0
        %v3526 = vadd.f32 0.0, %v3525
        %v3527 = vpop.f32.mrb[0].mxu0
        %3528 = vmatprep.mubr.bf16.mxu0 0
        %3529 = vmatmul.mubr.bf16.gmra.mrb[0].mxu0 %v3381
        %v3530 = vpop.f32.mrb[0].mxu0
        %v3531 = vadd.f32 0.0, %v3530
        %v3532 = vpop.f32.mrb[0].mxu0
        %v3533 = vpop.f32.mrb[0].mxu0
        %v3534 = vadd.f32 0.0, %v3533
        %v3535 = vpop.f32.mrb[0].mxu0
        %3536 = vmatprep.mubr.bf16.mxu0 0
        %3537 = vmatmul.mubr.bf16.gmra.mrb[0].mxu0 %v3384
        %v3538 = vpop.f32.mrb[0].mxu0
        %v3539 = vadd.f32 0.0, %v3538
        %v3540 = vpop.f32.mrb[0].mxu0
        %v3541 = vpop.f32.mrb[0].mxu0
        %v3542 = vadd.f32 0.0, %v3541
        %v3543 = vpop.f32.mrb[0].mxu0
        %3544 = vmatprep.mubr.bf16.mxu0 0
        %3545 = vmatmul.mubr.bf16.gmra.mrb[0].mxu0 %v3387
        %v3546 = vpop.f32.mrb[0].mxu0
        %v3547 = vadd.f32 0.0, %v3546
        %v3548 = vpop.f32.mrb[0].mxu0
        %v3549 = vpop.f32.mrb[0].mxu0
        %v3550 = vadd.f32 0.0, %v3549
        %v3551 = vpop.f32.mrb[0].mxu0
        %3552 = vdwg.mxu0
        %v3553 = vadd.f32 %v3191, %v3427
        %v3554 = vadd.f32 %v3192, %v3430
        %v3555 = vadd.f32 %v3193, %v3435
        %v3556 = vadd.f32 %v3194, %v3438
        %v3557 = vadd.f32 %v3195, %v3443
        %v3558 = vadd.f32 %v3196, %v3446
        %v3559 = vadd.f32 %v3197, %v3451
        %v3560 = vadd.f32 %v3198, %v3454
        %v3561 = vadd.f32 %v3199, %v3459
        %v3562 = vadd.f32 %v3200, %v3462
        %v3563 = vadd.f32 %v3201, %v3467
        %v3564 = vadd.f32 %v3202, %v3470
        %v3565 = vadd.f32 %v3203, %v3475
        %v3566 = vadd.f32 %v3204, %v3478
        %v3567 = vadd.f32 %v3205, %v3483
        %v3568 = vadd.f32 %v3206, %v3486
        %v3569 = vadd.f32 %v3207, %v3491
        %v3570 = vadd.f32 %v3208, %v3494
        %v3571 = vadd.f32 %v3209, %v3499
        %v3572 = vadd.f32 %v3210, %v3502
        %v3573 = vadd.f32 %v3211, %v3507
        %v3574 = vadd.f32 %v3212, %v3510
        %v3575 = vadd.f32 %v3213, %v3515
        %v3576 = vadd.f32 %v3214, %v3518
        %v3577 = vadd.f32 %v3215, %v3523
        %v3578 = vadd.f32 %v3216, %v3526
        %v3579 = vadd.f32 %v3217, %v3531
        %v3580 = vadd.f32 %v3218, %v3534
        %v3581 = vadd.f32 %v3219, %v3539
        %v3582 = vadd.f32 %v3220, %v3542
        %v3583 = vadd.f32 %v3221, %v3547
        %v3584 = vadd.f32 %v3222, %v3550
        %v3585 = vld [vmem:[%s3226] sm:$0xf]
        %v3586 = vld [vmem:[%s3226 + $0x4] sm:$0xf]
        %v3587 = vld [vmem:[%s3226 + $0x8] sm:$0x1]
        %v3588 = vld [vmem:[%s3226 + $0xc] sm:$0xf]
        %v3589 = vld [vmem:[%s3226 + $0x10] sm:$0xf]
        %v3590 = vld [vmem:[%s3226 + $0x14] sm:$0x1]
        %v3591 = vld [vmem:[%s3226 + $0x18] sm:$0xf]
        %v3592 = vld [vmem:[%s3226 + $0x1c] sm:$0xf]
        %v3593 = vld [vmem:[%s3226 + $0x20] sm:$0x1]
        %v3594 = vld [vmem:[%s3226 + $0x24] sm:$0xf]
        %v3595 = vld [vmem:[%s3226 + $0x28] sm:$0xf]
        %v3596 = vld [vmem:[%s3226 + $0x2c] sm:$0x1]
        %v3597 = vld [vmem:[%s3226 + $0x30] sm:$0xf]
        %v3598 = vld [vmem:[%s3226 + $0x34] sm:$0xf]
        %v3599 = vld [vmem:[%s3226 + $0x38] sm:$0x1]
        %v3600 = vld [vmem:[%s3226 + $0x3c] sm:$0xf]
        %v3601 = vld [vmem:[%s3226 + $0x40] sm:$0xf]
        %v3602 = vld [vmem:[%s3226 + $0x44] sm:$0x1]
        %v3603 = vld [vmem:[%s3226 + $0x48] sm:$0xf]
        %v3604 = vld [vmem:[%s3226 + $0x4c] sm:$0xf]
        %v3605 = vld [vmem:[%s3226 + $0x50] sm:$0x1]
        %v3606 = vld [vmem:[%s3226 + $0x54] sm:$0xf]
        %v3607 = vld [vmem:[%s3226 + $0x58] sm:$0xf]
        %v3608 = vld [vmem:[%s3226 + $0x5c] sm:$0x1]
        %v3609 = vld [vmem:[%s3226 + $0x60] sm:$0xf]
        %v3610 = vld [vmem:[%s3226 + $0x64] sm:$0xf]
        %v3611 = vld [vmem:[%s3226 + $0x68] sm:$0x1]
        %v3612 = vld [vmem:[%s3226 + $0x6c] sm:$0xf]
        %v3613 = vld [vmem:[%s3226 + $0x70] sm:$0xf]
        %v3614 = vld [vmem:[%s3226 + $0x74] sm:$0x1]
        %v3615 = vld [vmem:[%s3226 + $0x78] sm:$0xf]
        %v3616 = vld [vmem:[%s3226 + $0x7c] sm:$0xf]
        %v3617 = vld [vmem:[%s3226 + $0x80] sm:$0x1]
        %v3618 = vld [vmem:[%s3226 + $0x84] sm:$0xf]
        %v3619 = vld [vmem:[%s3226 + $0x88] sm:$0xf]
        %v3620 = vld [vmem:[%s3226 + $0x8c] sm:$0x1]
        %v3621 = vld [vmem:[%s3226 + $0x90] sm:$0xf]
        %v3622 = vld [vmem:[%s3226 + $0x94] sm:$0xf]
        %v3623 = vld [vmem:[%s3226 + $0x98] sm:$0x1]
        %v3624 = vld [vmem:[%s3226 + $0x9c] sm:$0xf]
        %v3625 = vld [vmem:[%s3226 + $0xa0] sm:$0xf]
        %v3626 = vld [vmem:[%s3226 + $0xa4] sm:$0x1]
        %v3627 = vld [vmem:[%s3226 + $0xa8] sm:$0xf]
        %v3628 = vld [vmem:[%s3226 + $0xac] sm:$0xf]
        %v3629 = vld [vmem:[%s3226 + $0xb0] sm:$0x1]
        %v3630 = vld [vmem:[%s3226 + $0xb4] sm:$0xf]
        %v3631 = vld [vmem:[%s3226 + $0xb8] sm:$0xf]
        %v3632 = vld [vmem:[%s3226 + $0xbc] sm:$0x1]
        %v3634 = vshrl.u32 %v3585, 16
        %v3636 = vrot.slane %v3634, 4
        %v3637 = vshll.u32 %v3585, 16
        %v3639 = vrot.slane %v3637, 5
        %v3640 = vor.u32 %v3636, %v3639
        %v3641 = vrot.slane %v3640, 4
        %v3643 = vshll.u32 %v3586, 16
        %v3645 = vrot.slane %v3643, 5
        %v3646 = vsel %vm267, %v3641, %v3645
        %v3647 = vshrl.u32 %v3586, 16
        %v3649 = vrot.slane %v3647, 4
        %v3650 = vor.u32 %v3649, %v3645
        %v3651 = vrot.slane %v3650, 4
        %v3653 = vshll.u32 %v3587, 16
        %v3655 = vrot.slane %v3653, 5
        %v3656 = vsel %vm267, %v3651, %v3655
        %v3658 = vshrl.u32 %v3588, 16
        %v3660 = vrot.slane %v3658, 4
        %v3661 = vshll.u32 %v3588, 16
        %v3663 = vrot.slane %v3661, 5
        %v3664 = vor.u32 %v3660, %v3663
        %v3665 = vrot.slane %v3664, 4
        %v3667 = vshll.u32 %v3589, 16
        %v3669 = vrot.slane %v3667, 5
        %v3670 = vsel %vm267, %v3665, %v3669
        %v3671 = vshrl.u32 %v3589, 16
        %v3673 = vrot.slane %v3671, 4
        %v3674 = vor.u32 %v3673, %v3669
        %v3675 = vrot.slane %v3674, 4
        %v3677 = vshll.u32 %v3590, 16
        %v3679 = vrot.slane %v3677, 5
        %v3680 = vsel %vm267, %v3675, %v3679
        %v3682 = vshrl.u32 %v3591, 16
        %v3684 = vrot.slane %v3682, 4
        %v3685 = vshll.u32 %v3591, 16
        %v3687 = vrot.slane %v3685, 5
        %v3688 = vor.u32 %v3684, %v3687
        %v3689 = vrot.slane %v3688, 4
        %v3691 = vshll.u32 %v3592, 16
        %v3693 = vrot.slane %v3691, 5
        %v3694 = vsel %vm267, %v3689, %v3693
        %v3695 = vshrl.u32 %v3592, 16
        %v3697 = vrot.slane %v3695, 4
        %v3698 = vor.u32 %v3697, %v3693
        %v3699 = vrot.slane %v3698, 4
        %v3701 = vshll.u32 %v3593, 16
        %v3703 = vrot.slane %v3701, 5
        %v3704 = vsel %vm267, %v3699, %v3703
        %v3706 = vshrl.u32 %v3594, 16
        %v3708 = vrot.slane %v3706, 4
        %v3709 = vshll.u32 %v3594, 16
        %v3711 = vrot.slane %v3709, 5
        %v3712 = vor.u32 %v3708, %v3711
        %v3713 = vrot.slane %v3712, 4
        %v3715 = vshll.u32 %v3595, 16
        %v3717 = vrot.slane %v3715, 5
        %v3718 = vsel %vm267, %v3713, %v3717
        %v3719 = vshrl.u32 %v3595, 16
        %v3721 = vrot.slane %v3719, 4
        %v3722 = vor.u32 %v3721, %v3717
        %v3723 = vrot.slane %v3722, 4
        %v3725 = vshll.u32 %v3596, 16
        %v3727 = vrot.slane %v3725, 5
        %v3728 = vsel %vm267, %v3723, %v3727
        %v3730 = vshrl.u32 %v3597, 16
        %v3732 = vrot.slane %v3730, 4
        %v3733 = vshll.u32 %v3597, 16
        %v3735 = vrot.slane %v3733, 5
        %v3736 = vor.u32 %v3732, %v3735
        %v3737 = vrot.slane %v3736, 4
        %v3739 = vshll.u32 %v3598, 16
        %v3741 = vrot.slane %v3739, 5
        %v3742 = vsel %vm267, %v3737, %v3741
        %v3743 = vshrl.u32 %v3598, 16
        %v3745 = vrot.slane %v3743, 4
        %v3746 = vor.u32 %v3745, %v3741
        %v3747 = vrot.slane %v3746, 4
        %v3749 = vshll.u32 %v3599, 16
        %v3751 = vrot.slane %v3749, 5
        %v3752 = vsel %vm267, %v3747, %v3751
        %v3754 = vshrl.u32 %v3600, 16
        %v3756 = vrot.slane %v3754, 4
        %v3757 = vshll.u32 %v3600, 16
        %v3759 = vrot.slane %v3757, 5
        %v3760 = vor.u32 %v3756, %v3759
        %v3761 = vrot.slane %v3760, 4
        %v3763 = vshll.u32 %v3601, 16
        %v3765 = vrot.slane %v3763, 5
        %v3766 = vsel %vm267, %v3761, %v3765
        %v3767 = vshrl.u32 %v3601, 16
        %v3769 = vrot.slane %v3767, 4
        %v3770 = vor.u32 %v3769, %v3765
        %v3771 = vrot.slane %v3770, 4
        %v3773 = vshll.u32 %v3602, 16
        %v3775 = vrot.slane %v3773, 5
        %v3776 = vsel %vm267, %v3771, %v3775
        %v3778 = vshrl.u32 %v3603, 16
        %v3780 = vrot.slane %v3778, 4
        %v3781 = vshll.u32 %v3603, 16
        %v3783 = vrot.slane %v3781, 5
        %v3784 = vor.u32 %v3780, %v3783
        %v3785 = vrot.slane %v3784, 4
        %v3787 = vshll.u32 %v3604, 16
        %v3789 = vrot.slane %v3787, 5
        %v3790 = vsel %vm267, %v3785, %v3789
        %v3791 = vshrl.u32 %v3604, 16
        %v3793 = vrot.slane %v3791, 4
        %v3794 = vor.u32 %v3793, %v3789
        %v3795 = vrot.slane %v3794, 4
        %v3797 = vshll.u32 %v3605, 16
        %v3799 = vrot.slane %v3797, 5
        %v3800 = vsel %vm267, %v3795, %v3799
        %v3802 = vshrl.u32 %v3606, 16
        %v3804 = vrot.slane %v3802, 4
        %v3805 = vshll.u32 %v3606, 16
        %v3807 = vrot.slane %v3805, 5
        %v3808 = vor.u32 %v3804, %v3807
        %v3809 = vrot.slane %v3808, 4
        %v3811 = vshll.u32 %v3607, 16
        %v3813 = vrot.slane %v3811, 5
        %v3814 = vsel %vm267, %v3809, %v3813
        %v3815 = vshrl.u32 %v3607, 16
        %v3817 = vrot.slane %v3815, 4
        %v3818 = vor.u32 %v3817, %v3813
        %v3819 = vrot.slane %v3818, 4
        %v3821 = vshll.u32 %v3608, 16
        %v3823 = vrot.slane %v3821, 5
        %v3824 = vsel %vm267, %v3819, %v3823
        %v3826 = vshrl.u32 %v3609, 16
        %v3828 = vrot.slane %v3826, 4
        %v3829 = vshll.u32 %v3609, 16
        %v3831 = vrot.slane %v3829, 5
        %v3832 = vor.u32 %v3828, %v3831
        %v3833 = vrot.slane %v3832, 4
        %v3835 = vshll.u32 %v3610, 16
        %v3837 = vrot.slane %v3835, 5
        %v3838 = vsel %vm267, %v3833, %v3837
        %v3839 = vshrl.u32 %v3610, 16
        %v3841 = vrot.slane %v3839, 4
        %v3842 = vor.u32 %v3841, %v3837
        %v3843 = vrot.slane %v3842, 4
        %v3845 = vshll.u32 %v3611, 16
        %v3847 = vrot.slane %v3845, 5
        %v3848 = vsel %vm267, %v3843, %v3847
        %v3850 = vshrl.u32 %v3612, 16
        %v3852 = vrot.slane %v3850, 4
        %v3853 = vshll.u32 %v3612, 16
        %v3855 = vrot.slane %v3853, 5
        %v3856 = vor.u32 %v3852, %v3855
        %v3857 = vrot.slane %v3856, 4
        %v3859 = vshll.u32 %v3613, 16
        %v3861 = vrot.slane %v3859, 5
        %v3862 = vsel %vm267, %v3857, %v3861
        %v3863 = vshrl.u32 %v3613, 16
        %v3865 = vrot.slane %v3863, 4
        %v3866 = vor.u32 %v3865, %v3861
        %v3867 = vrot.slane %v3866, 4
        %v3869 = vshll.u32 %v3614, 16
        %v3871 = vrot.slane %v3869, 5
        %v3872 = vsel %vm267, %v3867, %v3871
        %v3874 = vshrl.u32 %v3615, 16
        %v3876 = vrot.slane %v3874, 4
        %v3877 = vshll.u32 %v3615, 16
        %v3879 = vrot.slane %v3877, 5
        %v3880 = vor.u32 %v3876, %v3879
        %v3881 = vrot.slane %v3880, 4
        %v3883 = vshll.u32 %v3616, 16
        %v3885 = vrot.slane %v3883, 5
        %v3886 = vsel %vm267, %v3881, %v3885
        %v3887 = vshrl.u32 %v3616, 16
        %v3889 = vrot.slane %v3887, 4
        %v3890 = vor.u32 %v3889, %v3885
        %v3891 = vrot.slane %v3890, 4
        %v3893 = vshll.u32 %v3617, 16
        %v3895 = vrot.slane %v3893, 5
        %v3896 = vsel %vm267, %v3891, %v3895
        %v3898 = vshrl.u32 %v3618, 16
        %v3900 = vrot.slane %v3898, 4
        %v3901 = vshll.u32 %v3618, 16
        %v3903 = vrot.slane %v3901, 5
        %v3904 = vor.u32 %v3900, %v3903
        %v3905 = vrot.slane %v3904, 4
        %v3907 = vshll.u32 %v3619, 16
        %v3909 = vrot.slane %v3907, 5
        %v3910 = vsel %vm267, %v3905, %v3909
        %v3911 = vshrl.u32 %v3619, 16
        %v3913 = vrot.slane %v3911, 4
        %v3914 = vor.u32 %v3913, %v3909
        %v3915 = vrot.slane %v3914, 4
        %v3917 = vshll.u32 %v3620, 16
        %v3919 = vrot.slane %v3917, 5
        %v3920 = vsel %vm267, %v3915, %v3919
        %v3922 = vshrl.u32 %v3621, 16
        %v3924 = vrot.slane %v3922, 4
        %v3925 = vshll.u32 %v3621, 16
        %v3927 = vrot.slane %v3925, 5
        %v3928 = vor.u32 %v3924, %v3927
        %v3929 = vrot.slane %v3928, 4
        %v3931 = vshll.u32 %v3622, 16
        %v3933 = vrot.slane %v3931, 5
        %v3934 = vsel %vm267, %v3929, %v3933
        %v3935 = vshrl.u32 %v3622, 16
        %v3937 = vrot.slane %v3935, 4
        %v3938 = vor.u32 %v3937, %v3933
        %v3939 = vrot.slane %v3938, 4
        %v3941 = vshll.u32 %v3623, 16
        %v3943 = vrot.slane %v3941, 5
        %v3944 = vsel %vm267, %v3939, %v3943
        %v3946 = vshrl.u32 %v3624, 16
        %v3948 = vrot.slane %v3946, 4
        %v3949 = vshll.u32 %v3624, 16
        %v3951 = vrot.slane %v3949, 5
        %v3952 = vor.u32 %v3948, %v3951
        %v3953 = vrot.slane %v3952, 4
        %v3955 = vshll.u32 %v3625, 16
        %v3957 = vrot.slane %v3955, 5
        %v3958 = vsel %vm267, %v3953, %v3957
        %v3959 = vshrl.u32 %v3625, 16
        %v3961 = vrot.slane %v3959, 4
        %v3962 = vor.u32 %v3961, %v3957
        %v3963 = vrot.slane %v3962, 4
        %v3965 = vshll.u32 %v3626, 16
        %v3967 = vrot.slane %v3965, 5
        %v3968 = vsel %vm267, %v3963, %v3967
        %v3970 = vshrl.u32 %v3627, 16
        %v3972 = vrot.slane %v3970, 4
        %v3973 = vshll.u32 %v3627, 16
        %v3975 = vrot.slane %v3973, 5
        %v3976 = vor.u32 %v3972, %v3975
        %v3977 = vrot.slane %v3976, 4
        %v3979 = vshll.u32 %v3628, 16
        %v3981 = vrot.slane %v3979, 5
        %v3982 = vsel %vm267, %v3977, %v3981
        %v3983 = vshrl.u32 %v3628, 16
        %v3985 = vrot.slane %v3983, 4
        %v3986 = vor.u32 %v3985, %v3981
        %v3987 = vrot.slane %v3986, 4
        %v3989 = vshll.u32 %v3629, 16
        %v3991 = vrot.slane %v3989, 5
        %v3992 = vsel %vm267, %v3987, %v3991
        %v3994 = vshrl.u32 %v3630, 16
        %v3996 = vrot.slane %v3994, 4
        %v3997 = vshll.u32 %v3630, 16
        %v3999 = vrot.slane %v3997, 5
        %v4000 = vor.u32 %v3996, %v3999
        %v4001 = vrot.slane %v4000, 4
        %v4003 = vshll.u32 %v3631, 16
        %v4005 = vrot.slane %v4003, 5
        %v4006 = vsel %vm267, %v4001, %v4005
        %v4007 = vshrl.u32 %v3631, 16
        %v4009 = vrot.slane %v4007, 4
        %v4010 = vor.u32 %v4009, %v4005
        %v4011 = vrot.slane %v4010, 4
        %v4013 = vshll.u32 %v3632, 16
        %v4015 = vrot.slane %v4013, 5
        %v4016 = vsel %vm267, %v4011, %v4015
        %s4017 = scalar_lea.vmem %s1, 14
        %v4018 = vld [vmem:[%s4017] sm:$0x3]
        %v4019 = vunpack.c.l.b16 %v3646
        %v4020 = vunpack.c.l.b16 %v3656
        %v4021 = vunpack.c.l.b16 %v3670
        %v4022 = vunpack.c.l.b16 %v3680
        %v4023 = vunpack.c.l.b16 %v3694
        %v4024 = vunpack.c.l.b16 %v3704
        %v4025 = vunpack.c.l.b16 %v3718
        %v4026 = vunpack.c.l.b16 %v3728
        %v4027 = vunpack.c.l.b16 %v3742
        %v4028 = vunpack.c.l.b16 %v3752
        %v4029 = vunpack.c.l.b16 %v3766
        %v4030 = vunpack.c.l.b16 %v3776
        %v4031 = vunpack.c.l.b16 %v3790
        %v4032 = vunpack.c.l.b16 %v3800
        %v4033 = vunpack.c.l.b16 %v3814
        %v4034 = vunpack.c.l.b16 %v3824
        %v4035 = vunpack.c.l.b16 %v3838
        %v4036 = vunpack.c.l.b16 %v3848
        %v4037 = vunpack.c.l.b16 %v3862
        %v4038 = vunpack.c.l.b16 %v3872
        %v4039 = vunpack.c.l.b16 %v3886
        %v4040 = vunpack.c.l.b16 %v3896
        %v4041 = vunpack.c.l.b16 %v3910
        %v4042 = vunpack.c.l.b16 %v3920
        %v4043 = vunpack.c.l.b16 %v3934
        %v4044 = vunpack.c.l.b16 %v3944
        %v4045 = vunpack.c.l.b16 %v3958
        %v4046 = vunpack.c.l.b16 %v3968
        %v4047 = vunpack.c.l.b16 %v3982
        %v4048 = vunpack.c.l.b16 %v3992
        %v4049 = vunpack.c.l.b16 %v4006
        %v4050 = vunpack.c.l.b16 %v4016
        %v4051 = vpack.c.b16 %v4020, %v4019
        %v4052 = vpack.c.b16 %v4022, %v4021
        %v4053 = vpack.c.b16 %v4024, %v4023
        %v4054 = vpack.c.b16 %v4026, %v4025
        %v4055 = vpack.c.b16 %v4028, %v4027
        %v4056 = vpack.c.b16 %v4030, %v4029
        %v4057 = vpack.c.b16 %v4032, %v4031
        %v4058 = vpack.c.b16 %v4034, %v4033
        %v4059 = vpack.c.b16 %v4036, %v4035
        %v4060 = vpack.c.b16 %v4038, %v4037
        %v4061 = vpack.c.b16 %v4040, %v4039
        %v4062 = vpack.c.b16 %v4042, %v4041
        %v4063 = vpack.c.b16 %v4044, %v4043
        %v4064 = vpack.c.b16 %v4046, %v4045
        %v4065 = vpack.c.b16 %v4048, %v4047
        %v4066 = vpack.c.b16 %v4050, %v4049
        %v4068 = vsel %vm702, %v4051, 0
        %v4071 = vsel %vm702, %v4052, 0
        %v4074 = vsel %vm702, %v4053, 0
        %v4077 = vsel %vm702, %v4054, 0
        %v4080 = vsel %vm702, %v4055, 0
        %v4083 = vsel %vm702, %v4056, 0
        %v4086 = vsel %vm702, %v4057, 0
        %v4089 = vsel %vm702, %v4058, 0
        %v4092 = vsel %vm702, %v4059, 0
        %v4095 = vsel %vm702, %v4060, 0
        %v4098 = vsel %vm702, %v4061, 0
        %v4101 = vsel %vm702, %v4062, 0
        %v4104 = vsel %vm702, %v4063, 0
        %v4107 = vsel %vm702, %v4064, 0
        %v4110 = vsel %vm702, %v4065, 0
        %v4113 = vsel %vm702, %v4066, 0
        %v4116 = vsel %vm751, %v4018, 0
        %4118 = vmatprep.subr.bf16.mxu0 0
        %4119 = vmatpush1.bf16.msra.mxu0 %v4116
        %4120 = vmatprep.subr.bf16.mxu0 0
        %4121 = vmatpush1.bf16.msra.mxu0 0
        %4122 = vmatprep.subr.bf16.mxu0 0
        %4123 = vmatpush1.bf16.msra.mxu0 0
        %4124 = vmatprep.subr.bf16.mxu0 0
        %4125 = vmatpush1.bf16.msra.mxu0 0
        %4126 = vmatprep.subr.bf16.mxu0 0
        %4127 = vmatpush1.bf16.msra.mxu0 0
        %4128 = vmatprep.subr.bf16.mxu0 0
        %4129 = vmatpush1.bf16.msra.mxu0 0
        %4130 = vmatprep.subr.bf16.mxu0 0
        %4131 = vmatpush1.bf16.msra.mxu0 0
        %4132 = vmatprep.subr.bf16.mxu0 0
        %4133 = vmatpush1.bf16.msra.mxu0 0
        %4134 = vmatprep.subr.bf16.mxu0 0
        %4135 = vmatpush1.bf16.msra.mxu0 0
        %4136 = vmatprep.subr.bf16.mxu0 0
        %4137 = vmatpush1.bf16.msra.mxu0 0
        %4138 = vmatprep.subr.bf16.mxu0 0
        %4139 = vmatpush1.bf16.msra.mxu0 0
        %4140 = vmatprep.subr.bf16.mxu0 0
        %4141 = vmatpush1.bf16.msra.mxu0 0
        %4142 = vmatprep.subr.bf16.mxu0 0
        %4143 = vmatpush1.bf16.msra.mxu0 0
        %4144 = vmatprep.subr.bf16.mxu0 0
        %4145 = vmatpush1.bf16.msra.mxu0 0
        %4146 = vmatprep.subr.bf16.mxu0 0
        %4147 = vmatpush1.bf16.msra.mxu0 0
        %4148 = vmatprep.subr.bf16.mxu0 0
        %4149 = vmatpush1.bf16.msra.mxu0 0
        %4150 = vmatprep.mubr.bf16.mxu0 0
        %4151 = vmatmul.mubr.bf16.gmra.mrb[0].mxu0 %v4068
        %v4152 = vpop.f32.mrb[0].mxu0
        %v4153 = vadd.f32 0.0, %v4152
        %v4154 = vpop.f32.mrb[0].mxu0
        %v4155 = vpop.f32.mrb[0].mxu0
        %v4156 = vadd.f32 0.0, %v4155
        %v4157 = vpop.f32.mrb[0].mxu0
        %4158 = vmatprep.mubr.bf16.mxu0 0
        %4159 = vmatmul.mubr.bf16.gmra.mrb[0].mxu0 %v4071
        %v4160 = vpop.f32.mrb[0].mxu0
        %v4161 = vadd.f32 0.0, %v4160
        %v4162 = vpop.f32.mrb[0].mxu0
        %v4163 = vpop.f32.mrb[0].mxu0
        %v4164 = vadd.f32 0.0, %v4163
        %v4165 = vpop.f32.mrb[0].mxu0
        %4166 = vmatprep.mubr.bf16.mxu0 0
        %4167 = vmatmul.mubr.bf16.gmra.mrb[0].mxu0 %v4074
        %v4168 = vpop.f32.mrb[0].mxu0
        %v4169 = vadd.f32 0.0, %v4168
        %v4170 = vpop.f32.mrb[0].mxu0
        %v4171 = vpop.f32.mrb[0].mxu0
        %v4172 = vadd.f32 0.0, %v4171
        %v4173 = vpop.f32.mrb[0].mxu0
        %4174 = vmatprep.mubr.bf16.mxu0 0
        %4175 = vmatmul.mubr.bf16.gmra.mrb[0].mxu0 %v4077
        %v4176 = vpop.f32.mrb[0].mxu0
        %v4177 = vadd.f32 0.0, %v4176
        %v4178 = vpop.f32.mrb[0].mxu0
        %v4179 = vpop.f32.mrb[0].mxu0
        %v4180 = vadd.f32 0.0, %v4179
        %v4181 = vpop.f32.mrb[0].mxu0
        %4182 = vmatprep.mubr.bf16.mxu0 0
        %4183 = vmatmul.mubr.bf16.gmra.mrb[0].mxu0 %v4080
        %v4184 = vpop.f32.mrb[0].mxu0
        %v4185 = vadd.f32 0.0, %v4184
        %v4186 = vpop.f32.mrb[0].mxu0
        %v4187 = vpop.f32.mrb[0].mxu0
        %v4188 = vadd.f32 0.0, %v4187
        %v4189 = vpop.f32.mrb[0].mxu0
        %4190 = vmatprep.mubr.bf16.mxu0 0
        %4191 = vmatmul.mubr.bf16.gmra.mrb[0].mxu0 %v4083
        %v4192 = vpop.f32.mrb[0].mxu0
        %v4193 = vadd.f32 0.0, %v4192
        %v4194 = vpop.f32.mrb[0].mxu0
        %v4195 = vpop.f32.mrb[0].mxu0
        %v4196 = vadd.f32 0.0, %v4195
        %v4197 = vpop.f32.mrb[0].mxu0
        %4198 = vmatprep.mubr.bf16.mxu0 0
        %4199 = vmatmul.mubr.bf16.gmra.mrb[0].mxu0 %v4086
        %v4200 = vpop.f32.mrb[0].mxu0
        %v4201 = vadd.f32 0.0, %v4200
        %v4202 = vpop.f32.mrb[0].mxu0
        %v4203 = vpop.f32.mrb[0].mxu0
        %v4204 = vadd.f32 0.0, %v4203
        %v4205 = vpop.f32.mrb[0].mxu0
        %4206 = vmatprep.mubr.bf16.mxu0 0
        %4207 = vmatmul.mubr.bf16.gmra.mrb[0].mxu0 %v4089
        %v4208 = vpop.f32.mrb[0].mxu0
        %v4209 = vadd.f32 0.0, %v4208
        %v4210 = vpop.f32.mrb[0].mxu0
        %v4211 = vpop.f32.mrb[0].mxu0
        %v4212 = vadd.f32 0.0, %v4211
        %v4213 = vpop.f32.mrb[0].mxu0
        %4214 = vmatprep.mubr.bf16.mxu0 0
        %4215 = vmatmul.mubr.bf16.gmra.mrb[0].mxu0 %v4092
        %v4216 = vpop.f32.mrb[0].mxu0
        %v4217 = vadd.f32 0.0, %v4216
        %v4218 = vpop.f32.mrb[0].mxu0
        %v4219 = vpop.f32.mrb[0].mxu0
        %v4220 = vadd.f32 0.0, %v4219
        %v4221 = vpop.f32.mrb[0].mxu0
        %4222 = vmatprep.mubr.bf16.mxu0 0
        %4223 = vmatmul.mubr.bf16.gmra.mrb[0].mxu0 %v4095
        %v4224 = vpop.f32.mrb[0].mxu0
        %v4225 = vadd.f32 0.0, %v4224
        %v4226 = vpop.f32.mrb[0].mxu0
        %v4227 = vpop.f32.mrb[0].mxu0
        %v4228 = vadd.f32 0.0, %v4227
        %v4229 = vpop.f32.mrb[0].mxu0
        %4230 = vmatprep.mubr.bf16.mxu0 0
        %4231 = vmatmul.mubr.bf16.gmra.mrb[0].mxu0 %v4098
        %v4232 = vpop.f32.mrb[0].mxu0
        %v4233 = vadd.f32 0.0, %v4232
        %v4234 = vpop.f32.mrb[0].mxu0
        %v4235 = vpop.f32.mrb[0].mxu0
        %v4236 = vadd.f32 0.0, %v4235
        %v4237 = vpop.f32.mrb[0].mxu0
        %4238 = vmatprep.mubr.bf16.mxu0 0
        %4239 = vmatmul.mubr.bf16.gmra.mrb[0].mxu0 %v4101
        %v4240 = vpop.f32.mrb[0].mxu0
        %v4241 = vadd.f32 0.0, %v4240
        %v4242 = vpop.f32.mrb[0].mxu0
        %v4243 = vpop.f32.mrb[0].mxu0
        %v4244 = vadd.f32 0.0, %v4243
        %v4245 = vpop.f32.mrb[0].mxu0
        %4246 = vmatprep.mubr.bf16.mxu0 0
        %4247 = vmatmul.mubr.bf16.gmra.mrb[0].mxu0 %v4104
        %v4248 = vpop.f32.mrb[0].mxu0
        %v4249 = vadd.f32 0.0, %v4248
        %v4250 = vpop.f32.mrb[0].mxu0
        %v4251 = vpop.f32.mrb[0].mxu0
        %v4252 = vadd.f32 0.0, %v4251
        %v4253 = vpop.f32.mrb[0].mxu0
        %4254 = vmatprep.mubr.bf16.mxu0 0
        %4255 = vmatmul.mubr.bf16.gmra.mrb[0].mxu0 %v4107
        %v4256 = vpop.f32.mrb[0].mxu0
        %v4257 = vadd.f32 0.0, %v4256
        %v4258 = vpop.f32.mrb[0].mxu0
        %v4259 = vpop.f32.mrb[0].mxu0
        %v4260 = vadd.f32 0.0, %v4259
        %v4261 = vpop.f32.mrb[0].mxu0
        %4262 = vmatprep.mubr.bf16.mxu0 0
        %4263 = vmatmul.mubr.bf16.gmra.mrb[0].mxu0 %v4110
        %v4264 = vpop.f32.mrb[0].mxu0
        %v4265 = vadd.f32 0.0, %v4264
        %v4266 = vpop.f32.mrb[0].mxu0
        %v4267 = vpop.f32.mrb[0].mxu0
        %v4268 = vadd.f32 0.0, %v4267
        %v4269 = vpop.f32.mrb[0].mxu0
        %4270 = vmatprep.mubr.bf16.mxu0 0
        %4271 = vmatmul.mubr.bf16.gmra.mrb[0].mxu0 %v4113
        %v4272 = vpop.f32.mrb[0].mxu0
        %v4273 = vadd.f32 0.0, %v4272
        %v4274 = vpop.f32.mrb[0].mxu0
        %v4275 = vpop.f32.mrb[0].mxu0
        %v4276 = vadd.f32 0.0, %v4275
        %v4277 = vpop.f32.mrb[0].mxu0
        %4278 = vdwg.mxu0
        %v4279 = vadd.f32 %v3553, %v4153
        %v4280 = vadd.f32 %v3554, %v4156
        %v4281 = vadd.f32 %v3555, %v4161
        %v4282 = vadd.f32 %v3556, %v4164
        %v4283 = vadd.f32 %v3557, %v4169
        %v4284 = vadd.f32 %v3558, %v4172
        %v4285 = vadd.f32 %v3559, %v4177
        %v4286 = vadd.f32 %v3560, %v4180
        %v4287 = vadd.f32 %v3561, %v4185
        %v4288 = vadd.f32 %v3562, %v4188
        %v4289 = vadd.f32 %v3563, %v4193
        %v4290 = vadd.f32 %v3564, %v4196
        %v4291 = vadd.f32 %v3565, %v4201
        %v4292 = vadd.f32 %v3566, %v4204
        %v4293 = vadd.f32 %v3567, %v4209
        %v4294 = vadd.f32 %v3568, %v4212
        %v4295 = vadd.f32 %v3569, %v4217
        %v4296 = vadd.f32 %v3570, %v4220
        %v4297 = vadd.f32 %v3571, %v4225
        %v4298 = vadd.f32 %v3572, %v4228
        %v4299 = vadd.f32 %v3573, %v4233
        %v4300 = vadd.f32 %v3574, %v4236
        %v4301 = vadd.f32 %v3575, %v4241
        %v4302 = vadd.f32 %v3576, %v4244
        %v4303 = vadd.f32 %v3577, %v4249
        %v4304 = vadd.f32 %v3578, %v4252
        %v4305 = vadd.f32 %v3579, %v4257
        %v4306 = vadd.f32 %v3580, %v4260
        %v4307 = vadd.f32 %v3581, %v4265
        %v4308 = vadd.f32 %v3582, %v4268
        %v4309 = vadd.f32 %v3583, %v4273
        %v4310 = vadd.f32 %v3584, %v4276
        %v4311 = vld [vmem:[%s3226] sm:$0xe]
        %v4312 = vld [vmem:[%s3226 + $0xc] sm:$0xe]
        %v4313 = vld [vmem:[%s3226 + $0x18] sm:$0xe]
        %v4314 = vld [vmem:[%s3226 + $0x24] sm:$0xe]
        %v4315 = vld [vmem:[%s3226 + $0x30] sm:$0xe]
        %v4316 = vld [vmem:[%s3226 + $0x3c] sm:$0xe]
        %v4317 = vld [vmem:[%s3226 + $0x48] sm:$0xe]
        %v4318 = vld [vmem:[%s3226 + $0x54] sm:$0xe]
        %v4319 = vld [vmem:[%s3226 + $0x60] sm:$0xe]
        %v4320 = vld [vmem:[%s3226 + $0x6c] sm:$0xe]
        %v4321 = vld [vmem:[%s3226 + $0x78] sm:$0xe]
        %v4322 = vld [vmem:[%s3226 + $0x84] sm:$0xe]
        %v4323 = vld [vmem:[%s3226 + $0x90] sm:$0xe]
        %v4324 = vld [vmem:[%s3226 + $0x9c] sm:$0xe]
        %v4325 = vld [vmem:[%s3226 + $0xa8] sm:$0xe]
        %v4326 = vld [vmem:[%s3226 + $0xb4] sm:$0xe]
        %v4375 = vrot.slane %v4311, 5
        %v4376 = vrot.slane %v4375, 4
        %v4377 = vrot.slane %v3586, 5
        %v4378 = vsel %vm1258, %v4376, %v4377
        %v4379 = vrot.slane %v4377, 4
        %v4380 = vrot.slane %v3587, 5
        %v4381 = vsel %vm1258, %v4379, %v4380
        %v4382 = vrot.slane %v4312, 5
        %v4383 = vrot.slane %v4382, 4
        %v4384 = vrot.slane %v3589, 5
        %v4385 = vsel %vm1258, %v4383, %v4384
        %v4386 = vrot.slane %v4384, 4
        %v4387 = vrot.slane %v3590, 5
        %v4388 = vsel %vm1258, %v4386, %v4387
        %v4389 = vrot.slane %v4313, 5
        %v4390 = vrot.slane %v4389, 4
        %v4391 = vrot.slane %v3592, 5
        %v4392 = vsel %vm1258, %v4390, %v4391
        %v4393 = vrot.slane %v4391, 4
        %v4394 = vrot.slane %v3593, 5
        %v4395 = vsel %vm1258, %v4393, %v4394
        %v4396 = vrot.slane %v4314, 5
        %v4397 = vrot.slane %v4396, 4
        %v4398 = vrot.slane %v3595, 5
        %v4399 = vsel %vm1258, %v4397, %v4398
        %v4400 = vrot.slane %v4398, 4
        %v4401 = vrot.slane %v3596, 5
        %v4402 = vsel %vm1258, %v4400, %v4401
        %v4403 = vrot.slane %v4315, 5
        %v4404 = vrot.slane %v4403, 4
        %v4405 = vrot.slane %v3598, 5
        %v4406 = vsel %vm1258, %v4404, %v4405
        %v4407 = vrot.slane %v4405, 4
        %v4408 = vrot.slane %v3599, 5
        %v4409 = vsel %vm1258, %v4407, %v4408
        %v4410 = vrot.slane %v4316, 5
        %v4411 = vrot.slane %v4410, 4
        %v4412 = vrot.slane %v3601, 5
        %v4413 = vsel %vm1258, %v4411, %v4412
        %v4414 = vrot.slane %v4412, 4
        %v4415 = vrot.slane %v3602, 5
        %v4416 = vsel %vm1258, %v4414, %v4415
        %v4417 = vrot.slane %v4317, 5
        %v4418 = vrot.slane %v4417, 4
        %v4419 = vrot.slane %v3604, 5
        %v4420 = vsel %vm1258, %v4418, %v4419
        %v4421 = vrot.slane %v4419, 4
        %v4422 = vrot.slane %v3605, 5
        %v4423 = vsel %vm1258, %v4421, %v4422
        %v4424 = vrot.slane %v4318, 5
        %v4425 = vrot.slane %v4424, 4
        %v4426 = vrot.slane %v3607, 5
        %v4427 = vsel %vm1258, %v4425, %v4426
        %v4428 = vrot.slane %v4426, 4
        %v4429 = vrot.slane %v3608, 5
        %v4430 = vsel %vm1258, %v4428, %v4429
        %v4431 = vrot.slane %v4319, 5
        %v4432 = vrot.slane %v4431, 4
        %v4433 = vrot.slane %v3610, 5
        %v4434 = vsel %vm1258, %v4432, %v4433
        %v4435 = vrot.slane %v4433, 4
        %v4436 = vrot.slane %v3611, 5
        %v4437 = vsel %vm1258, %v4435, %v4436
        %v4438 = vrot.slane %v4320, 5
        %v4439 = vrot.slane %v4438, 4
        %v4440 = vrot.slane %v3613, 5
        %v4441 = vsel %vm1258, %v4439, %v4440
        %v4442 = vrot.slane %v4440, 4
        %v4443 = vrot.slane %v3614, 5
        %v4444 = vsel %vm1258, %v4442, %v4443
        %v4445 = vrot.slane %v4321, 5
        %v4446 = vrot.slane %v4445, 4
        %v4447 = vrot.slane %v3616, 5
        %v4448 = vsel %vm1258, %v4446, %v4447
        %v4449 = vrot.slane %v4447, 4
        %v4450 = vrot.slane %v3617, 5
        %v4451 = vsel %vm1258, %v4449, %v4450
        %v4452 = vrot.slane %v4322, 5
        %v4453 = vrot.slane %v4452, 4
        %v4454 = vrot.slane %v3619, 5
        %v4455 = vsel %vm1258, %v4453, %v4454
        %v4456 = vrot.slane %v4454, 4
        %v4457 = vrot.slane %v3620, 5
        %v4458 = vsel %vm1258, %v4456, %v4457
        %v4459 = vrot.slane %v4323, 5
        %v4460 = vrot.slane %v4459, 4
        %v4461 = vrot.slane %v3622, 5
        %v4462 = vsel %vm1258, %v4460, %v4461
        %v4463 = vrot.slane %v4461, 4
        %v4464 = vrot.slane %v3623, 5
        %v4465 = vsel %vm1258, %v4463, %v4464
        %v4466 = vrot.slane %v4324, 5
        %v4467 = vrot.slane %v4466, 4
        %v4468 = vrot.slane %v3625, 5
        %v4469 = vsel %vm1258, %v4467, %v4468
        %v4470 = vrot.slane %v4468, 4
        %v4471 = vrot.slane %v3626, 5
        %v4472 = vsel %vm1258, %v4470, %v4471
        %v4473 = vrot.slane %v4325, 5
        %v4474 = vrot.slane %v4473, 4
        %v4475 = vrot.slane %v3628, 5
        %v4476 = vsel %vm1258, %v4474, %v4475
        %v4477 = vrot.slane %v4475, 4
        %v4478 = vrot.slane %v3629, 5
        %v4479 = vsel %vm1258, %v4477, %v4478
        %v4480 = vrot.slane %v4326, 5
        %v4481 = vrot.slane %v4480, 4
        %v4482 = vrot.slane %v3631, 5
        %v4483 = vsel %vm1258, %v4481, %v4482
        %v4484 = vrot.slane %v4482, 4
        %v4485 = vrot.slane %v3632, 5
        %v4486 = vsel %vm1258, %v4484, %v4485
        %s4487 = scalar_lea.vmem %s1, 16
        %v4488 = vld [vmem:[%s4487] sm:$0x3]
        %v4489 = vunpack.c.l.b16 %v4378
        %v4490 = vunpack.c.l.b16 %v4381
        %v4491 = vunpack.c.l.b16 %v4385
        %v4492 = vunpack.c.l.b16 %v4388
        %v4493 = vunpack.c.l.b16 %v4392
        %v4494 = vunpack.c.l.b16 %v4395
        %v4495 = vunpack.c.l.b16 %v4399
        %v4496 = vunpack.c.l.b16 %v4402
        %v4497 = vunpack.c.l.b16 %v4406
        %v4498 = vunpack.c.l.b16 %v4409
        %v4499 = vunpack.c.l.b16 %v4413
        %v4500 = vunpack.c.l.b16 %v4416
        %v4501 = vunpack.c.l.b16 %v4420
        %v4502 = vunpack.c.l.b16 %v4423
        %v4503 = vunpack.c.l.b16 %v4427
        %v4504 = vunpack.c.l.b16 %v4430
        %v4505 = vunpack.c.l.b16 %v4434
        %v4506 = vunpack.c.l.b16 %v4437
        %v4507 = vunpack.c.l.b16 %v4441
        %v4508 = vunpack.c.l.b16 %v4444
        %v4509 = vunpack.c.l.b16 %v4448
        %v4510 = vunpack.c.l.b16 %v4451
        %v4511 = vunpack.c.l.b16 %v4455
        %v4512 = vunpack.c.l.b16 %v4458
        %v4513 = vunpack.c.l.b16 %v4462
        %v4514 = vunpack.c.l.b16 %v4465
        %v4515 = vunpack.c.l.b16 %v4469
        %v4516 = vunpack.c.l.b16 %v4472
        %v4517 = vunpack.c.l.b16 %v4476
        %v4518 = vunpack.c.l.b16 %v4479
        %v4519 = vunpack.c.l.b16 %v4483
        %v4520 = vunpack.c.l.b16 %v4486
        %v4521 = vpack.c.b16 %v4490, %v4489
        %v4522 = vpack.c.b16 %v4492, %v4491
        %v4523 = vpack.c.b16 %v4494, %v4493
        %v4524 = vpack.c.b16 %v4496, %v4495
        %v4525 = vpack.c.b16 %v4498, %v4497
        %v4526 = vpack.c.b16 %v4500, %v4499
        %v4527 = vpack.c.b16 %v4502, %v4501
        %v4528 = vpack.c.b16 %v4504, %v4503
        %v4529 = vpack.c.b16 %v4506, %v4505
        %v4530 = vpack.c.b16 %v4508, %v4507
        %v4531 = vpack.c.b16 %v4510, %v4509
        %v4532 = vpack.c.b16 %v4512, %v4511
        %v4533 = vpack.c.b16 %v4514, %v4513
        %v4534 = vpack.c.b16 %v4516, %v4515
        %v4535 = vpack.c.b16 %v4518, %v4517
        %v4536 = vpack.c.b16 %v4520, %v4519
        %v4538 = vsel %vm702, %v4521, 0
        %v4541 = vsel %vm702, %v4522, 0
        %v4544 = vsel %vm702, %v4523, 0
        %v4547 = vsel %vm702, %v4524, 0
        %v4550 = vsel %vm702, %v4525, 0
        %v4553 = vsel %vm702, %v4526, 0
        %v4556 = vsel %vm702, %v4527, 0
        %v4559 = vsel %vm702, %v4528, 0
        %v4562 = vsel %vm702, %v4529, 0
        %v4565 = vsel %vm702, %v4530, 0
        %v4568 = vsel %vm702, %v4531, 0
        %v4571 = vsel %vm702, %v4532, 0
        %v4574 = vsel %vm702, %v4533, 0
        %v4577 = vsel %vm702, %v4534, 0
        %v4580 = vsel %vm702, %v4535, 0
        %v4583 = vsel %vm702, %v4536, 0
        %v4586 = vsel %vm751, %v4488, 0
        %4588 = vmatprep.subr.bf16.mxu0 0
        %4589 = vmatpush1.bf16.msra.mxu0 %v4586
        %4590 = vmatprep.subr.bf16.mxu0 0
        %4591 = vmatpush1.bf16.msra.mxu0 0
        %4592 = vmatprep.subr.bf16.mxu0 0
        %4593 = vmatpush1.bf16.msra.mxu0 0
        %4594 = vmatprep.subr.bf16.mxu0 0
        %4595 = vmatpush1.bf16.msra.mxu0 0
        %4596 = vmatprep.subr.bf16.mxu0 0
        %4597 = vmatpush1.bf16.msra.mxu0 0
        %4598 = vmatprep.subr.bf16.mxu0 0
        %4599 = vmatpush1.bf16.msra.mxu0 0
        %4600 = vmatprep.subr.bf16.mxu0 0
        %4601 = vmatpush1.bf16.msra.mxu0 0
        %4602 = vmatprep.subr.bf16.mxu0 0
        %4603 = vmatpush1.bf16.msra.mxu0 0
        %4604 = vmatprep.subr.bf16.mxu0 0
        %4605 = vmatpush1.bf16.msra.mxu0 0
        %4606 = vmatprep.subr.bf16.mxu0 0
        %4607 = vmatpush1.bf16.msra.mxu0 0
        %4608 = vmatprep.subr.bf16.mxu0 0
        %4609 = vmatpush1.bf16.msra.mxu0 0
        %4610 = vmatprep.subr.bf16.mxu0 0
        %4611 = vmatpush1.bf16.msra.mxu0 0
        %4612 = vmatprep.subr.bf16.mxu0 0
        %4613 = vmatpush1.bf16.msra.mxu0 0
        %4614 = vmatprep.subr.bf16.mxu0 0
        %4615 = vmatpush1.bf16.msra.mxu0 0
        %4616 = vmatprep.subr.bf16.mxu0 0
        %4617 = vmatpush1.bf16.msra.mxu0 0
        %4618 = vmatprep.subr.bf16.mxu0 0
        %4619 = vmatpush1.bf16.msra.mxu0 0
        %4620 = vmatprep.mubr.bf16.mxu0 0
        %4621 = vmatmul.mubr.bf16.gmra.mrb[0].mxu0 %v4538
        %v4622 = vpop.f32.mrb[0].mxu0
        %v4623 = vadd.f32 0.0, %v4622
        %v4624 = vpop.f32.mrb[0].mxu0
        %v4625 = vpop.f32.mrb[0].mxu0
        %v4626 = vadd.f32 0.0, %v4625
        %v4627 = vpop.f32.mrb[0].mxu0
        %4628 = vmatprep.mubr.bf16.mxu0 0
        %4629 = vmatmul.mubr.bf16.gmra.mrb[0].mxu0 %v4541
        %v4630 = vpop.f32.mrb[0].mxu0
        %v4631 = vadd.f32 0.0, %v4630
        %v4632 = vpop.f32.mrb[0].mxu0
        %v4633 = vpop.f32.mrb[0].mxu0
        %v4634 = vadd.f32 0.0, %v4633
        %v4635 = vpop.f32.mrb[0].mxu0
        %4636 = vmatprep.mubr.bf16.mxu0 0
        %4637 = vmatmul.mubr.bf16.gmra.mrb[0].mxu0 %v4544
        %v4638 = vpop.f32.mrb[0].mxu0
        %v4639 = vadd.f32 0.0, %v4638
        %v4640 = vpop.f32.mrb[0].mxu0
        %v4641 = vpop.f32.mrb[0].mxu0
        %v4642 = vadd.f32 0.0, %v4641
        %v4643 = vpop.f32.mrb[0].mxu0
        %4644 = vmatprep.mubr.bf16.mxu0 0
        %4645 = vmatmul.mubr.bf16.gmra.mrb[0].mxu0 %v4547
        %v4646 = vpop.f32.mrb[0].mxu0
        %v4647 = vadd.f32 0.0, %v4646
        %v4648 = vpop.f32.mrb[0].mxu0
        %v4649 = vpop.f32.mrb[0].mxu0
        %v4650 = vadd.f32 0.0, %v4649
        %v4651 = vpop.f32.mrb[0].mxu0
        %4652 = vmatprep.mubr.bf16.mxu0 0
        %4653 = vmatmul.mubr.bf16.gmra.mrb[0].mxu0 %v4550
        %v4654 = vpop.f32.mrb[0].mxu0
        %v4655 = vadd.f32 0.0, %v4654
        %v4656 = vpop.f32.mrb[0].mxu0
        %v4657 = vpop.f32.mrb[0].mxu0
        %v4658 = vadd.f32 0.0, %v4657
        %v4659 = vpop.f32.mrb[0].mxu0
        %4660 = vmatprep.mubr.bf16.mxu0 0
        %4661 = vmatmul.mubr.bf16.gmra.mrb[0].mxu0 %v4553
        %v4662 = vpop.f32.mrb[0].mxu0
        %v4663 = vadd.f32 0.0, %v4662
        %v4664 = vpop.f32.mrb[0].mxu0
        %v4665 = vpop.f32.mrb[0].mxu0
        %v4666 = vadd.f32 0.0, %v4665
        %v4667 = vpop.f32.mrb[0].mxu0
        %4668 = vmatprep.mubr.bf16.mxu0 0
        %4669 = vmatmul.mubr.bf16.gmra.mrb[0].mxu0 %v4556
        %v4670 = vpop.f32.mrb[0].mxu0
        %v4671 = vadd.f32 0.0, %v4670
        %v4672 = vpop.f32.mrb[0].mxu0
        %v4673 = vpop.f32.mrb[0].mxu0
        %v4674 = vadd.f32 0.0, %v4673
        %v4675 = vpop.f32.mrb[0].mxu0
        %4676 = vmatprep.mubr.bf16.mxu0 0
        %4677 = vmatmul.mubr.bf16.gmra.mrb[0].mxu0 %v4559
        %v4678 = vpop.f32.mrb[0].mxu0
        %v4679 = vadd.f32 0.0, %v4678
        %v4680 = vpop.f32.mrb[0].mxu0
        %v4681 = vpop.f32.mrb[0].mxu0
        %v4682 = vadd.f32 0.0, %v4681
        %v4683 = vpop.f32.mrb[0].mxu0
        %4684 = vmatprep.mubr.bf16.mxu0 0
        %4685 = vmatmul.mubr.bf16.gmra.mrb[0].mxu0 %v4562
        %v4686 = vpop.f32.mrb[0].mxu0
        %v4687 = vadd.f32 0.0, %v4686
        %v4688 = vpop.f32.mrb[0].mxu0
        %v4689 = vpop.f32.mrb[0].mxu0
        %v4690 = vadd.f32 0.0, %v4689
        %v4691 = vpop.f32.mrb[0].mxu0
        %4692 = vmatprep.mubr.bf16.mxu0 0
        %4693 = vmatmul.mubr.bf16.gmra.mrb[0].mxu0 %v4565
        %v4694 = vpop.f32.mrb[0].mxu0
        %v4695 = vadd.f32 0.0, %v4694
        %v4696 = vpop.f32.mrb[0].mxu0
        %v4697 = vpop.f32.mrb[0].mxu0
        %v4698 = vadd.f32 0.0, %v4697
        %v4699 = vpop.f32.mrb[0].mxu0
        %4700 = vmatprep.mubr.bf16.mxu0 0
        %4701 = vmatmul.mubr.bf16.gmra.mrb[0].mxu0 %v4568
        %v4702 = vpop.f32.mrb[0].mxu0
        %v4703 = vadd.f32 0.0, %v4702
        %v4704 = vpop.f32.mrb[0].mxu0
        %v4705 = vpop.f32.mrb[0].mxu0
        %v4706 = vadd.f32 0.0, %v4705
        %v4707 = vpop.f32.mrb[0].mxu0
        %4708 = vmatprep.mubr.bf16.mxu0 0
        %4709 = vmatmul.mubr.bf16.gmra.mrb[0].mxu0 %v4571
        %v4710 = vpop.f32.mrb[0].mxu0
        %v4711 = vadd.f32 0.0, %v4710
        %v4712 = vpop.f32.mrb[0].mxu0
        %v4713 = vpop.f32.mrb[0].mxu0
        %v4714 = vadd.f32 0.0, %v4713
        %v4715 = vpop.f32.mrb[0].mxu0
        %4716 = vmatprep.mubr.bf16.mxu0 0
        %4717 = vmatmul.mubr.bf16.gmra.mrb[0].mxu0 %v4574
        %v4718 = vpop.f32.mrb[0].mxu0
        %v4719 = vadd.f32 0.0, %v4718
        %v4720 = vpop.f32.mrb[0].mxu0
        %v4721 = vpop.f32.mrb[0].mxu0
        %v4722 = vadd.f32 0.0, %v4721
        %v4723 = vpop.f32.mrb[0].mxu0
        %4724 = vmatprep.mubr.bf16.mxu0 0
        %4725 = vmatmul.mubr.bf16.gmra.mrb[0].mxu0 %v4577
        %v4726 = vpop.f32.mrb[0].mxu0
        %v4727 = vadd.f32 0.0, %v4726
        %v4728 = vpop.f32.mrb[0].mxu0
        %v4729 = vpop.f32.mrb[0].mxu0
        %v4730 = vadd.f32 0.0, %v4729
        %v4731 = vpop.f32.mrb[0].mxu0
        %4732 = vmatprep.mubr.bf16.mxu0 0
        %4733 = vmatmul.mubr.bf16.gmra.mrb[0].mxu0 %v4580
        %v4734 = vpop.f32.mrb[0].mxu0
        %v4735 = vadd.f32 0.0, %v4734
        %v4736 = vpop.f32.mrb[0].mxu0
        %v4737 = vpop.f32.mrb[0].mxu0
        %v4738 = vadd.f32 0.0, %v4737
        %v4739 = vpop.f32.mrb[0].mxu0
        %4740 = vmatprep.mubr.bf16.mxu0 0
        %4741 = vmatmul.mubr.bf16.gmra.mrb[0].mxu0 %v4583
        %v4742 = vpop.f32.mrb[0].mxu0
        %v4743 = vadd.f32 0.0, %v4742
        %v4744 = vpop.f32.mrb[0].mxu0
        %v4745 = vpop.f32.mrb[0].mxu0
        %v4746 = vadd.f32 0.0, %v4745
        %v4747 = vpop.f32.mrb[0].mxu0
        %4748 = vdwg.mxu0
        %v4749 = vadd.f32 %v4279, %v4623
        %v4750 = vadd.f32 %v4280, %v4626
        %v4751 = vadd.f32 %v4281, %v4631
        %v4752 = vadd.f32 %v4282, %v4634
        %v4753 = vadd.f32 %v4283, %v4639
        %v4754 = vadd.f32 %v4284, %v4642
        %v4755 = vadd.f32 %v4285, %v4647
        %v4756 = vadd.f32 %v4286, %v4650
        %v4757 = vadd.f32 %v4287, %v4655
        %v4758 = vadd.f32 %v4288, %v4658
        %v4759 = vadd.f32 %v4289, %v4663
        %v4760 = vadd.f32 %v4290, %v4666
        %v4761 = vadd.f32 %v4291, %v4671
        %v4762 = vadd.f32 %v4292, %v4674
        %v4763 = vadd.f32 %v4293, %v4679
        %v4764 = vadd.f32 %v4294, %v4682
        %v4765 = vadd.f32 %v4295, %v4687
        %v4766 = vadd.f32 %v4296, %v4690
        %v4767 = vadd.f32 %v4297, %v4695
        %v4768 = vadd.f32 %v4298, %v4698
        %v4769 = vadd.f32 %v4299, %v4703
        %v4770 = vadd.f32 %v4300, %v4706
        %v4771 = vadd.f32 %v4301, %v4711
        %v4772 = vadd.f32 %v4302, %v4714
        %v4773 = vadd.f32 %v4303, %v4719
        %v4774 = vadd.f32 %v4304, %v4722
        %v4775 = vadd.f32 %v4305, %v4727
        %v4776 = vadd.f32 %v4306, %v4730
        %v4777 = vadd.f32 %v4307, %v4735
        %v4778 = vadd.f32 %v4308, %v4738
        %v4779 = vadd.f32 %v4309, %v4743
        %v4780 = vadd.f32 %v4310, %v4746
        %v4781 = vld [vmem:[%s2] sm:$0x1]
        %v4783 = vlaneseq
        %v4784 = vshrl.u32 %v4783, 7
        %v4785 = vsub.s32 0, %v4784
        %v4786 = vrot.slane %v4781, %v4785
        %v4788 = vadd.f32 %v4749, %v4786
        %v4789 = vadd.f32 %v4750, %v4786
        %v4790 = vadd.f32 %v4751, %v4786
        %v4791 = vadd.f32 %v4752, %v4786
        %v4792 = vadd.f32 %v4753, %v4786
        %v4793 = vadd.f32 %v4754, %v4786
        %v4794 = vadd.f32 %v4755, %v4786
        %v4795 = vadd.f32 %v4756, %v4786
        %v4796 = vadd.f32 %v4757, %v4786
        %v4797 = vadd.f32 %v4758, %v4786
        %v4798 = vadd.f32 %v4759, %v4786
        %v4799 = vadd.f32 %v4760, %v4786
        %v4800 = vadd.f32 %v4761, %v4786
        %v4801 = vadd.f32 %v4762, %v4786
        %v4802 = vadd.f32 %v4763, %v4786
        %v4803 = vadd.f32 %v4764, %v4786
        %v4804 = vadd.f32 %v4765, %v4786
        %v4805 = vadd.f32 %v4766, %v4786
        %v4806 = vadd.f32 %v4767, %v4786
        %v4807 = vadd.f32 %v4768, %v4786
        %v4808 = vadd.f32 %v4769, %v4786
        %v4809 = vadd.f32 %v4770, %v4786
        %v4810 = vadd.f32 %v4771, %v4786
        %v4811 = vadd.f32 %v4772, %v4786
        %v4812 = vadd.f32 %v4773, %v4786
        %v4813 = vadd.f32 %v4774, %v4786
        %v4814 = vadd.f32 %v4775, %v4786
        %v4815 = vadd.f32 %v4776, %v4786
        %v4816 = vadd.f32 %v4777, %v4786
        %v4817 = vadd.f32 %v4778, %v4786
        %v4818 = vadd.f32 %v4779, %v4786
        %v4819 = vadd.f32 %v4780, %v4786
        %v4820 = vmax.f32 %v4788, 0.0
        %v4821 = vmax.f32 %v4789, 0.0
        %v4822 = vmax.f32 %v4790, 0.0
        %v4823 = vmax.f32 %v4791, 0.0
        %v4824 = vmax.f32 %v4792, 0.0
        %v4825 = vmax.f32 %v4793, 0.0
        %v4826 = vmax.f32 %v4794, 0.0
        %v4827 = vmax.f32 %v4795, 0.0
        %v4828 = vmax.f32 %v4796, 0.0
        %v4829 = vmax.f32 %v4797, 0.0
        %v4830 = vmax.f32 %v4798, 0.0
        %v4831 = vmax.f32 %v4799, 0.0
        %v4832 = vmax.f32 %v4800, 0.0
        %v4833 = vmax.f32 %v4801, 0.0
        %v4834 = vmax.f32 %v4802, 0.0
        %v4835 = vmax.f32 %v4803, 0.0
        %v4836 = vmax.f32 %v4804, 0.0
        %v4837 = vmax.f32 %v4805, 0.0
        %v4838 = vmax.f32 %v4806, 0.0
        %v4839 = vmax.f32 %v4807, 0.0
        %v4840 = vmax.f32 %v4808, 0.0
        %v4841 = vmax.f32 %v4809, 0.0
        %v4842 = vmax.f32 %v4810, 0.0
        %v4843 = vmax.f32 %v4811, 0.0
        %v4844 = vmax.f32 %v4812, 0.0
        %v4845 = vmax.f32 %v4813, 0.0
        %v4846 = vmax.f32 %v4814, 0.0
        %v4847 = vmax.f32 %v4815, 0.0
        %v4848 = vmax.f32 %v4816, 0.0
        %v4849 = vmax.f32 %v4817, 0.0
        %v4850 = vmax.f32 %v4818, 0.0
        %v4851 = vmax.f32 %v4819, 0.0
        %v4852 = vld [vmem:[%s3] sm:$0xff]
        %vm4853 = vcmask 261120
        %v4855 = vsel %vm4853, %v4852, 0
        %4857 = vmatprep.subr.mxu0 0.0
        %4858 = vmatpush1.msra.mxu0 %v4820
        %4859 = vmatprep.subr.mxu0 0.0
        %4860 = vmatpush1.msra.mxu0 %v4821
        %4861 = vmatprep.subr.mxu0 0.0
        %4862 = vmatpush1.msra.mxu0 %v4822
        %4863 = vmatprep.subr.mxu0 0.0
        %4864 = vmatpush1.msra.mxu0 %v4823
        %4865 = vmatprep.subr.mxu0 0.0
        %4866 = vmatpush1.msra.mxu0 0.0
        %4867 = vmatprep.subr.mxu0 0.0
        %4868 = vmatpush1.msra.mxu0 0.0
        %4869 = vmatprep.subr.mxu0 0.0
        %4870 = vmatpush1.msra.mxu0 0.0
        %4871 = vmatprep.subr.mxu0 0.0
        %4872 = vmatpush1.msra.mxu0 0.0
        %4873 = vmatprep.subr.mxu0 0.0
        %4874 = vmatpush1.msra.mxu0 0.0
        %4875 = vmatprep.subr.mxu0 0.0
        %4876 = vmatpush1.msra.mxu0 0.0
        %4877 = vmatprep.subr.mxu0 0.0
        %4878 = vmatpush1.msra.mxu0 0.0
        %4879 = vmatprep.subr.mxu0 0.0
        %4880 = vmatpush1.msra.mxu0 0.0
        %4881 = vmatprep.subr.mxu0 0.0
        %4882 = vmatpush1.msra.mxu0 0.0
        %4883 = vmatprep.subr.mxu0 0.0
        %4884 = vmatpush1.msra.mxu0 0.0
        %4885 = vmatprep.subr.mxu0 0.0
        %4886 = vmatpush1.msra.mxu0 0.0
        %4887 = vmatprep.subr.mxu0 0.0
        %4888 = vmatpush1.msra.mxu0 0.0
        %4889 = vmatprep.subr.mxu0 0.0
        %4890 = vmatpush1.msra.mxu0 0.0
        %4891 = vmatprep.subr.mxu0 0.0
        %4892 = vmatpush1.msra.mxu0 0.0
        %4893 = vmatprep.subr.mxu0 0.0
        %4894 = vmatpush1.msra.mxu0 0.0
        %4895 = vmatprep.subr.mxu0 0.0
        %4896 = vmatpush1.msra.mxu0 0.0
        %4897 = vmatprep.subr.mxu0 0.0
        %4898 = vmatpush1.msra.mxu0 0.0
        %4899 = vmatprep.subr.mxu0 0.0
        %4900 = vmatpush1.msra.mxu0 0.0
        %4901 = vmatprep.subr.mxu0 0.0
        %4902 = vmatpush1.msra.mxu0 0.0
        %4903 = vmatprep.subr.mxu0 0.0
        %4904 = vmatpush1.msra.mxu0 0.0
        %4905 = vmatprep.subr.mxu0 0.0
        %4906 = vmatpush1.msra.mxu0 0.0
        %4907 = vmatprep.subr.mxu0 0.0
        %4908 = vmatpush1.msra.mxu0 0.0
        %4909 = vmatprep.subr.mxu0 0.0
        %4910 = vmatpush1.msra.mxu0 0.0
        %4911 = vmatprep.subr.mxu0 0.0
        %4912 = vmatpush1.msra.mxu0 0.0
        %4913 = vmatprep.subr.mxu0 0.0
        %4914 = vmatpush1.msra.mxu0 0.0
        %4915 = vmatprep.subr.mxu0 0.0
        %4916 = vmatpush1.msra.mxu0 0.0
        %4917 = vmatprep.subr.mxu0 0.0
        %4918 = vmatpush1.msra.mxu0 0.0
        %4919 = vmatprep.subr.mxu0 0.0
        %4920 = vmatpush1.msra.mxu0 0.0
        %4921 = vmatprep.mubr.f32.mxu0 0.0
        %4922 = vmatmul.mubr.f32.gmra.mrb[0].mxu0 %v4855
        %v4923 = vpop.f32.mrb[0].mxu0
        %v4924 = vadd.f32 0.0, %v4923
        %v4925 = vpop.f32.mrb[0].mxu0
        %4926 = vdwg.mxu0
        %4927 = vmatprep.subr.mxu0 0.0
        %4928 = vmatpush1.msra.mxu0 %v4824
        %4929 = vmatprep.subr.mxu0 0.0
        %4930 = vmatpush1.msra.mxu0 %v4825
        %4931 = vmatprep.subr.mxu0 0.0
        %4932 = vmatpush1.msra.mxu0 %v4826
        %4933 = vmatprep.subr.mxu0 0.0
        %4934 = vmatpush1.msra.mxu0 %v4827
        %4935 = vmatprep.subr.mxu0 0.0
        %4936 = vmatpush1.msra.mxu0 0.0
        %4937 = vmatprep.subr.mxu0 0.0
        %4938 = vmatpush1.msra.mxu0 0.0
        %4939 = vmatprep.subr.mxu0 0.0
        %4940 = vmatpush1.msra.mxu0 0.0
        %4941 = vmatprep.subr.mxu0 0.0
        %4942 = vmatpush1.msra.mxu0 0.0
        %4943 = vmatprep.subr.mxu0 0.0
        %4944 = vmatpush1.msra.mxu0 0.0
        %4945 = vmatprep.subr.mxu0 0.0
        %4946 = vmatpush1.msra.mxu0 0.0
        %4947 = vmatprep.subr.mxu0 0.0
        %4948 = vmatpush1.msra.mxu0 0.0
        %4949 = vmatprep.subr.mxu0 0.0
        %4950 = vmatpush1.msra.mxu0 0.0
        %4951 = vmatprep.subr.mxu0 0.0
        %4952 = vmatpush1.msra.mxu0 0.0
        %4953 = vmatprep.subr.mxu0 0.0
        %4954 = vmatpush1.msra.mxu0 0.0
        %4955 = vmatprep.subr.mxu0 0.0
        %4956 = vmatpush1.msra.mxu0 0.0
        %4957 = vmatprep.subr.mxu0 0.0
        %4958 = vmatpush1.msra.mxu0 0.0
        %4959 = vmatprep.subr.mxu0 0.0
        %4960 = vmatpush1.msra.mxu0 0.0
        %4961 = vmatprep.subr.mxu0 0.0
        %4962 = vmatpush1.msra.mxu0 0.0
        %4963 = vmatprep.subr.mxu0 0.0
        %4964 = vmatpush1.msra.mxu0 0.0
        %4965 = vmatprep.subr.mxu0 0.0
        %4966 = vmatpush1.msra.mxu0 0.0
        %4967 = vmatprep.subr.mxu0 0.0
        %4968 = vmatpush1.msra.mxu0 0.0
        %4969 = vmatprep.subr.mxu0 0.0
        %4970 = vmatpush1.msra.mxu0 0.0
        %4971 = vmatprep.subr.mxu0 0.0
        %4972 = vmatpush1.msra.mxu0 0.0
        %4973 = vmatprep.subr.mxu0 0.0
        %4974 = vmatpush1.msra.mxu0 0.0
        %4975 = vmatprep.subr.mxu0 0.0
        %4976 = vmatpush1.msra.mxu0 0.0
        %4977 = vmatprep.subr.mxu0 0.0
        %4978 = vmatpush1.msra.mxu0 0.0
        %4979 = vmatprep.subr.mxu0 0.0
        %4980 = vmatpush1.msra.mxu0 0.0
        %4981 = vmatprep.subr.mxu0 0.0
        %4982 = vmatpush1.msra.mxu0 0.0
        %4983 = vmatprep.subr.mxu0 0.0
        %4984 = vmatpush1.msra.mxu0 0.0
        %4985 = vmatprep.subr.mxu0 0.0
        %4986 = vmatpush1.msra.mxu0 0.0
        %4987 = vmatprep.subr.mxu0 0.0
        %4988 = vmatpush1.msra.mxu0 0.0
        %4989 = vmatprep.subr.mxu0 0.0
        %4990 = vmatpush1.msra.mxu0 0.0
        %4991 = vmatprep.mubr.f32.mxu0 0.0
        %4992 = vmatmul.mubr.f32.gmra.mrb[0].mxu0 %v4855
        %v4993 = vpop.f32.mrb[0].mxu0
        %v4994 = vadd.f32 0.0, %v4993
        %v4995 = vpop.f32.mrb[0].mxu0
        %4996 = vdwg.mxu0
        %4997 = vmatprep.subr.mxu0 0.0
        %4998 = vmatpush1.msra.mxu0 %v4828
        %4999 = vmatprep.subr.mxu0 0.0
        %5000 = vmatpush1.msra.mxu0 %v4829
        %5001 = vmatprep.subr.mxu0 0.0
        %5002 = vmatpush1.msra.mxu0 %v4830
        %5003 = vmatprep.subr.mxu0 0.0
        %5004 = vmatpush1.msra.mxu0 %v4831
        %5005 = vmatprep.subr.mxu0 0.0
        %5006 = vmatpush1.msra.mxu0 0.0
        %5007 = vmatprep.subr.mxu0 0.0
        %5008 = vmatpush1.msra.mxu0 0.0
        %5009 = vmatprep.subr.mxu0 0.0
        %5010 = vmatpush1.msra.mxu0 0.0
        %5011 = vmatprep.subr.mxu0 0.0
        %5012 = vmatpush1.msra.mxu0 0.0
        %5013 = vmatprep.subr.mxu0 0.0
        %5014 = vmatpush1.msra.mxu0 0.0
        %5015 = vmatprep.subr.mxu0 0.0
        %5016 = vmatpush1.msra.mxu0 0.0
        %5017 = vmatprep.subr.mxu0 0.0
        %5018 = vmatpush1.msra.mxu0 0.0
        %5019 = vmatprep.subr.mxu0 0.0
        %5020 = vmatpush1.msra.mxu0 0.0
        %5021 = vmatprep.subr.mxu0 0.0
        %5022 = vmatpush1.msra.mxu0 0.0
        %5023 = vmatprep.subr.mxu0 0.0
        %5024 = vmatpush1.msra.mxu0 0.0
        %5025 = vmatprep.subr.mxu0 0.0
        %5026 = vmatpush1.msra.mxu0 0.0
        %5027 = vmatprep.subr.mxu0 0.0
        %5028 = vmatpush1.msra.mxu0 0.0
        %5029 = vmatprep.subr.mxu0 0.0
        %5030 = vmatpush1.msra.mxu0 0.0
        %5031 = vmatprep.subr.mxu0 0.0
        %5032 = vmatpush1.msra.mxu0 0.0
        %5033 = vmatprep.subr.mxu0 0.0
        %5034 = vmatpush1.msra.mxu0 0.0
        %5035 = vmatprep.subr.mxu0 0.0
        %5036 = vmatpush1.msra.mxu0 0.0
        %5037 = vmatprep.subr.mxu0 0.0
        %5038 = vmatpush1.msra.mxu0 0.0
        %5039 = vmatprep.subr.mxu0 0.0
        %5040 = vmatpush1.msra.mxu0 0.0
        %5041 = vmatprep.subr.mxu0 0.0
        %5042 = vmatpush1.msra.mxu0 0.0
        %5043 = vmatprep.subr.mxu0 0.0
        %5044 = vmatpush1.msra.mxu0 0.0
        %5045 = vmatprep.subr.mxu0 0.0
        %5046 = vmatpush1.msra.mxu0 0.0
        %5047 = vmatprep.subr.mxu0 0.0
        %5048 = vmatpush1.msra.mxu0 0.0
        %5049 = vmatprep.subr.mxu0 0.0
        %5050 = vmatpush1.msra.mxu0 0.0
        %5051 = vmatprep.subr.mxu0 0.0
        %5052 = vmatpush1.msra.mxu0 0.0
        %5053 = vmatprep.subr.mxu0 0.0
        %5054 = vmatpush1.msra.mxu0 0.0
        %5055 = vmatprep.subr.mxu0 0.0
        %5056 = vmatpush1.msra.mxu0 0.0
        %5057 = vmatprep.subr.mxu0 0.0
        %5058 = vmatpush1.msra.mxu0 0.0
        %5059 = vmatprep.subr.mxu0 0.0
        %5060 = vmatpush1.msra.mxu0 0.0
        %5061 = vmatprep.mubr.f32.mxu0 0.0
        %5062 = vmatmul.mubr.f32.gmra.mrb[0].mxu0 %v4855
        %v5063 = vpop.f32.mrb[0].mxu0
        %v5064 = vadd.f32 0.0, %v5063
        %v5065 = vpop.f32.mrb[0].mxu0
        %5066 = vdwg.mxu0
        %5067 = vmatprep.subr.mxu0 0.0
        %5068 = vmatpush1.msra.mxu0 %v4832
        %5069 = vmatprep.subr.mxu0 0.0
        %5070 = vmatpush1.msra.mxu0 %v4833
        %5071 = vmatprep.subr.mxu0 0.0
        %5072 = vmatpush1.msra.mxu0 %v4834
        %5073 = vmatprep.subr.mxu0 0.0
        %5074 = vmatpush1.msra.mxu0 %v4835
        %5075 = vmatprep.subr.mxu0 0.0
        %5076 = vmatpush1.msra.mxu0 0.0
        %5077 = vmatprep.subr.mxu0 0.0
        %5078 = vmatpush1.msra.mxu0 0.0
        %5079 = vmatprep.subr.mxu0 0.0
        %5080 = vmatpush1.msra.mxu0 0.0
        %5081 = vmatprep.subr.mxu0 0.0
        %5082 = vmatpush1.msra.mxu0 0.0
        %5083 = vmatprep.subr.mxu0 0.0
        %5084 = vmatpush1.msra.mxu0 0.0
        %5085 = vmatprep.subr.mxu0 0.0
        %5086 = vmatpush1.msra.mxu0 0.0
        %5087 = vmatprep.subr.mxu0 0.0
        %5088 = vmatpush1.msra.mxu0 0.0
        %5089 = vmatprep.subr.mxu0 0.0
        %5090 = vmatpush1.msra.mxu0 0.0
        %5091 = vmatprep.subr.mxu0 0.0
        %5092 = vmatpush1.msra.mxu0 0.0
        %5093 = vmatprep.subr.mxu0 0.0
        %5094 = vmatpush1.msra.mxu0 0.0
        %5095 = vmatprep.subr.mxu0 0.0
        %5096 = vmatpush1.msra.mxu0 0.0
        %5097 = vmatprep.subr.mxu0 0.0
        %5098 = vmatpush1.msra.mxu0 0.0
        %5099 = vmatprep.subr.mxu0 0.0
        %5100 = vmatpush1.msra.mxu0 0.0
        %5101 = vmatprep.subr.mxu0 0.0
        %5102 = vmatpush1.msra.mxu0 0.0
        %5103 = vmatprep.subr.mxu0 0.0
        %5104 = vmatpush1.msra.mxu0 0.0
        %5105 = vmatprep.subr.mxu0 0.0
        %5106 = vmatpush1.msra.mxu0 0.0
        %5107 = vmatprep.subr.mxu0 0.0
        %5108 = vmatpush1.msra.mxu0 0.0
        %5109 = vmatprep.subr.mxu0 0.0
        %5110 = vmatpush1.msra.mxu0 0.0
        %5111 = vmatprep.subr.mxu0 0.0
        %5112 = vmatpush1.msra.mxu0 0.0
        %5113 = vmatprep.subr.mxu0 0.0
        %5114 = vmatpush1.msra.mxu0 0.0
        %5115 = vmatprep.subr.mxu0 0.0
        %5116 = vmatpush1.msra.mxu0 0.0
        %5117 = vmatprep.subr.mxu0 0.0
        %5118 = vmatpush1.msra.mxu0 0.0
        %5119 = vmatprep.subr.mxu0 0.0
        %5120 = vmatpush1.msra.mxu0 0.0
        %5121 = vmatprep.subr.mxu0 0.0
        %5122 = vmatpush1.msra.mxu0 0.0
        %5123 = vmatprep.subr.mxu0 0.0
        %5124 = vmatpush1.msra.mxu0 0.0
        %5125 = vmatprep.subr.mxu0 0.0
        %5126 = vmatpush1.msra.mxu0 0.0
        %5127 = vmatprep.subr.mxu0 0.0
        %5128 = vmatpush1.msra.mxu0 0.0
        %5129 = vmatprep.subr.mxu0 0.0
        %5130 = vmatpush1.msra.mxu0 0.0
        %5131 = vmatprep.mubr.f32.mxu0 0.0
        %5132 = vmatmul.mubr.f32.gmra.mrb[0].mxu0 %v4855
        %v5133 = vpop.f32.mrb[0].mxu0
        %v5134 = vadd.f32 0.0, %v5133
        %v5135 = vpop.f32.mrb[0].mxu0
        %5136 = vdwg.mxu0
        %5137 = vmatprep.subr.mxu0 0.0
        %5138 = vmatpush1.msra.mxu0 %v4836
        %5139 = vmatprep.subr.mxu0 0.0
        %5140 = vmatpush1.msra.mxu0 %v4837
        %5141 = vmatprep.subr.mxu0 0.0
        %5142 = vmatpush1.msra.mxu0 %v4838
        %5143 = vmatprep.subr.mxu0 0.0
        %5144 = vmatpush1.msra.mxu0 %v4839
        %5145 = vmatprep.subr.mxu0 0.0
        %5146 = vmatpush1.msra.mxu0 0.0
        %5147 = vmatprep.subr.mxu0 0.0
        %5148 = vmatpush1.msra.mxu0 0.0
        %5149 = vmatprep.subr.mxu0 0.0
        %5150 = vmatpush1.msra.mxu0 0.0
        %5151 = vmatprep.subr.mxu0 0.0
        %5152 = vmatpush1.msra.mxu0 0.0
        %5153 = vmatprep.subr.mxu0 0.0
        %5154 = vmatpush1.msra.mxu0 0.0
        %5155 = vmatprep.subr.mxu0 0.0
        %5156 = vmatpush1.msra.mxu0 0.0
        %5157 = vmatprep.subr.mxu0 0.0
        %5158 = vmatpush1.msra.mxu0 0.0
        %5159 = vmatprep.subr.mxu0 0.0
        %5160 = vmatpush1.msra.mxu0 0.0
        %5161 = vmatprep.subr.mxu0 0.0
        %5162 = vmatpush1.msra.mxu0 0.0
        %5163 = vmatprep.subr.mxu0 0.0
        %5164 = vmatpush1.msra.mxu0 0.0
        %5165 = vmatprep.subr.mxu0 0.0
        %5166 = vmatpush1.msra.mxu0 0.0
        %5167 = vmatprep.subr.mxu0 0.0
        %5168 = vmatpush1.msra.mxu0 0.0
        %5169 = vmatprep.subr.mxu0 0.0
        %5170 = vmatpush1.msra.mxu0 0.0
        %5171 = vmatprep.subr.mxu0 0.0
        %5172 = vmatpush1.msra.mxu0 0.0
        %5173 = vmatprep.subr.mxu0 0.0
        %5174 = vmatpush1.msra.mxu0 0.0
        %5175 = vmatprep.subr.mxu0 0.0
        %5176 = vmatpush1.msra.mxu0 0.0
        %5177 = vmatprep.subr.mxu0 0.0
        %5178 = vmatpush1.msra.mxu0 0.0
        %5179 = vmatprep.subr.mxu0 0.0
        %5180 = vmatpush1.msra.mxu0 0.0
        %5181 = vmatprep.subr.mxu0 0.0
        %5182 = vmatpush1.msra.mxu0 0.0
        %5183 = vmatprep.subr.mxu0 0.0
        %5184 = vmatpush1.msra.mxu0 0.0
        %5185 = vmatprep.subr.mxu0 0.0
        %5186 = vmatpush1.msra.mxu0 0.0
        %5187 = vmatprep.subr.mxu0 0.0
        %5188 = vmatpush1.msra.mxu0 0.0
        %5189 = vmatprep.subr.mxu0 0.0
        %5190 = vmatpush1.msra.mxu0 0.0
        %5191 = vmatprep.subr.mxu0 0.0
        %5192 = vmatpush1.msra.mxu0 0.0
        %5193 = vmatprep.subr.mxu0 0.0
        %5194 = vmatpush1.msra.mxu0 0.0
        %5195 = vmatprep.subr.mxu0 0.0
        %5196 = vmatpush1.msra.mxu0 0.0
        %5197 = vmatprep.subr.mxu0 0.0
        %5198 = vmatpush1.msra.mxu0 0.0
        %5199 = vmatprep.subr.mxu0 0.0
        %5200 = vmatpush1.msra.mxu0 0.0
        %5201 = vmatprep.mubr.f32.mxu0 0.0
        %5202 = vmatmul.mubr.f32.gmra.mrb[0].mxu0 %v4855
        %v5203 = vpop.f32.mrb[0].mxu0
        %v5204 = vadd.f32 0.0, %v5203
        %v5205 = vpop.f32.mrb[0].mxu0
        %5206 = vdwg.mxu0
        %5207 = vmatprep.subr.mxu0 0.0
        %5208 = vmatpush1.msra.mxu0 %v4840
        %5209 = vmatprep.subr.mxu0 0.0
        %5210 = vmatpush1.msra.mxu0 %v4841
        %5211 = vmatprep.subr.mxu0 0.0
        %5212 = vmatpush1.msra.mxu0 %v4842
        %5213 = vmatprep.subr.mxu0 0.0
        %5214 = vmatpush1.msra.mxu0 %v4843
        %5215 = vmatprep.subr.mxu0 0.0
        %5216 = vmatpush1.msra.mxu0 0.0
        %5217 = vmatprep.subr.mxu0 0.0
        %5218 = vmatpush1.msra.mxu0 0.0
        %5219 = vmatprep.subr.mxu0 0.0
        %5220 = vmatpush1.msra.mxu0 0.0
        %5221 = vmatprep.subr.mxu0 0.0
        %5222 = vmatpush1.msra.mxu0 0.0
        %5223 = vmatprep.subr.mxu0 0.0
        %5224 = vmatpush1.msra.mxu0 0.0
        %5225 = vmatprep.subr.mxu0 0.0
        %5226 = vmatpush1.msra.mxu0 0.0
        %5227 = vmatprep.subr.mxu0 0.0
        %5228 = vmatpush1.msra.mxu0 0.0
        %5229 = vmatprep.subr.mxu0 0.0
        %5230 = vmatpush1.msra.mxu0 0.0
        %5231 = vmatprep.subr.mxu0 0.0
        %5232 = vmatpush1.msra.mxu0 0.0
        %5233 = vmatprep.subr.mxu0 0.0
        %5234 = vmatpush1.msra.mxu0 0.0
        %5235 = vmatprep.subr.mxu0 0.0
        %5236 = vmatpush1.msra.mxu0 0.0
        %5237 = vmatprep.subr.mxu0 0.0
        %5238 = vmatpush1.msra.mxu0 0.0
        %5239 = vmatprep.subr.mxu0 0.0
        %5240 = vmatpush1.msra.mxu0 0.0
        %5241 = vmatprep.subr.mxu0 0.0
        %5242 = vmatpush1.msra.mxu0 0.0
        %5243 = vmatprep.subr.mxu0 0.0
        %5244 = vmatpush1.msra.mxu0 0.0
        %5245 = vmatprep.subr.mxu0 0.0
        %5246 = vmatpush1.msra.mxu0 0.0
        %5247 = vmatprep.subr.mxu0 0.0
        %5248 = vmatpush1.msra.mxu0 0.0
        %5249 = vmatprep.subr.mxu0 0.0
        %5250 = vmatpush1.msra.mxu0 0.0
        %5251 = vmatprep.subr.mxu0 0.0
        %5252 = vmatpush1.msra.mxu0 0.0
        %5253 = vmatprep.subr.mxu0 0.0
        %5254 = vmatpush1.msra.mxu0 0.0
        %5255 = vmatprep.subr.mxu0 0.0
        %5256 = vmatpush1.msra.mxu0 0.0
        %5257 = vmatprep.subr.mxu0 0.0
        %5258 = vmatpush1.msra.mxu0 0.0
        %5259 = vmatprep.subr.mxu0 0.0
        %5260 = vmatpush1.msra.mxu0 0.0
        %5261 = vmatprep.subr.mxu0 0.0
        %5262 = vmatpush1.msra.mxu0 0.0
        %5263 = vmatprep.subr.mxu0 0.0
        %5264 = vmatpush1.msra.mxu0 0.0
        %5265 = vmatprep.subr.mxu0 0.0
        %5266 = vmatpush1.msra.mxu0 0.0
        %5267 = vmatprep.subr.mxu0 0.0
        %5268 = vmatpush1.msra.mxu0 0.0
        %5269 = vmatprep.subr.mxu0 0.0
        %5270 = vmatpush1.msra.mxu0 0.0
        %5271 = vmatprep.mubr.f32.mxu0 0.0
        %5272 = vmatmul.mubr.f32.gmra.mrb[0].mxu0 %v4855
        %v5273 = vpop.f32.mrb[0].mxu0
        %v5274 = vadd.f32 0.0, %v5273
        %v5275 = vpop.f32.mrb[0].mxu0
        %5276 = vdwg.mxu0
        %5277 = vmatprep.subr.mxu0 0.0
        %5278 = vmatpush1.msra.mxu0 %v4844
        %5279 = vmatprep.subr.mxu0 0.0
        %5280 = vmatpush1.msra.mxu0 %v4845
        %5281 = vmatprep.subr.mxu0 0.0
        %5282 = vmatpush1.msra.mxu0 %v4846
        %5283 = vmatprep.subr.mxu0 0.0
        %5284 = vmatpush1.msra.mxu0 %v4847
        %5285 = vmatprep.subr.mxu0 0.0
        %5286 = vmatpush1.msra.mxu0 0.0
        %5287 = vmatprep.subr.mxu0 0.0
        %5288 = vmatpush1.msra.mxu0 0.0
        %5289 = vmatprep.subr.mxu0 0.0
        %5290 = vmatpush1.msra.mxu0 0.0
        %5291 = vmatprep.subr.mxu0 0.0
        %5292 = vmatpush1.msra.mxu0 0.0
        %5293 = vmatprep.subr.mxu0 0.0
        %5294 = vmatpush1.msra.mxu0 0.0
        %5295 = vmatprep.subr.mxu0 0.0
        %5296 = vmatpush1.msra.mxu0 0.0
        %5297 = vmatprep.subr.mxu0 0.0
        %5298 = vmatpush1.msra.mxu0 0.0
        %5299 = vmatprep.subr.mxu0 0.0
        %5300 = vmatpush1.msra.mxu0 0.0
        %5301 = vmatprep.subr.mxu0 0.0
        %5302 = vmatpush1.msra.mxu0 0.0
        %5303 = vmatprep.subr.mxu0 0.0
        %5304 = vmatpush1.msra.mxu0 0.0
        %5305 = vmatprep.subr.mxu0 0.0
        %5306 = vmatpush1.msra.mxu0 0.0
        %5307 = vmatprep.subr.mxu0 0.0
        %5308 = vmatpush1.msra.mxu0 0.0
        %5309 = vmatprep.subr.mxu0 0.0
        %5310 = vmatpush1.msra.mxu0 0.0
        %5311 = vmatprep.subr.mxu0 0.0
        %5312 = vmatpush1.msra.mxu0 0.0
        %5313 = vmatprep.subr.mxu0 0.0
        %5314 = vmatpush1.msra.mxu0 0.0
        %5315 = vmatprep.subr.mxu0 0.0
        %5316 = vmatpush1.msra.mxu0 0.0
        %5317 = vmatprep.subr.mxu0 0.0
        %5318 = vmatpush1.msra.mxu0 0.0
        %5319 = vmatprep.subr.mxu0 0.0
        %5320 = vmatpush1.msra.mxu0 0.0
        %5321 = vmatprep.subr.mxu0 0.0
        %5322 = vmatpush1.msra.mxu0 0.0
        %5323 = vmatprep.subr.mxu0 0.0
        %5324 = vmatpush1.msra.mxu0 0.0
        %5325 = vmatprep.subr.mxu0 0.0
        %5326 = vmatpush1.msra.mxu0 0.0
        %5327 = vmatprep.subr.mxu0 0.0
        %5328 = vmatpush1.msra.mxu0 0.0
        %5329 = vmatprep.subr.mxu0 0.0
        %5330 = vmatpush1.msra.mxu0 0.0
        %5331 = vmatprep.subr.mxu0 0.0
        %5332 = vmatpush1.msra.mxu0 0.0
        %5333 = vmatprep.subr.mxu0 0.0
        %5334 = vmatpush1.msra.mxu0 0.0
        %5335 = vmatprep.subr.mxu0 0.0
        %5336 = vmatpush1.msra.mxu0 0.0
        %5337 = vmatprep.subr.mxu0 0.0
        %5338 = vmatpush1.msra.mxu0 0.0
        %5339 = vmatprep.subr.mxu0 0.0
        %5340 = vmatpush1.msra.mxu0 0.0
        %5341 = vmatprep.mubr.f32.mxu0 0.0
        %5342 = vmatmul.mubr.f32.gmra.mrb[0].mxu0 %v4855
        %v5343 = vpop.f32.mrb[0].mxu0
        %v5344 = vadd.f32 0.0, %v5343
        %v5345 = vpop.f32.mrb[0].mxu0
        %5346 = vdwg.mxu0
        %5347 = vmatprep.subr.mxu0 0.0
        %5348 = vmatpush1.msra.mxu0 %v4848
        %5349 = vmatprep.subr.mxu0 0.0
        %5350 = vmatpush1.msra.mxu0 %v4849
        %5351 = vmatprep.subr.mxu0 0.0
        %5352 = vmatpush1.msra.mxu0 %v4850
        %5353 = vmatprep.subr.mxu0 0.0
        %5354 = vmatpush1.msra.mxu0 %v4851
        %5355 = vmatprep.subr.mxu0 0.0
        %5356 = vmatpush1.msra.mxu0 0.0
        %5357 = vmatprep.subr.mxu0 0.0
        %5358 = vmatpush1.msra.mxu0 0.0
        %5359 = vmatprep.subr.mxu0 0.0
        %5360 = vmatpush1.msra.mxu0 0.0
        %5361 = vmatprep.subr.mxu0 0.0
        %5362 = vmatpush1.msra.mxu0 0.0
        %5363 = vmatprep.subr.mxu0 0.0
        %5364 = vmatpush1.msra.mxu0 0.0
        %5365 = vmatprep.subr.mxu0 0.0
        %5366 = vmatpush1.msra.mxu0 0.0
        %5367 = vmatprep.subr.mxu0 0.0
        %5368 = vmatpush1.msra.mxu0 0.0
        %5369 = vmatprep.subr.mxu0 0.0
        %5370 = vmatpush1.msra.mxu0 0.0
        %5371 = vmatprep.subr.mxu0 0.0
        %5372 = vmatpush1.msra.mxu0 0.0
        %5373 = vmatprep.subr.mxu0 0.0
        %5374 = vmatpush1.msra.mxu0 0.0
        %5375 = vmatprep.subr.mxu0 0.0
        %5376 = vmatpush1.msra.mxu0 0.0
        %5377 = vmatprep.subr.mxu0 0.0
        %5378 = vmatpush1.msra.mxu0 0.0
        %5379 = vmatprep.subr.mxu0 0.0
        %5380 = vmatpush1.msra.mxu0 0.0
        %5381 = vmatprep.subr.mxu0 0.0
        %5382 = vmatpush1.msra.mxu0 0.0
        %5383 = vmatprep.subr.mxu0 0.0
        %5384 = vmatpush1.msra.mxu0 0.0
        %5385 = vmatprep.subr.mxu0 0.0
        %5386 = vmatpush1.msra.mxu0 0.0
        %5387 = vmatprep.subr.mxu0 0.0
        %5388 = vmatpush1.msra.mxu0 0.0
        %5389 = vmatprep.subr.mxu0 0.0
        %5390 = vmatpush1.msra.mxu0 0.0
        %5391 = vmatprep.subr.mxu0 0.0
        %5392 = vmatpush1.msra.mxu0 0.0
        %5393 = vmatprep.subr.mxu0 0.0
        %5394 = vmatpush1.msra.mxu0 0.0
        %5395 = vmatprep.subr.mxu0 0.0
        %5396 = vmatpush1.msra.mxu0 0.0
        %5397 = vmatprep.subr.mxu0 0.0
        %5398 = vmatpush1.msra.mxu0 0.0
        %5399 = vmatprep.subr.mxu0 0.0
        %5400 = vmatpush1.msra.mxu0 0.0
        %5401 = vmatprep.subr.mxu0 0.0
        %5402 = vmatpush1.msra.mxu0 0.0
        %5403 = vmatprep.subr.mxu0 0.0
        %5404 = vmatpush1.msra.mxu0 0.0
        %5405 = vmatprep.subr.mxu0 0.0
        %5406 = vmatpush1.msra.mxu0 0.0
        %5407 = vmatprep.subr.mxu0 0.0
        %5408 = vmatpush1.msra.mxu0 0.0
        %5409 = vmatprep.subr.mxu0 0.0
        %5410 = vmatpush1.msra.mxu0 0.0
        %5411 = vmatprep.mubr.f32.mxu0 0.0
        %5412 = vmatmul.mubr.f32.gmra.mrb[0].mxu0 %v4855
        %v5413 = vpop.f32.mrb[0].mxu0
        %v5414 = vadd.f32 0.0, %v5413
        %v5415 = vpop.f32.mrb[0].mxu0
        %5416 = vdwg.mxu0
        %v5417 = vmul.f32 %v4924, 0.25
        %v5418 = vmul.f32 %v4994, 0.25
        %v5419 = vmul.f32 %v5064, 0.25
        %v5420 = vmul.f32 %v5134, 0.25
        %v5421 = vmul.f32 %v5204, 0.25
        %v5422 = vmul.f32 %v5274, 0.25
        %v5423 = vmul.f32 %v5344, 0.25
        %v5424 = vmul.f32 %v5414, 0.25
        %vm5425 = vcmask 64512
        %5426 = vst.msk [vmem:[%s204] sm:$0xff] %vm5425, %v5417
        %5427 = vst.msk [vmem:[%s204 + $0x8] sm:$0xff] %vm5425, %v5418
        %5428 = vst.msk [vmem:[%s204 + $0x10] sm:$0xff] %vm5425, %v5419
        %5429 = vst.msk [vmem:[%s204 + $0x18] sm:$0xff] %vm5425, %v5420
        %5430 = vst.msk [vmem:[%s204 + $0x20] sm:$0xff] %vm5425, %v5421
        %5431 = vst.msk [vmem:[%s204 + $0x28] sm:$0xff] %vm5425, %v5422
        %5432 = vst.msk [vmem:[%s204 + $0x30] sm:$0xff] %vm5425, %v5423
        %5433 = vst.msk [vmem:[%s204 + $0x38] sm:$0xff] %vm5425, %v5424
        %s5434 = sand.u32 %s129, 1
        %s5435 = scalar_lea.sflag [#allocation3], %s5434
        %s5436 = sand.u32 %s129, 1
        %s5437 = smul.addr %s5436, 64
        %s5438 = scalar_lea.vmem [#allocation2], %s5437
        // Predicated region
        $region37: #{tpu_custom_call.1} parent=35 // pred_check
          %p5439 = pneg %p139
        $region38: #{tpu_custom_call.1} parent=35 // pred_check_branch
          %5441 = sbr.rel (%p5439) target = $region40
        $region39: #{tpu_custom_call.1} parent=35 // pred_region
          %s5442 = smul.u32 8, %s23
          %s5444 = ssub.s32 1024, 1024
          %5445 = vsyncadd %s5435, %s5444
          %s5446 = smul.addr %s22, 8
          %s5447 = sadd.s32 %s5442, %s5446
          %s5448 = smul.addr %s5447, 128
          %s5449 = scalar_lea.hbm %s4, %s5448
          %s5450 = sshll.u32 %s5438, 4
          %s5451 = int_to_ptr.vmem [resolvable:$true] %s5450
          %5456 = dma.vmem_to_hbm [thread:$0]  %s5451, 1024, %s5449, %s5435, 128, 128, 8
        $region40: #{tpu_custom_call.1} parent=35 // pred_fallthru
          _
      $region36: #{tpu_custom_call.1} parent=5 // pred_fallthru
        _
      %p5457 = scmp.le.s32.totalorder 2, %s13
      // Predicated region
      $region41: #{tpu_custom_call.1} parent=5 // pred_check
        %p5458 = pneg %p5457
      $region42: #{tpu_custom_call.1} parent=5 // pred_check_branch
        %5460 = sbr.rel (%p5458) target = $region44
      $region43: #{tpu_custom_call.1} parent=5 // pred_region
        %s5461 = ssub.s32 %s13, 2
        // Predicated region
        $region45: #{tpu_custom_call.1} parent=43 // pred_check
          %p5462 = pneg %p145
        $region46: #{tpu_custom_call.1} parent=43 // pred_check_branch
          %5464 = sbr.rel (%p5462) target = $region48
        $region47: #{tpu_custom_call.1} parent=43 // pred_region
          %s5465 = sand.u32 %s130, 1
          %s5466 = scalar_lea.sflag [#allocation3], %s5465
          %s5467 = sand.u32 %s130, 1
          %s5468 = smul.addr %s5467, 64
          %s5469 = scalar_lea.vmem [#allocation2], %s5468
          %5470 = dma.done %s5466, 1024
        $region48: #{tpu_custom_call.1} parent=43 // pred_fallthru
          _
      $region44: #{tpu_custom_call.1} parent=5 // pred_fallthru
        _
    $region6: #{tpu_custom_call.1} parent=1 // loop_footer
      %s17 = sadd.s32 1, %s13
    $region7: #{tpu_custom_call.1} parent=1 // loop_footer_branch
      %12 = sbr.rel target = $region3
    $region8: #{tpu_custom_call.1} parent=1 // loop_exit
      _
    %5471 = vsyncpa [#allocation3], 1
    %s5472 = scalar_lea.sflag [#allocation3], 1
    %5473 = vsyncpa %s5472, 1

</llo_original>
